<compile_context>
chip_gen: v7x
topology: tpu7x:2x2x1
jax: 0.10.0
libtpu: 0.0.40
codegen_flags: <defaults>
</compile_context>

<pallas_src>
import jax
import jax.numpy as jnp
from jax.experimental import pallas as pl
from jax.experimental.pallas import tpu as pltpu

IN_FEATURES = 768
OUT_FEATURES = 768


def _linear_mse_kernel(x_ref, w_ref, t_ref, o_ref):
    """Fused y = x @ Wt (bf16 in, f32 acc) + per-tile partial sum of (y - t)^2.

    x_ref: (tm, K)   bf16 row tile
    w_ref: (K, N)    bf16 full weight (resident across the grid)
    t_ref: (tm, N)   f32 target tile
    o_ref: (1, 8, N) f32 per-tile partial sums (sublane-folded)
    """
    y = jnp.dot(x_ref[...], w_ref[...], preferred_element_type=jnp.float32)
    diff = y - t_ref[...]
    sq = diff * diff  # (tm, N) f32

    # Fold rows into 8 sublanes with aligned static slices (pure VPU adds);
    # the lane reduction to a scalar is deferred to the wrapper.
    tm = x_ref.shape[0]
    part = sq[0:8, :]
    for r in range(1, tm // 8):
        part = part + sq[r * 8:(r + 1) * 8, :]
    o_ref[...] = part[None, :, :]


def linear_mse_loss(inp, tgt, weight, *, tm=256):
    """inp: (..., 768), tgt: (..., 768), weight: (out=768, in=768) torch layout."""
    assert tm % 8 == 0
    x = inp.reshape((-1, inp.shape[-1]))
    t = tgt.reshape((-1, tgt.shape[-1])).astype(jnp.float32)
    m, kdim = x.shape
    n = weight.shape[0]

    xb = x.astype(jnp.bfloat16)
    wt = weight.T.astype(jnp.bfloat16)  # (in, out) so the kernel computes x @ W.T

    # Pad the flattened batch to a multiple of tm. Zero rows in both x and t
    # contribute 0 to the squared-error sum, so the result stays exact.
    m_pad = ((m + tm - 1) // tm) * tm
    if m_pad != m:
        xb = jnp.pad(xb, ((0, m_pad - m), (0, 0)))
        t = jnp.pad(t, ((0, m_pad - m), (0, 0)))
    grid_m = m_pad // tm

    partials = pl.pallas_call(
        _linear_mse_kernel,
        out_shape=jax.ShapeDtypeStruct((grid_m, 8, n), jnp.float32),
        grid_spec=pltpu.PrefetchScalarGridSpec(
            num_scalar_prefetch=0,
            grid=(grid_m,),
            in_specs=[
                pl.BlockSpec((tm, kdim), lambda i: (i, 0)),   # x row tile
                pl.BlockSpec((kdim, n), lambda i: (0, 0)),    # full weight (resident)
                pl.BlockSpec((tm, n), lambda i: (i, 0)),      # target row tile
            ],
            out_specs=pl.BlockSpec((1, 8, n), lambda i: (i, 0, 0)),
        ),
        compiler_params=pltpu.CompilerParams(
            dimension_semantics=("parallel",),  # independent row tiles -> megacore
        ),
    )(xb, wt, t)

    # Final lane/tile reduction + mean in plain JAX (tiny: grid_m * 8 * 768 f32).
    return jnp.sum(partials) / (m * n)


if __name__ == "__main__":
    key = jax.random.PRNGKey(0)
    k1, k2, k3 = jax.random.split(key, 3)

    # Small shapes consistent with forward: leading dims arbitrary, last dim 768.
    inp = jax.random.normal(k1, (2, 4, IN_FEATURES), dtype=jnp.float32)
    tgt = jax.random.normal(k2, (2, 4, OUT_FEATURES), dtype=jnp.float32)

    # Deterministic init of Linear(768, 768, bias=False), torch layout (out, in).
    bound = 1.0 / (IN_FEATURES ** 0.5)
    weight = jax.random.uniform(
        k3, (OUT_FEATURES, IN_FEATURES), minval=-bound, maxval=bound,
        dtype=jnp.float32,
    )

    loss = jax.block_until_ready(linear_mse_loss(inp, tgt, weight))

    # Reference check in plain JAX (f32). Kernel uses bf16 MXU operands with
    # f32 accumulation, so compare with a relaxed tolerance.
    x2 = inp.reshape((-1, IN_FEATURES))
    t2 = tgt.reshape((-1, OUT_FEATURES))
    ref = jnp.mean((x2 @ weight.T - t2) ** 2)
    assert jnp.allclose(loss, ref, rtol=2e-2, atol=2e-2), (loss, ref)

    print("KERNEL_OK")
</pallas_src>

<mosaic_0001>
module attributes {stable_mosaic.version = 11 : i64} {
  func.func @_linear_mse_kernel(%arg0: i32, %arg1: memref<256x768xbf16, #tpu.memory_space<vmem>>, %arg2: memref<768x768xbf16, #tpu.memory_space<vmem>>, %arg3: memref<256x768xf32, #tpu.memory_space<vmem>>, %arg4: memref<1x8x768xf32, #tpu.memory_space<vmem>>) attributes {dimension_semantics = [#tpu.dimension_semantics<parallel>], iteration_bounds = array<i64: 1>, scalar_prefetch = 0 : i64, scratch_operands = 0 : i64, tpu.core_type = #tpu.core_type<tc>, window_params = [{transform_indices = @transform_0, window_bounds = array<i64: 256, 768>}, {pipeline_mode = #tpu.pipeline_mode<synchronous>, transform_indices = @transform_1, window_bounds = array<i64: 768, 768>}, {transform_indices = @transform_2, window_bounds = array<i64: 256, 768>}, {transform_indices = @transform_3, window_bounds = array<i64: 1, 8, 768>}]} {
    %c0 = arith.constant 0 : index
    %c0_0 = arith.constant 0 : index
    %0 = vector.load %arg1[%c0, %c0_0] : memref<256x768xbf16, #tpu.memory_space<vmem>>, vector<256x768xbf16>
    %c0_1 = arith.constant 0 : index
    %c0_2 = arith.constant 0 : index
    %1 = vector.load %arg2[%c0_1, %c0_2] : memref<768x768xbf16, #tpu.memory_space<vmem>>, vector<768x768xbf16>
    %cst = arith.constant dense<0.000000e+00> : vector<256x768xf32>
    %2 = tpu.matmul %0, %1, %cst {dimension_numbers = #tpu.dot_dimension_numbers<[1], [0], [0], [1], [0, 0, 1, 1], [], []>} : vector<256x768xbf16>, vector<768x768xbf16>, vector<256x768xf32> -> vector<256x768xf32>
    %c0_3 = arith.constant 0 : index
    %c0_4 = arith.constant 0 : index
    %3 = vector.load %arg3[%c0_3, %c0_4] : memref<256x768xf32, #tpu.memory_space<vmem>>, vector<256x768xf32>
    %4 = arith.subf %2, %3 : vector<256x768xf32>
    %5 = arith.mulf %4, %4 : vector<256x768xf32>
    %6 = vector.extract_strided_slice %5 {offsets = [0, 0], sizes = [8, 768], strides = [1, 1]} : vector<256x768xf32> to vector<8x768xf32>
    %7 = vector.extract_strided_slice %5 {offsets = [8, 0], sizes = [8, 768], strides = [1, 1]} : vector<256x768xf32> to vector<8x768xf32>
    %8 = arith.addf %6, %7 : vector<8x768xf32>
    %9 = vector.extract_strided_slice %5 {offsets = [16, 0], sizes = [8, 768], strides = [1, 1]} : vector<256x768xf32> to vector<8x768xf32>
    %10 = arith.addf %8, %9 : vector<8x768xf32>
    %11 = vector.extract_strided_slice %5 {offsets = [24, 0], sizes = [8, 768], strides = [1, 1]} : vector<256x768xf32> to vector<8x768xf32>
    %12 = arith.addf %10, %11 : vector<8x768xf32>
    %13 = vector.extract_strided_slice %5 {offsets = [32, 0], sizes = [8, 768], strides = [1, 1]} : vector<256x768xf32> to vector<8x768xf32>
    %14 = arith.addf %12, %13 : vector<8x768xf32>
    %15 = vector.extract_strided_slice %5 {offsets = [40, 0], sizes = [8, 768], strides = [1, 1]} : vector<256x768xf32> to vector<8x768xf32>
    %16 = arith.addf %14, %15 : vector<8x768xf32>
    %17 = vector.extract_strided_slice %5 {offsets = [48, 0], sizes = [8, 768], strides = [1, 1]} : vector<256x768xf32> to vector<8x768xf32>
    %18 = arith.addf %16, %17 : vector<8x768xf32>
    %19 = vector.extract_strided_slice %5 {offsets = [56, 0], sizes = [8, 768], strides = [1, 1]} : vector<256x768xf32> to vector<8x768xf32>
    %20 = arith.addf %18, %19 : vector<8x768xf32>
    %21 = vector.extract_strided_slice %5 {offsets = [64, 0], sizes = [8, 768], strides = [1, 1]} : vector<256x768xf32> to vector<8x768xf32>
    %22 = arith.addf %20, %21 : vector<8x768xf32>
    %23 = vector.extract_strided_slice %5 {offsets = [72, 0], sizes = [8, 768], strides = [1, 1]} : vector<256x768xf32> to vector<8x768xf32>
    %24 = arith.addf %22, %23 : vector<8x768xf32>
    %25 = vector.extract_strided_slice %5 {offsets = [80, 0], sizes = [8, 768], strides = [1, 1]} : vector<256x768xf32> to vector<8x768xf32>
    %26 = arith.addf %24, %25 : vector<8x768xf32>
    %27 = vector.extract_strided_slice %5 {offsets = [88, 0], sizes = [8, 768], strides = [1, 1]} : vector<256x768xf32> to vector<8x768xf32>
    %28 = arith.addf %26, %27 : vector<8x768xf32>
    %29 = vector.extract_strided_slice %5 {offsets = [96, 0], sizes = [8, 768], strides = [1, 1]} : vector<256x768xf32> to vector<8x768xf32>
    %30 = arith.addf %28, %29 : vector<8x768xf32>
    %31 = vector.extract_strided_slice %5 {offsets = [104, 0], sizes = [8, 768], strides = [1, 1]} : vector<256x768xf32> to vector<8x768xf32>
    %32 = arith.addf %30, %31 : vector<8x768xf32>
    %33 = vector.extract_strided_slice %5 {offsets = [112, 0], sizes = [8, 768], strides = [1, 1]} : vector<256x768xf32> to vector<8x768xf32>
    %34 = arith.addf %32, %33 : vector<8x768xf32>
    %35 = vector.extract_strided_slice %5 {offsets = [120, 0], sizes = [8, 768], strides = [1, 1]} : vector<256x768xf32> to vector<8x768xf32>
    %36 = arith.addf %34, %35 : vector<8x768xf32>
    %37 = vector.extract_strided_slice %5 {offsets = [128, 0], sizes = [8, 768], strides = [1, 1]} : vector<256x768xf32> to vector<8x768xf32>
    %38 = arith.addf %36, %37 : vector<8x768xf32>
    %39 = vector.extract_strided_slice %5 {offsets = [136, 0], sizes = [8, 768], strides = [1, 1]} : vector<256x768xf32> to vector<8x768xf32>
    %40 = arith.addf %38, %39 : vector<8x768xf32>
    %41 = vector.extract_strided_slice %5 {offsets = [144, 0], sizes = [8, 768], strides = [1, 1]} : vector<256x768xf32> to vector<8x768xf32>
    %42 = arith.addf %40, %41 : vector<8x768xf32>
    %43 = vector.extract_strided_slice %5 {offsets = [152, 0], sizes = [8, 768], strides = [1, 1]} : vector<256x768xf32> to vector<8x768xf32>
    %44 = arith.addf %42, %43 : vector<8x768xf32>
    %45 = vector.extract_strided_slice %5 {offsets = [160, 0], sizes = [8, 768], strides = [1, 1]} : vector<256x768xf32> to vector<8x768xf32>
    %46 = arith.addf %44, %45 : vector<8x768xf32>
    %47 = vector.extract_strided_slice %5 {offsets = [168, 0], sizes = [8, 768], strides = [1, 1]} : vector<256x768xf32> to vector<8x768xf32>
    %48 = arith.addf %46, %47 : vector<8x768xf32>
    %49 = vector.extract_strided_slice %5 {offsets = [176, 0], sizes = [8, 768], strides = [1, 1]} : vector<256x768xf32> to vector<8x768xf32>
    %50 = arith.addf %48, %49 : vector<8x768xf32>
    %51 = vector.extract_strided_slice %5 {offsets = [184, 0], sizes = [8, 768], strides = [1, 1]} : vector<256x768xf32> to vector<8x768xf32>
    %52 = arith.addf %50, %51 : vector<8x768xf32>
    %53 = vector.extract_strided_slice %5 {offsets = [192, 0], sizes = [8, 768], strides = [1, 1]} : vector<256x768xf32> to vector<8x768xf32>
    %54 = arith.addf %52, %53 : vector<8x768xf32>
    %55 = vector.extract_strided_slice %5 {offsets = [200, 0], sizes = [8, 768], strides = [1, 1]} : vector<256x768xf32> to vector<8x768xf32>
    %56 = arith.addf %54, %55 : vector<8x768xf32>
    %57 = vector.extract_strided_slice %5 {offsets = [208, 0], sizes = [8, 768], strides = [1, 1]} : vector<256x768xf32> to vector<8x768xf32>
    %58 = arith.addf %56, %57 : vector<8x768xf32>
    %59 = vector.extract_strided_slice %5 {offsets = [216, 0], sizes = [8, 768], strides = [1, 1]} : vector<256x768xf32> to vector<8x768xf32>
    %60 = arith.addf %58, %59 : vector<8x768xf32>
    %61 = vector.extract_strided_slice %5 {offsets = [224, 0], sizes = [8, 768], strides = [1, 1]} : vector<256x768xf32> to vector<8x768xf32>
    %62 = arith.addf %60, %61 : vector<8x768xf32>
    %63 = vector.extract_strided_slice %5 {offsets = [232, 0], sizes = [8, 768], strides = [1, 1]} : vector<256x768xf32> to vector<8x768xf32>
    %64 = arith.addf %62, %63 : vector<8x768xf32>
    %65 = vector.extract_strided_slice %5 {offsets = [240, 0], sizes = [8, 768], strides = [1, 1]} : vector<256x768xf32> to vector<8x768xf32>
    %66 = arith.addf %64, %65 : vector<8x768xf32>
    %67 = vector.extract_strided_slice %5 {offsets = [248, 0], sizes = [8, 768], strides = [1, 1]} : vector<256x768xf32> to vector<8x768xf32>
    %68 = arith.addf %66, %67 : vector<8x768xf32>
    %69 = vector.shape_cast %68 : vector<8x768xf32> to vector<1x8x768xf32>
    %c0_5 = arith.constant 0 : index
    %c0_6 = arith.constant 0 : index
    %c0_7 = arith.constant 0 : index
    %70 = vector.load %arg4[%c0_5, %c0_6, %c0_7] : memref<1x8x768xf32, #tpu.memory_space<vmem>>, vector<1x8x768xf32>
    tpu.vector_store %arg4[%c0_5, %c0_6, %c0_7], %69 {strides = array<i32>} : memref<1x8x768xf32, #tpu.memory_space<vmem>>, vector<1x8x768xf32>,
    return
  }
  func.func @transform_0(%arg0: i32) -> (i32, i32) {
    %c0_i32 = arith.constant 0 : i32
    %c0_i32_0 = arith.constant 0 : i32
    return %arg0, %c0_i32 : i32, i32
  }
  func.func @transform_1(%arg0: i32) -> (i32, i32) {
    %c0_i32 = arith.constant 0 : i32
    %c0_i32_0 = arith.constant 0 : i32
    %c0_i32_1 = arith.constant 0 : i32
    return %c0_i32, %c0_i32_0 : i32, i32
  }
  func.func @transform_2(%arg0: i32) -> (i32, i32) {
    %c0_i32 = arith.constant 0 : i32
    %c0_i32_0 = arith.constant 0 : i32
    return %arg0, %c0_i32 : i32, i32
  }
  func.func @transform_3(%arg0: i32) -> (i32, i32, i32) {
    %c0_i32 = arith.constant 0 : i32
    %c0_i32_0 = arith.constant 0 : i32
    %c0_i32_1 = arith.constant 0 : i32
    return %arg0, %c0_i32, %c0_i32_0 : i32, i32, i32
  }
}

</mosaic_0001>

<llo_original>
// kernel: tpu_custom_call.1
$region0: #{tpu_custom_call.1}
  #allocation0 [shape = 'u32[]', space=smem, size = 0x4, offset = 0x4, fixed_abs, tag = 'smem constant byte address 0x4 - core index']
  #allocation1 [shape = 'u32[144,128]{1,0:T(1,128)}', space=vmem, size = 0x12000, scoped, tag = 'internal scratch']
  %s0 = inlined_call_operand.hbm [shape: bf16[256,768], index: 0, kind: input, shape index: {}]
  %s1 = inlined_call_operand.hbm [shape: bf16[768,768], index: 1, kind: input, shape index: {}]
  %s2 = inlined_call_operand.hbm [shape: f32[256,768], index: 2, kind: input, shape index: {}]
  %s3 = inlined_call_operand.hbm [shape: f32[1,8,768], index: 3, kind: output, shape index: {}]
  %s4 = sld [smem:[#allocation0]]
  $region34: #{tpu_custom_call.1} parent=0
    _
  %s6 = ssub.s32 1, %s4
  %s7 = scalar_select 0, %s6, %s4
  $region1: #{tpu_custom_call.1} parent=0
    #allocation2 [shape = 'u8[393216]{0}', space=vmem, size = 0x60000, scoped, tag = 'input window, operand 0, single buffered']
    #allocation3 [shape = 's32[1]{0}', space=sflag, size = 0x4, scoped, tag = 'scoped memory for tpu_custom_call.1']
    #allocation4 [shape = 's32[1]{0}', space=sflag, size = 0x4, scoped, tag = 'scoped memory for tpu_custom_call.1']
    #allocation5 [shape = 'u8[1179648]{0}', space=vmem, size = 0x120000, scoped, tag = 'input window, operand 1, single buffered']
    #allocation6 [shape = 's32[1]{0}', space=sflag, size = 0x4, scoped, tag = 'scoped memory for tpu_custom_call.1']
    #allocation7 [shape = 'u8[786432]{0}', space=vmem, size = 0xc0000, scoped, tag = 'input window, operand 2, single buffered']
    #allocation8 [shape = 'u8[24576]{0}', space=vmem, size = 0x6000, scoped, tag = 'output window, operand 0, single buffered']
    %8 = vsyncpa [#allocation3], 0
    %9 = vsyncpa [#allocation6], 0
    %10 = vsyncpa [#allocation4], 0
    // Predicated region
    $region2: #{tpu_custom_call.1} parent=1 // pred_check
      _
    $region3: #{tpu_custom_call.1} parent=1 // pred_check_branch
      %12 = sbr.rel (0) target = $region5
    $region4: #{tpu_custom_call.1} parent=1 // pred_region
      %s14 = ssub.s32 12288, 12288
      %15 = vsyncadd [#allocation3], %s14
      %s16 = sshll.u32 [#allocation2], 4
      %s17 = int_to_ptr.vmem [resolvable:$true] %s16
      %22 = dma.hbm_to_vmem [thread:$0]  %s0, 12288, %s17, [#allocation3], 384, 384, 24
    $region5: #{tpu_custom_call.1} parent=1 // pred_fallthru
      _
    // Predicated region
    $region6: #{tpu_custom_call.1} parent=1 // pred_check
      _
    $region7: #{tpu_custom_call.1} parent=1 // pred_check_branch
      %24 = sbr.rel (0) target = $region9
    $region8: #{tpu_custom_call.1} parent=1 // pred_region
      %s26 = ssub.s32 36864, 36864
      %27 = vsyncadd [#allocation6], %s26
      %s28 = sshll.u32 [#allocation5], 4
      %s29 = int_to_ptr.vmem [resolvable:$true] %s28
      %34 = dma.hbm_to_vmem [thread:$0]  %s1, 36864, %s29, [#allocation6], 384, 384, 24
    $region9: #{tpu_custom_call.1} parent=1 // pred_fallthru
      _
    // Predicated region
    $region10: #{tpu_custom_call.1} parent=1 // pred_check
      _
    $region11: #{tpu_custom_call.1} parent=1 // pred_check_branch
      %36 = sbr.rel (0) target = $region13
    $region12: #{tpu_custom_call.1} parent=1 // pred_region
      %s38 = ssub.s32 24576, 24576
      %39 = vsyncadd [#allocation6], %s38
      %s40 = sshll.u32 [#allocation7], 4
      %s41 = int_to_ptr.vmem [resolvable:$true] %s40
      %46 = dma.hbm_to_vmem [thread:$0]  %s2, 24576, %s41, [#allocation6], 768, 768, 48
    $region13: #{tpu_custom_call.1} parent=1 // pred_fallthru
      _
    // Predicated region
    $region14: #{tpu_custom_call.1} parent=1 // pred_check
      _
    $region15: #{tpu_custom_call.1} parent=1 // pred_check_branch
      %48 = sbr.rel (0) target = $region17
    $region16: #{tpu_custom_call.1} parent=1 // pred_region
      %49 = dma.done [#allocation3], 12288
    $region17: #{tpu_custom_call.1} parent=1 // pred_fallthru
      _
    // Predicated region
    $region18: #{tpu_custom_call.1} parent=1 // pred_check
      _
    $region19: #{tpu_custom_call.1} parent=1 // pred_check_branch
      %51 = sbr.rel (0) target = $region21
    $region20: #{tpu_custom_call.1} parent=1 // pred_region
      %52 = dma.done [#allocation6], 36864
    $region21: #{tpu_custom_call.1} parent=1 // pred_fallthru
      _
    // Predicated region
    $region22: #{tpu_custom_call.1} parent=1 // pred_check
      _
    $region23: #{tpu_custom_call.1} parent=1 // pred_check_branch
      %54 = sbr.rel (0) target = $region25
    $region24: #{tpu_custom_call.1} parent=1 // pred_region
      %55 = dma.done [#allocation6], 24576
    $region25: #{tpu_custom_call.1} parent=1 // pred_fallthru
      _
    %v56 = vld [vmem:[#allocation2] sm:$0xff]
    %v57 = vld [vmem:[#allocation2 + $0x8] sm:$0xff]
    %v58 = vld [vmem:[#allocation2 + $0x10] sm:$0xff]
    %v59 = vld [vmem:[#allocation2 + $0x18] sm:$0xff]
    %v60 = vld [vmem:[#allocation2 + $0x20] sm:$0xff]
    %v61 = vld [vmem:[#allocation2 + $0x28] sm:$0xff]
    %v62 = vld [vmem:[#allocation2 + $0x30] sm:$0xff]
    %v63 = vld [vmem:[#allocation2 + $0x38] sm:$0xff]
    %v64 = vld [vmem:[#allocation2 + $0x40] sm:$0xff]
    %v65 = vld [vmem:[#allocation2 + $0x48] sm:$0xff]
    %v66 = vld [vmem:[#allocation2 + $0x50] sm:$0xff]
    %v67 = vld [vmem:[#allocation2 + $0x58] sm:$0xff]
    %v68 = vld [vmem:[#allocation2 + $0x60] sm:$0xff]
    %v69 = vld [vmem:[#allocation2 + $0x68] sm:$0xff]
    %v70 = vld [vmem:[#allocation2 + $0x70] sm:$0xff]
    %v71 = vld [vmem:[#allocation2 + $0x78] sm:$0xff]
    %v72 = vld [vmem:[#allocation2 + $0x80] sm:$0xff]
    %v73 = vld [vmem:[#allocation2 + $0x88] sm:$0xff]
    %v74 = vld [vmem:[#allocation2 + $0x90] sm:$0xff]
    %v75 = vld [vmem:[#allocation2 + $0x98] sm:$0xff]
    %v76 = vld [vmem:[#allocation2 + $0xa0] sm:$0xff]
    %v77 = vld [vmem:[#allocation2 + $0xa8] sm:$0xff]
    %v78 = vld [vmem:[#allocation2 + $0xb0] sm:$0xff]
    %v79 = vld [vmem:[#allocation2 + $0xb8] sm:$0xff]
    %v80 = vld [vmem:[#allocation2 + $0xc0] sm:$0xff]
    %v81 = vld [vmem:[#allocation2 + $0xc8] sm:$0xff]
    %v82 = vld [vmem:[#allocation2 + $0xd0] sm:$0xff]
    %v83 = vld [vmem:[#allocation2 + $0xd8] sm:$0xff]
    %v84 = vld [vmem:[#allocation2 + $0xe0] sm:$0xff]
    %v85 = vld [vmem:[#allocation2 + $0xe8] sm:$0xff]
    %v86 = vld [vmem:[#allocation2 + $0xf0] sm:$0xff]
    %v87 = vld [vmem:[#allocation2 + $0xf8] sm:$0xff]
    %v88 = vld [vmem:[#allocation2 + $0x100] sm:$0xff]
    %v89 = vld [vmem:[#allocation2 + $0x108] sm:$0xff]
    %v90 = vld [vmem:[#allocation2 + $0x110] sm:$0xff]
    %v91 = vld [vmem:[#allocation2 + $0x118] sm:$0xff]
    %v92 = vld [vmem:[#allocation2 + $0x120] sm:$0xff]
    %v93 = vld [vmem:[#allocation2 + $0x128] sm:$0xff]
    %v94 = vld [vmem:[#allocation2 + $0x130] sm:$0xff]
    %v95 = vld [vmem:[#allocation2 + $0x138] sm:$0xff]
    %v96 = vld [vmem:[#allocation2 + $0x140] sm:$0xff]
    %v97 = vld [vmem:[#allocation2 + $0x148] sm:$0xff]
    %v98 = vld [vmem:[#allocation2 + $0x150] sm:$0xff]
    %v99 = vld [vmem:[#allocation2 + $0x158] sm:$0xff]
    %v100 = vld [vmem:[#allocation2 + $0x160] sm:$0xff]
    %v101 = vld [vmem:[#allocation2 + $0x168] sm:$0xff]
    %v102 = vld [vmem:[#allocation2 + $0x170] sm:$0xff]
    %v103 = vld [vmem:[#allocation2 + $0x178] sm:$0xff]
    %v104 = vld [vmem:[#allocation2 + $0x180] sm:$0xff]
    %v105 = vld [vmem:[#allocation2 + $0x188] sm:$0xff]
    %v106 = vld [vmem:[#allocation2 + $0x190] sm:$0xff]
    %v107 = vld [vmem:[#allocation2 + $0x198] sm:$0xff]
    %v108 = vld [vmem:[#allocation2 + $0x1a0] sm:$0xff]
    %v109 = vld [vmem:[#allocation2 + $0x1a8] sm:$0xff]
    %v110 = vld [vmem:[#allocation2 + $0x1b0] sm:$0xff]
    %v111 = vld [vmem:[#allocation2 + $0x1b8] sm:$0xff]
    %v112 = vld [vmem:[#allocation2 + $0x1c0] sm:$0xff]
    %v113 = vld [vmem:[#allocation2 + $0x1c8] sm:$0xff]
    %v114 = vld [vmem:[#allocation2 + $0x1d0] sm:$0xff]
    %v115 = vld [vmem:[#allocation2 + $0x1d8] sm:$0xff]
    %v116 = vld [vmem:[#allocation2 + $0x1e0] sm:$0xff]
    %v117 = vld [vmem:[#allocation2 + $0x1e8] sm:$0xff]
    %v118 = vld [vmem:[#allocation2 + $0x1f0] sm:$0xff]
    %v119 = vld [vmem:[#allocation2 + $0x1f8] sm:$0xff]
    %v120 = vld [vmem:[#allocation2 + $0x200] sm:$0xff]
    %v121 = vld [vmem:[#allocation2 + $0x208] sm:$0xff]
    %v122 = vld [vmem:[#allocation2 + $0x210] sm:$0xff]
    %v123 = vld [vmem:[#allocation2 + $0x218] sm:$0xff]
    %v124 = vld [vmem:[#allocation2 + $0x220] sm:$0xff]
    %v125 = vld [vmem:[#allocation2 + $0x228] sm:$0xff]
    %v126 = vld [vmem:[#allocation2 + $0x230] sm:$0xff]
    %v127 = vld [vmem:[#allocation2 + $0x238] sm:$0xff]
    %v128 = vld [vmem:[#allocation2 + $0x240] sm:$0xff]
    %v129 = vld [vmem:[#allocation2 + $0x248] sm:$0xff]
    %v130 = vld [vmem:[#allocation2 + $0x250] sm:$0xff]
    %v131 = vld [vmem:[#allocation2 + $0x258] sm:$0xff]
    %v132 = vld [vmem:[#allocation2 + $0x260] sm:$0xff]
    %v133 = vld [vmem:[#allocation2 + $0x268] sm:$0xff]
    %v134 = vld [vmem:[#allocation2 + $0x270] sm:$0xff]
    %v135 = vld [vmem:[#allocation2 + $0x278] sm:$0xff]
    %v136 = vld [vmem:[#allocation2 + $0x280] sm:$0xff]
    %v137 = vld [vmem:[#allocation2 + $0x288] sm:$0xff]
    %v138 = vld [vmem:[#allocation2 + $0x290] sm:$0xff]
    %v139 = vld [vmem:[#allocation2 + $0x298] sm:$0xff]
    %v140 = vld [vmem:[#allocation2 + $0x2a0] sm:$0xff]
    %v141 = vld [vmem:[#allocation2 + $0x2a8] sm:$0xff]
    %v142 = vld [vmem:[#allocation2 + $0x2b0] sm:$0xff]
    %v143 = vld [vmem:[#allocation2 + $0x2b8] sm:$0xff]
    %v144 = vld [vmem:[#allocation2 + $0x2c0] sm:$0xff]
    %v145 = vld [vmem:[#allocation2 + $0x2c8] sm:$0xff]
    %v146 = vld [vmem:[#allocation2 + $0x2d0] sm:$0xff]
    %v147 = vld [vmem:[#allocation2 + $0x2d8] sm:$0xff]
    %v148 = vld [vmem:[#allocation2 + $0x2e0] sm:$0xff]
    %v149 = vld [vmem:[#allocation2 + $0x2e8] sm:$0xff]
    %v150 = vld [vmem:[#allocation2 + $0x2f0] sm:$0xff]
    %v151 = vld [vmem:[#allocation2 + $0x2f8] sm:$0xff]
    %v152 = vld [vmem:[#allocation5] sm:$0xff]
    %v153 = vld [vmem:[#allocation5 + $0x8] sm:$0xff]
    %v154 = vld [vmem:[#allocation5 + $0x10] sm:$0xff]
    %v155 = vld [vmem:[#allocation5 + $0x18] sm:$0xff]
    %v156 = vld [vmem:[#allocation5 + $0x20] sm:$0xff]
    %v157 = vld [vmem:[#allocation5 + $0x28] sm:$0xff]
    %v158 = vld [vmem:[#allocation5 + $0x30] sm:$0xff]
    %v159 = vld [vmem:[#allocation5 + $0x38] sm:$0xff]
    %v160 = vld [vmem:[#allocation5 + $0x40] sm:$0xff]
    %v161 = vld [vmem:[#allocation5 + $0x48] sm:$0xff]
    %v162 = vld [vmem:[#allocation5 + $0x50] sm:$0xff]
    %v163 = vld [vmem:[#allocation5 + $0x58] sm:$0xff]
    %v164 = vld [vmem:[#allocation5 + $0x60] sm:$0xff]
    %v165 = vld [vmem:[#allocation5 + $0x68] sm:$0xff]
    %v166 = vld [vmem:[#allocation5 + $0x70] sm:$0xff]
    %v167 = vld [vmem:[#allocation5 + $0x78] sm:$0xff]
    %v168 = vld [vmem:[#allocation5 + $0x80] sm:$0xff]
    %v169 = vld [vmem:[#allocation5 + $0x88] sm:$0xff]
    %v170 = vld [vmem:[#allocation5 + $0x90] sm:$0xff]
    %v171 = vld [vmem:[#allocation5 + $0x98] sm:$0xff]
    %v172 = vld [vmem:[#allocation5 + $0xa0] sm:$0xff]
    %v173 = vld [vmem:[#allocation5 + $0xa8] sm:$0xff]
    %v174 = vld [vmem:[#allocation5 + $0xb0] sm:$0xff]
    %v175 = vld [vmem:[#allocation5 + $0xb8] sm:$0xff]
    %v176 = vld [vmem:[#allocation5 + $0xc0] sm:$0xff]
    %v177 = vld [vmem:[#allocation5 + $0xc8] sm:$0xff]
    %v178 = vld [vmem:[#allocation5 + $0xd0] sm:$0xff]
    %v179 = vld [vmem:[#allocation5 + $0xd8] sm:$0xff]
    %v180 = vld [vmem:[#allocation5 + $0xe0] sm:$0xff]
    %v181 = vld [vmem:[#allocation5 + $0xe8] sm:$0xff]
    %v182 = vld [vmem:[#allocation5 + $0xf0] sm:$0xff]
    %v183 = vld [vmem:[#allocation5 + $0xf8] sm:$0xff]
    %v184 = vld [vmem:[#allocation5 + $0x100] sm:$0xff]
    %v185 = vld [vmem:[#allocation5 + $0x108] sm:$0xff]
    %v186 = vld [vmem:[#allocation5 + $0x110] sm:$0xff]
    %v187 = vld [vmem:[#allocation5 + $0x118] sm:$0xff]
    %v188 = vld [vmem:[#allocation5 + $0x120] sm:$0xff]
    %v189 = vld [vmem:[#allocation5 + $0x128] sm:$0xff]
    %v190 = vld [vmem:[#allocation5 + $0x130] sm:$0xff]
    %v191 = vld [vmem:[#allocation5 + $0x138] sm:$0xff]
    %v192 = vld [vmem:[#allocation5 + $0x140] sm:$0xff]
    %v193 = vld [vmem:[#allocation5 + $0x148] sm:$0xff]
    %v194 = vld [vmem:[#allocation5 + $0x150] sm:$0xff]
    %v195 = vld [vmem:[#allocation5 + $0x158] sm:$0xff]
    %v196 = vld [vmem:[#allocation5 + $0x160] sm:$0xff]
    %v197 = vld [vmem:[#allocation5 + $0x168] sm:$0xff]
    %v198 = vld [vmem:[#allocation5 + $0x170] sm:$0xff]
    %v199 = vld [vmem:[#allocation5 + $0x178] sm:$0xff]
    %v200 = vld [vmem:[#allocation5 + $0x180] sm:$0xff]
    %v201 = vld [vmem:[#allocation5 + $0x188] sm:$0xff]
    %v202 = vld [vmem:[#allocation5 + $0x190] sm:$0xff]
    %v203 = vld [vmem:[#allocation5 + $0x198] sm:$0xff]
    %v204 = vld [vmem:[#allocation5 + $0x1a0] sm:$0xff]
    %v205 = vld [vmem:[#allocation5 + $0x1a8] sm:$0xff]
    %v206 = vld [vmem:[#allocation5 + $0x1b0] sm:$0xff]
    %v207 = vld [vmem:[#allocation5 + $0x1b8] sm:$0xff]
    %v208 = vld [vmem:[#allocation5 + $0x1c0] sm:$0xff]
    %v209 = vld [vmem:[#allocation5 + $0x1c8] sm:$0xff]
    %v210 = vld [vmem:[#allocation5 + $0x1d0] sm:$0xff]
    %v211 = vld [vmem:[#allocation5 + $0x1d8] sm:$0xff]
    %v212 = vld [vmem:[#allocation5 + $0x1e0] sm:$0xff]
    %v213 = vld [vmem:[#allocation5 + $0x1e8] sm:$0xff]
    %v214 = vld [vmem:[#allocation5 + $0x1f0] sm:$0xff]
    %v215 = vld [vmem:[#allocation5 + $0x1f8] sm:$0xff]
    %v216 = vld [vmem:[#allocation5 + $0x200] sm:$0xff]
    %v217 = vld [vmem:[#allocation5 + $0x208] sm:$0xff]
    %v218 = vld [vmem:[#allocation5 + $0x210] sm:$0xff]
    %v219 = vld [vmem:[#allocation5 + $0x218] sm:$0xff]
    %v220 = vld [vmem:[#allocation5 + $0x220] sm:$0xff]
    %v221 = vld [vmem:[#allocation5 + $0x228] sm:$0xff]
    %v222 = vld [vmem:[#allocation5 + $0x230] sm:$0xff]
    %v223 = vld [vmem:[#allocation5 + $0x238] sm:$0xff]
    %v224 = vld [vmem:[#allocation5 + $0x240] sm:$0xff]
    %v225 = vld [vmem:[#allocation5 + $0x248] sm:$0xff]
    %v226 = vld [vmem:[#allocation5 + $0x250] sm:$0xff]
    %v227 = vld [vmem:[#allocation5 + $0x258] sm:$0xff]
    %v228 = vld [vmem:[#allocation5 + $0x260] sm:$0xff]
    %v229 = vld [vmem:[#allocation5 + $0x268] sm:$0xff]
    %v230 = vld [vmem:[#allocation5 + $0x270] sm:$0xff]
    %v231 = vld [vmem:[#allocation5 + $0x278] sm:$0xff]
    %v232 = vld [vmem:[#allocation5 + $0x280] sm:$0xff]
    %v233 = vld [vmem:[#allocation5 + $0x288] sm:$0xff]
    %v234 = vld [vmem:[#allocation5 + $0x290] sm:$0xff]
    %v235 = vld [vmem:[#allocation5 + $0x298] sm:$0xff]
    %v236 = vld [vmem:[#allocation5 + $0x2a0] sm:$0xff]
    %v237 = vld [vmem:[#allocation5 + $0x2a8] sm:$0xff]
    %v238 = vld [vmem:[#allocation5 + $0x2b0] sm:$0xff]
    %v239 = vld [vmem:[#allocation5 + $0x2b8] sm:$0xff]
    %v240 = vld [vmem:[#allocation5 + $0x2c0] sm:$0xff]
    %v241 = vld [vmem:[#allocation5 + $0x2c8] sm:$0xff]
    %v242 = vld [vmem:[#allocation5 + $0x2d0] sm:$0xff]
    %v243 = vld [vmem:[#allocation5 + $0x2d8] sm:$0xff]
    %v244 = vld [vmem:[#allocation5 + $0x2e0] sm:$0xff]
    %v245 = vld [vmem:[#allocation5 + $0x2e8] sm:$0xff]
    %v246 = vld [vmem:[#allocation5 + $0x2f0] sm:$0xff]
    %v247 = vld [vmem:[#allocation5 + $0x2f8] sm:$0xff]
    %v248 = vld [vmem:[#allocation5 + $0x300] sm:$0xff]
    %v249 = vld [vmem:[#allocation5 + $0x308] sm:$0xff]
    %v250 = vld [vmem:[#allocation5 + $0x310] sm:$0xff]
    %v251 = vld [vmem:[#allocation5 + $0x318] sm:$0xff]
    %v252 = vld [vmem:[#allocation5 + $0x320] sm:$0xff]
    %v253 = vld [vmem:[#allocation5 + $0x328] sm:$0xff]
    %v254 = vld [vmem:[#allocation5 + $0x330] sm:$0xff]
    %v255 = vld [vmem:[#allocation5 + $0x338] sm:$0xff]
    %v256 = vld [vmem:[#allocation5 + $0x340] sm:$0xff]
    %v257 = vld [vmem:[#allocation5 + $0x348] sm:$0xff]
    %v258 = vld [vmem:[#allocation5 + $0x350] sm:$0xff]
    %v259 = vld [vmem:[#allocation5 + $0x358] sm:$0xff]
    %v260 = vld [vmem:[#allocation5 + $0x360] sm:$0xff]
    %v261 = vld [vmem:[#allocation5 + $0x368] sm:$0xff]
    %v262 = vld [vmem:[#allocation5 + $0x370] sm:$0xff]
    %v263 = vld [vmem:[#allocation5 + $0x378] sm:$0xff]
    %v264 = vld [vmem:[#allocation5 + $0x380] sm:$0xff]
    %v265 = vld [vmem:[#allocation5 + $0x388] sm:$0xff]
    %v266 = vld [vmem:[#allocation5 + $0x390] sm:$0xff]
    %v267 = vld [vmem:[#allocation5 + $0x398] sm:$0xff]
    %v268 = vld [vmem:[#allocation5 + $0x3a0] sm:$0xff]
    %v269 = vld [vmem:[#allocation5 + $0x3a8] sm:$0xff]
    %v270 = vld [vmem:[#allocation5 + $0x3b0] sm:$0xff]
    %v271 = vld [vmem:[#allocation5 + $0x3b8] sm:$0xff]
    %v272 = vld [vmem:[#allocation5 + $0x3c0] sm:$0xff]
    %v273 = vld [vmem:[#allocation5 + $0x3c8] sm:$0xff]
    %v274 = vld [vmem:[#allocation5 + $0x3d0] sm:$0xff]
    %v275 = vld [vmem:[#allocation5 + $0x3d8] sm:$0xff]
    %v276 = vld [vmem:[#allocation5 + $0x3e0] sm:$0xff]
    %v277 = vld [vmem:[#allocation5 + $0x3e8] sm:$0xff]
    %v278 = vld [vmem:[#allocation5 + $0x3f0] sm:$0xff]
    %v279 = vld [vmem:[#allocation5 + $0x3f8] sm:$0xff]
    %v280 = vld [vmem:[#allocation5 + $0x400] sm:$0xff]
    %v281 = vld [vmem:[#allocation5 + $0x408] sm:$0xff]
    %v282 = vld [vmem:[#allocation5 + $0x410] sm:$0xff]
    %v283 = vld [vmem:[#allocation5 + $0x418] sm:$0xff]
    %v284 = vld [vmem:[#allocation5 + $0x420] sm:$0xff]
    %v285 = vld [vmem:[#allocation5 + $0x428] sm:$0xff]
    %v286 = vld [vmem:[#allocation5 + $0x430] sm:$0xff]
    %v287 = vld [vmem:[#allocation5 + $0x438] sm:$0xff]
    %v288 = vld [vmem:[#allocation5 + $0x440] sm:$0xff]
    %v289 = vld [vmem:[#allocation5 + $0x448] sm:$0xff]
    %v290 = vld [vmem:[#allocation5 + $0x450] sm:$0xff]
    %v291 = vld [vmem:[#allocation5 + $0x458] sm:$0xff]
    %v292 = vld [vmem:[#allocation5 + $0x460] sm:$0xff]
    %v293 = vld [vmem:[#allocation5 + $0x468] sm:$0xff]
    %v294 = vld [vmem:[#allocation5 + $0x470] sm:$0xff]
    %v295 = vld [vmem:[#allocation5 + $0x478] sm:$0xff]
    %v296 = vld [vmem:[#allocation5 + $0x480] sm:$0xff]
    %v297 = vld [vmem:[#allocation5 + $0x488] sm:$0xff]
    %v298 = vld [vmem:[#allocation5 + $0x490] sm:$0xff]
    %v299 = vld [vmem:[#allocation5 + $0x498] sm:$0xff]
    %v300 = vld [vmem:[#allocation5 + $0x4a0] sm:$0xff]
    %v301 = vld [vmem:[#allocation5 + $0x4a8] sm:$0xff]
    %v302 = vld [vmem:[#allocation5 + $0x4b0] sm:$0xff]
    %v303 = vld [vmem:[#allocation5 + $0x4b8] sm:$0xff]
    %v304 = vld [vmem:[#allocation5 + $0x4c0] sm:$0xff]
    %v305 = vld [vmem:[#allocation5 + $0x4c8] sm:$0xff]
    %v306 = vld [vmem:[#allocation5 + $0x4d0] sm:$0xff]
    %v307 = vld [vmem:[#allocation5 + $0x4d8] sm:$0xff]
    %v308 = vld [vmem:[#allocation5 + $0x4e0] sm:$0xff]
    %v309 = vld [vmem:[#allocation5 + $0x4e8] sm:$0xff]
    %v310 = vld [vmem:[#allocation5 + $0x4f0] sm:$0xff]
    %v311 = vld [vmem:[#allocation5 + $0x4f8] sm:$0xff]
    %v312 = vld [vmem:[#allocation5 + $0x500] sm:$0xff]
    %v313 = vld [vmem:[#allocation5 + $0x508] sm:$0xff]
    %v314 = vld [vmem:[#allocation5 + $0x510] sm:$0xff]
    %v315 = vld [vmem:[#allocation5 + $0x518] sm:$0xff]
    %v316 = vld [vmem:[#allocation5 + $0x520] sm:$0xff]
    %v317 = vld [vmem:[#allocation5 + $0x528] sm:$0xff]
    %v318 = vld [vmem:[#allocation5 + $0x530] sm:$0xff]
    %v319 = vld [vmem:[#allocation5 + $0x538] sm:$0xff]
    %v320 = vld [vmem:[#allocation5 + $0x540] sm:$0xff]
    %v321 = vld [vmem:[#allocation5 + $0x548] sm:$0xff]
    %v322 = vld [vmem:[#allocation5 + $0x550] sm:$0xff]
    %v323 = vld [vmem:[#allocation5 + $0x558] sm:$0xff]
    %v324 = vld [vmem:[#allocation5 + $0x560] sm:$0xff]
    %v325 = vld [vmem:[#allocation5 + $0x568] sm:$0xff]
    %v326 = vld [vmem:[#allocation5 + $0x570] sm:$0xff]
    %v327 = vld [vmem:[#allocation5 + $0x578] sm:$0xff]
    %v328 = vld [vmem:[#allocation5 + $0x580] sm:$0xff]
    %v329 = vld [vmem:[#allocation5 + $0x588] sm:$0xff]
    %v330 = vld [vmem:[#allocation5 + $0x590] sm:$0xff]
    %v331 = vld [vmem:[#allocation5 + $0x598] sm:$0xff]
    %v332 = vld [vmem:[#allocation5 + $0x5a0] sm:$0xff]
    %v333 = vld [vmem:[#allocation5 + $0x5a8] sm:$0xff]
    %v334 = vld [vmem:[#allocation5 + $0x5b0] sm:$0xff]
    %v335 = vld [vmem:[#allocation5 + $0x5b8] sm:$0xff]
    %v336 = vld [vmem:[#allocation5 + $0x5c0] sm:$0xff]
    %v337 = vld [vmem:[#allocation5 + $0x5c8] sm:$0xff]
    %v338 = vld [vmem:[#allocation5 + $0x5d0] sm:$0xff]
    %v339 = vld [vmem:[#allocation5 + $0x5d8] sm:$0xff]
    %v340 = vld [vmem:[#allocation5 + $0x5e0] sm:$0xff]
    %v341 = vld [vmem:[#allocation5 + $0x5e8] sm:$0xff]
    %v342 = vld [vmem:[#allocation5 + $0x5f0] sm:$0xff]
    %v343 = vld [vmem:[#allocation5 + $0x5f8] sm:$0xff]
    %v344 = vld [vmem:[#allocation5 + $0x600] sm:$0xff]
    %v345 = vld [vmem:[#allocation5 + $0x608] sm:$0xff]
    %v346 = vld [vmem:[#allocation5 + $0x610] sm:$0xff]
    %v347 = vld [vmem:[#allocation5 + $0x618] sm:$0xff]
    %v348 = vld [vmem:[#allocation5 + $0x620] sm:$0xff]
    %v349 = vld [vmem:[#allocation5 + $0x628] sm:$0xff]
    %v350 = vld [vmem:[#allocation5 + $0x630] sm:$0xff]
    %v351 = vld [vmem:[#allocation5 + $0x638] sm:$0xff]
    %v352 = vld [vmem:[#allocation5 + $0x640] sm:$0xff]
    %v353 = vld [vmem:[#allocation5 + $0x648] sm:$0xff]
    %v354 = vld [vmem:[#allocation5 + $0x650] sm:$0xff]
    %v355 = vld [vmem:[#allocation5 + $0x658] sm:$0xff]
    %v356 = vld [vmem:[#allocation5 + $0x660] sm:$0xff]
    %v357 = vld [vmem:[#allocation5 + $0x668] sm:$0xff]
    %v358 = vld [vmem:[#allocation5 + $0x670] sm:$0xff]
    %v359 = vld [vmem:[#allocation5 + $0x678] sm:$0xff]
    %v360 = vld [vmem:[#allocation5 + $0x680] sm:$0xff]
    %v361 = vld [vmem:[#allocation5 + $0x688] sm:$0xff]
    %v362 = vld [vmem:[#allocation5 + $0x690] sm:$0xff]
    %v363 = vld [vmem:[#allocation5 + $0x698] sm:$0xff]
    %v364 = vld [vmem:[#allocation5 + $0x6a0] sm:$0xff]
    %v365 = vld [vmem:[#allocation5 + $0x6a8] sm:$0xff]
    %v366 = vld [vmem:[#allocation5 + $0x6b0] sm:$0xff]
    %v367 = vld [vmem:[#allocation5 + $0x6b8] sm:$0xff]
    %v368 = vld [vmem:[#allocation5 + $0x6c0] sm:$0xff]
    %v369 = vld [vmem:[#allocation5 + $0x6c8] sm:$0xff]
    %v370 = vld [vmem:[#allocation5 + $0x6d0] sm:$0xff]
    %v371 = vld [vmem:[#allocation5 + $0x6d8] sm:$0xff]
    %v372 = vld [vmem:[#allocation5 + $0x6e0] sm:$0xff]
    %v373 = vld [vmem:[#allocation5 + $0x6e8] sm:$0xff]
    %v374 = vld [vmem:[#allocation5 + $0x6f0] sm:$0xff]
    %v375 = vld [vmem:[#allocation5 + $0x6f8] sm:$0xff]
    %v376 = vld [vmem:[#allocation5 + $0x700] sm:$0xff]
    %v377 = vld [vmem:[#allocation5 + $0x708] sm:$0xff]
    %v378 = vld [vmem:[#allocation5 + $0x710] sm:$0xff]
    %v379 = vld [vmem:[#allocation5 + $0x718] sm:$0xff]
    %v380 = vld [vmem:[#allocation5 + $0x720] sm:$0xff]
    %v381 = vld [vmem:[#allocation5 + $0x728] sm:$0xff]
    %v382 = vld [vmem:[#allocation5 + $0x730] sm:$0xff]
    %v383 = vld [vmem:[#allocation5 + $0x738] sm:$0xff]
    %v384 = vld [vmem:[#allocation5 + $0x740] sm:$0xff]
    %v385 = vld [vmem:[#allocation5 + $0x748] sm:$0xff]
    %v386 = vld [vmem:[#allocation5 + $0x750] sm:$0xff]
    %v387 = vld [vmem:[#allocation5 + $0x758] sm:$0xff]
    %v388 = vld [vmem:[#allocation5 + $0x760] sm:$0xff]
    %v389 = vld [vmem:[#allocation5 + $0x768] sm:$0xff]
    %v390 = vld [vmem:[#allocation5 + $0x770] sm:$0xff]
    %v391 = vld [vmem:[#allocation5 + $0x778] sm:$0xff]
    %v392 = vld [vmem:[#allocation5 + $0x780] sm:$0xff]
    %v393 = vld [vmem:[#allocation5 + $0x788] sm:$0xff]
    %v394 = vld [vmem:[#allocation5 + $0x790] sm:$0xff]
    %v395 = vld [vmem:[#allocation5 + $0x798] sm:$0xff]
    %v396 = vld [vmem:[#allocation5 + $0x7a0] sm:$0xff]
    %v397 = vld [vmem:[#allocation5 + $0x7a8] sm:$0xff]
    %v398 = vld [vmem:[#allocation5 + $0x7b0] sm:$0xff]
    %v399 = vld [vmem:[#allocation5 + $0x7b8] sm:$0xff]
    %v400 = vld [vmem:[#allocation5 + $0x7c0] sm:$0xff]
    %v401 = vld [vmem:[#allocation5 + $0x7c8] sm:$0xff]
    %v402 = vld [vmem:[#allocation5 + $0x7d0] sm:$0xff]
    %v403 = vld [vmem:[#allocation5 + $0x7d8] sm:$0xff]
    %v404 = vld [vmem:[#allocation5 + $0x7e0] sm:$0xff]
    %v405 = vld [vmem:[#allocation5 + $0x7e8] sm:$0xff]
    %v406 = vld [vmem:[#allocation5 + $0x7f0] sm:$0xff]
    %v407 = vld [vmem:[#allocation5 + $0x7f8] sm:$0xff]
    %v408 = vld [vmem:[#allocation5 + $0x800] sm:$0xff]
    %v409 = vld [vmem:[#allocation5 + $0x808] sm:$0xff]
    %v410 = vld [vmem:[#allocation5 + $0x810] sm:$0xff]
    %v411 = vld [vmem:[#allocation5 + $0x818] sm:$0xff]
    %v412 = vld [vmem:[#allocation5 + $0x820] sm:$0xff]
    %v413 = vld [vmem:[#allocation5 + $0x828] sm:$0xff]
    %v414 = vld [vmem:[#allocation5 + $0x830] sm:$0xff]
    %v415 = vld [vmem:[#allocation5 + $0x838] sm:$0xff]
    %v416 = vld [vmem:[#allocation5 + $0x840] sm:$0xff]
    %v417 = vld [vmem:[#allocation5 + $0x848] sm:$0xff]
    %v418 = vld [vmem:[#allocation5 + $0x850] sm:$0xff]
    %v419 = vld [vmem:[#allocation5 + $0x858] sm:$0xff]
    %v420 = vld [vmem:[#allocation5 + $0x860] sm:$0xff]
    %v421 = vld [vmem:[#allocation5 + $0x868] sm:$0xff]
    %v422 = vld [vmem:[#allocation5 + $0x870] sm:$0xff]
    %v423 = vld [vmem:[#allocation5 + $0x878] sm:$0xff]
    %v424 = vld [vmem:[#allocation5 + $0x880] sm:$0xff]
    %v425 = vld [vmem:[#allocation5 + $0x888] sm:$0xff]
    %v426 = vld [vmem:[#allocation5 + $0x890] sm:$0xff]
    %v427 = vld [vmem:[#allocation5 + $0x898] sm:$0xff]
    %v428 = vld [vmem:[#allocation5 + $0x8a0] sm:$0xff]
    %v429 = vld [vmem:[#allocation5 + $0x8a8] sm:$0xff]
    %v430 = vld [vmem:[#allocation5 + $0x8b0] sm:$0xff]
    %v431 = vld [vmem:[#allocation5 + $0x8b8] sm:$0xff]
    %v432 = vld [vmem:[#allocation5 + $0x8c0] sm:$0xff]
    %v433 = vld [vmem:[#allocation5 + $0x8c8] sm:$0xff]
    %v434 = vld [vmem:[#allocation5 + $0x8d0] sm:$0xff]
    %v435 = vld [vmem:[#allocation5 + $0x8d8] sm:$0xff]
    %v436 = vld [vmem:[#allocation5 + $0x8e0] sm:$0xff]
    %v437 = vld [vmem:[#allocation5 + $0x8e8] sm:$0xff]
    %v438 = vld [vmem:[#allocation5 + $0x8f0] sm:$0xff]
    %v439 = vld [vmem:[#allocation5 + $0x8f8] sm:$0xff]
    %v536 = vunpack.c.l.b16 %v56
    %v537 = vunpack.c.h.b16 %v56
    %v538 = vunpack.c.l.b16 %v57
    %v539 = vunpack.c.h.b16 %v57
    %v540 = vunpack.c.l.b16 %v58
    %v541 = vunpack.c.h.b16 %v58
    %v542 = vunpack.c.l.b16 %v59
    %v543 = vunpack.c.h.b16 %v59
    %v544 = vunpack.c.l.b16 %v60
    %v545 = vunpack.c.h.b16 %v60
    %v546 = vunpack.c.l.b16 %v61
    %v547 = vunpack.c.h.b16 %v61
    %v548 = vunpack.c.l.b16 %v62
    %v549 = vunpack.c.h.b16 %v62
    %v550 = vunpack.c.l.b16 %v63
    %v551 = vunpack.c.h.b16 %v63
    %v552 = vunpack.c.l.b16 %v64
    %v553 = vunpack.c.h.b16 %v64
    %v554 = vunpack.c.l.b16 %v65
    %v555 = vunpack.c.h.b16 %v65
    %v556 = vunpack.c.l.b16 %v66
    %v557 = vunpack.c.h.b16 %v66
    %v558 = vunpack.c.l.b16 %v67
    %v559 = vunpack.c.h.b16 %v67
    %v560 = vunpack.c.l.b16 %v68
    %v561 = vunpack.c.h.b16 %v68
    %v562 = vunpack.c.l.b16 %v69
    %v563 = vunpack.c.h.b16 %v69
    %v564 = vunpack.c.l.b16 %v70
    %v565 = vunpack.c.h.b16 %v70
    %v566 = vunpack.c.l.b16 %v71
    %v567 = vunpack.c.h.b16 %v71
    %v568 = vunpack.c.l.b16 %v72
    %v569 = vunpack.c.h.b16 %v72
    %v570 = vunpack.c.l.b16 %v73
    %v571 = vunpack.c.h.b16 %v73
    %v572 = vunpack.c.l.b16 %v74
    %v573 = vunpack.c.h.b16 %v74
    %v574 = vunpack.c.l.b16 %v75
    %v575 = vunpack.c.h.b16 %v75
    %v576 = vunpack.c.l.b16 %v76
    %v577 = vunpack.c.h.b16 %v76
    %v578 = vunpack.c.l.b16 %v77
    %v579 = vunpack.c.h.b16 %v77
    %v580 = vunpack.c.l.b16 %v78
    %v581 = vunpack.c.h.b16 %v78
    %v582 = vunpack.c.l.b16 %v79
    %v583 = vunpack.c.h.b16 %v79
    %v584 = vunpack.c.l.b16 %v80
    %v585 = vunpack.c.h.b16 %v80
    %v586 = vunpack.c.l.b16 %v81
    %v587 = vunpack.c.h.b16 %v81
    %v588 = vunpack.c.l.b16 %v82
    %v589 = vunpack.c.h.b16 %v82
    %v590 = vunpack.c.l.b16 %v83
    %v591 = vunpack.c.h.b16 %v83
    %v592 = vunpack.c.l.b16 %v84
    %v593 = vunpack.c.h.b16 %v84
    %v594 = vunpack.c.l.b16 %v85
    %v595 = vunpack.c.h.b16 %v85
    %v596 = vunpack.c.l.b16 %v86
    %v597 = vunpack.c.h.b16 %v86
    %v598 = vunpack.c.l.b16 %v87
    %v599 = vunpack.c.h.b16 %v87
    %v600 = vunpack.c.l.b16 %v88
    %v601 = vunpack.c.h.b16 %v88
    %v602 = vunpack.c.l.b16 %v89
    %v603 = vunpack.c.h.b16 %v89
    %v604 = vunpack.c.l.b16 %v90
    %v605 = vunpack.c.h.b16 %v90
    %v606 = vunpack.c.l.b16 %v91
    %v607 = vunpack.c.h.b16 %v91
    %v608 = vunpack.c.l.b16 %v92
    %v609 = vunpack.c.h.b16 %v92
    %v610 = vunpack.c.l.b16 %v93
    %v611 = vunpack.c.h.b16 %v93
    %v612 = vunpack.c.l.b16 %v94
    %v613 = vunpack.c.h.b16 %v94
    %v614 = vunpack.c.l.b16 %v95
    %v615 = vunpack.c.h.b16 %v95
    %v616 = vunpack.c.l.b16 %v96
    %v617 = vunpack.c.h.b16 %v96
    %v618 = vunpack.c.l.b16 %v97
    %v619 = vunpack.c.h.b16 %v97
    %v620 = vunpack.c.l.b16 %v98
    %v621 = vunpack.c.h.b16 %v98
    %v622 = vunpack.c.l.b16 %v99
    %v623 = vunpack.c.h.b16 %v99
    %v624 = vunpack.c.l.b16 %v100
    %v625 = vunpack.c.h.b16 %v100
    %v626 = vunpack.c.l.b16 %v101
    %v627 = vunpack.c.h.b16 %v101
    %v628 = vunpack.c.l.b16 %v102
    %v629 = vunpack.c.h.b16 %v102
    %v630 = vunpack.c.l.b16 %v103
    %v631 = vunpack.c.h.b16 %v103
    %v632 = vunpack.c.l.b16 %v104
    %v633 = vunpack.c.h.b16 %v104
    %v634 = vunpack.c.l.b16 %v105
    %v635 = vunpack.c.h.b16 %v105
    %v636 = vunpack.c.l.b16 %v106
    %v637 = vunpack.c.h.b16 %v106
    %v638 = vunpack.c.l.b16 %v107
    %v639 = vunpack.c.h.b16 %v107
    %v640 = vunpack.c.l.b16 %v108
    %v641 = vunpack.c.h.b16 %v108
    %v642 = vunpack.c.l.b16 %v109
    %v643 = vunpack.c.h.b16 %v109
    %v644 = vunpack.c.l.b16 %v110
    %v645 = vunpack.c.h.b16 %v110
    %v646 = vunpack.c.l.b16 %v111
    %v647 = vunpack.c.h.b16 %v111
    %v648 = vunpack.c.l.b16 %v112
    %v649 = vunpack.c.h.b16 %v112
    %v650 = vunpack.c.l.b16 %v113
    %v651 = vunpack.c.h.b16 %v113
    %v652 = vunpack.c.l.b16 %v114
    %v653 = vunpack.c.h.b16 %v114
    %v654 = vunpack.c.l.b16 %v115
    %v655 = vunpack.c.h.b16 %v115
    %v656 = vunpack.c.l.b16 %v116
    %v657 = vunpack.c.h.b16 %v116
    %v658 = vunpack.c.l.b16 %v117
    %v659 = vunpack.c.h.b16 %v117
    %v660 = vunpack.c.l.b16 %v118
    %v661 = vunpack.c.h.b16 %v118
    %v662 = vunpack.c.l.b16 %v119
    %v663 = vunpack.c.h.b16 %v119
    %v664 = vunpack.c.l.b16 %v120
    %v665 = vunpack.c.h.b16 %v120
    %v666 = vunpack.c.l.b16 %v121
    %v667 = vunpack.c.h.b16 %v121
    %v668 = vunpack.c.l.b16 %v122
    %v669 = vunpack.c.h.b16 %v122
    %v670 = vunpack.c.l.b16 %v123
    %v671 = vunpack.c.h.b16 %v123
    %v672 = vunpack.c.l.b16 %v124
    %v673 = vunpack.c.h.b16 %v124
    %v674 = vunpack.c.l.b16 %v125
    %v675 = vunpack.c.h.b16 %v125
    %v676 = vunpack.c.l.b16 %v126
    %v677 = vunpack.c.h.b16 %v126
    %v678 = vunpack.c.l.b16 %v127
    %v679 = vunpack.c.h.b16 %v127
    %v680 = vunpack.c.l.b16 %v128
    %v681 = vunpack.c.h.b16 %v128
    %v682 = vunpack.c.l.b16 %v129
    %v683 = vunpack.c.h.b16 %v129
    %v684 = vunpack.c.l.b16 %v130
    %v685 = vunpack.c.h.b16 %v130
    %v686 = vunpack.c.l.b16 %v131
    %v687 = vunpack.c.h.b16 %v131
    %v688 = vunpack.c.l.b16 %v132
    %v689 = vunpack.c.h.b16 %v132
    %v690 = vunpack.c.l.b16 %v133
    %v691 = vunpack.c.h.b16 %v133
    %v692 = vunpack.c.l.b16 %v134
    %v693 = vunpack.c.h.b16 %v134
    %v694 = vunpack.c.l.b16 %v135
    %v695 = vunpack.c.h.b16 %v135
    %v696 = vunpack.c.l.b16 %v136
    %v697 = vunpack.c.h.b16 %v136
    %v698 = vunpack.c.l.b16 %v137
    %v699 = vunpack.c.h.b16 %v137
    %v700 = vunpack.c.l.b16 %v138
    %v701 = vunpack.c.h.b16 %v138
    %v702 = vunpack.c.l.b16 %v139
    %v703 = vunpack.c.h.b16 %v139
    %v704 = vunpack.c.l.b16 %v140
    %v705 = vunpack.c.h.b16 %v140
    %v706 = vunpack.c.l.b16 %v141
    %v707 = vunpack.c.h.b16 %v141
    %v708 = vunpack.c.l.b16 %v142
    %v709 = vunpack.c.h.b16 %v142
    %v710 = vunpack.c.l.b16 %v143
    %v711 = vunpack.c.h.b16 %v143
    %v712 = vunpack.c.l.b16 %v144
    %v713 = vunpack.c.h.b16 %v144
    %v714 = vunpack.c.l.b16 %v145
    %v715 = vunpack.c.h.b16 %v145
    %v716 = vunpack.c.l.b16 %v146
    %v717 = vunpack.c.h.b16 %v146
    %v718 = vunpack.c.l.b16 %v147
    %v719 = vunpack.c.h.b16 %v147
    %v720 = vunpack.c.l.b16 %v148
    %v721 = vunpack.c.h.b16 %v148
    %v722 = vunpack.c.l.b16 %v149
    %v723 = vunpack.c.h.b16 %v149
    %v724 = vunpack.c.l.b16 %v150
    %v725 = vunpack.c.h.b16 %v150
    %v726 = vunpack.c.l.b16 %v151
    %v727 = vunpack.c.h.b16 %v151
    %v728 = vpack.c.b16 %v542, %v536
    %v729 = vpack.c.b16 %v543, %v537
    %v730 = vpack.c.b16 %v544, %v538
    %v731 = vpack.c.b16 %v545, %v539
    %v732 = vpack.c.b16 %v546, %v540
    %v733 = vpack.c.b16 %v547, %v541
    %v734 = vpack.c.b16 %v554, %v548
    %v735 = vpack.c.b16 %v555, %v549
    %v736 = vpack.c.b16 %v556, %v550
    %v737 = vpack.c.b16 %v557, %v551
    %v738 = vpack.c.b16 %v558, %v552
    %v739 = vpack.c.b16 %v559, %v553
    %v740 = vpack.c.b16 %v566, %v560
    %v741 = vpack.c.b16 %v567, %v561
    %v742 = vpack.c.b16 %v568, %v562
    %v743 = vpack.c.b16 %v569, %v563
    %v744 = vpack.c.b16 %v570, %v564
    %v745 = vpack.c.b16 %v571, %v565
    %v746 = vpack.c.b16 %v578, %v572
    %v747 = vpack.c.b16 %v579, %v573
    %v748 = vpack.c.b16 %v580, %v574
    %v749 = vpack.c.b16 %v581, %v575
    %v750 = vpack.c.b16 %v582, %v576
    %v751 = vpack.c.b16 %v583, %v577
    %v752 = vpack.c.b16 %v590, %v584
    %v753 = vpack.c.b16 %v591, %v585
    %v754 = vpack.c.b16 %v592, %v586
    %v755 = vpack.c.b16 %v593, %v587
    %v756 = vpack.c.b16 %v594, %v588
    %v757 = vpack.c.b16 %v595, %v589
    %v758 = vpack.c.b16 %v602, %v596
    %v759 = vpack.c.b16 %v603, %v597
    %v760 = vpack.c.b16 %v604, %v598
    %v761 = vpack.c.b16 %v605, %v599
    %v762 = vpack.c.b16 %v606, %v600
    %v763 = vpack.c.b16 %v607, %v601
    %v764 = vpack.c.b16 %v614, %v608
    %v765 = vpack.c.b16 %v615, %v609
    %v766 = vpack.c.b16 %v616, %v610
    %v767 = vpack.c.b16 %v617, %v611
    %v768 = vpack.c.b16 %v618, %v612
    %v769 = vpack.c.b16 %v619, %v613
    %v770 = vpack.c.b16 %v626, %v620
    %v771 = vpack.c.b16 %v627, %v621
    %v772 = vpack.c.b16 %v628, %v622
    %v773 = vpack.c.b16 %v629, %v623
    %v774 = vpack.c.b16 %v630, %v624
    %v775 = vpack.c.b16 %v631, %v625
    %v776 = vpack.c.b16 %v638, %v632
    %v777 = vpack.c.b16 %v639, %v633
    %v778 = vpack.c.b16 %v640, %v634
    %v779 = vpack.c.b16 %v641, %v635
    %v780 = vpack.c.b16 %v642, %v636
    %v781 = vpack.c.b16 %v643, %v637
    %v782 = vpack.c.b16 %v650, %v644
    %v783 = vpack.c.b16 %v651, %v645
    %v784 = vpack.c.b16 %v652, %v646
    %v785 = vpack.c.b16 %v653, %v647
    %v786 = vpack.c.b16 %v654, %v648
    %v787 = vpack.c.b16 %v655, %v649
    %v788 = vpack.c.b16 %v662, %v656
    %v789 = vpack.c.b16 %v663, %v657
    %v790 = vpack.c.b16 %v664, %v658
    %v791 = vpack.c.b16 %v665, %v659
    %v792 = vpack.c.b16 %v666, %v660
    %v793 = vpack.c.b16 %v667, %v661
    %v794 = vpack.c.b16 %v674, %v668
    %v795 = vpack.c.b16 %v675, %v669
    %v796 = vpack.c.b16 %v676, %v670
    %v797 = vpack.c.b16 %v677, %v671
    %v798 = vpack.c.b16 %v678, %v672
    %v799 = vpack.c.b16 %v679, %v673
    %v800 = vpack.c.b16 %v686, %v680
    %v801 = vpack.c.b16 %v687, %v681
    %v802 = vpack.c.b16 %v688, %v682
    %v803 = vpack.c.b16 %v689, %v683
    %v804 = vpack.c.b16 %v690, %v684
    %v805 = vpack.c.b16 %v691, %v685
    %v806 = vpack.c.b16 %v698, %v692
    %v807 = vpack.c.b16 %v699, %v693
    %v808 = vpack.c.b16 %v700, %v694
    %v809 = vpack.c.b16 %v701, %v695
    %v810 = vpack.c.b16 %v702, %v696
    %v811 = vpack.c.b16 %v703, %v697
    %v812 = vpack.c.b16 %v710, %v704
    %v813 = vpack.c.b16 %v711, %v705
    %v814 = vpack.c.b16 %v712, %v706
    %v815 = vpack.c.b16 %v713, %v707
    %v816 = vpack.c.b16 %v714, %v708
    %v817 = vpack.c.b16 %v715, %v709
    %v818 = vpack.c.b16 %v722, %v716
    %v819 = vpack.c.b16 %v723, %v717
    %v820 = vpack.c.b16 %v724, %v718
    %v821 = vpack.c.b16 %v725, %v719
    %v822 = vpack.c.b16 %v726, %v720
    %v823 = vpack.c.b16 %v727, %v721
    %v1208 = vunpack.c.l.b16 %v152
    %v1209 = vunpack.c.h.b16 %v152
    %v1210 = vunpack.c.l.b16 %v153
    %v1211 = vunpack.c.h.b16 %v153
    %v1212 = vunpack.c.l.b16 %v154
    %v1213 = vunpack.c.h.b16 %v154
    %v1214 = vunpack.c.l.b16 %v155
    %v1215 = vunpack.c.h.b16 %v155
    %v1216 = vunpack.c.l.b16 %v156
    %v1217 = vunpack.c.h.b16 %v156
    %v1218 = vunpack.c.l.b16 %v157
    %v1219 = vunpack.c.h.b16 %v157
    %v1220 = vunpack.c.l.b16 %v158
    %v1221 = vunpack.c.h.b16 %v158
    %v1222 = vunpack.c.l.b16 %v159
    %v1223 = vunpack.c.h.b16 %v159
    %v1224 = vunpack.c.l.b16 %v160
    %v1225 = vunpack.c.h.b16 %v160
    %v1226 = vunpack.c.l.b16 %v161
    %v1227 = vunpack.c.h.b16 %v161
    %v1228 = vunpack.c.l.b16 %v162
    %v1229 = vunpack.c.h.b16 %v162
    %v1230 = vunpack.c.l.b16 %v163
    %v1231 = vunpack.c.h.b16 %v163
    %v1232 = vunpack.c.l.b16 %v164
    %v1233 = vunpack.c.h.b16 %v164
    %v1234 = vunpack.c.l.b16 %v165
    %v1235 = vunpack.c.h.b16 %v165
    %v1236 = vunpack.c.l.b16 %v166
    %v1237 = vunpack.c.h.b16 %v166
    %v1238 = vunpack.c.l.b16 %v167
    %v1239 = vunpack.c.h.b16 %v167
    %v1240 = vunpack.c.l.b16 %v168
    %v1241 = vunpack.c.h.b16 %v168
    %v1242 = vunpack.c.l.b16 %v169
    %v1243 = vunpack.c.h.b16 %v169
    %v1244 = vunpack.c.l.b16 %v170
    %v1245 = vunpack.c.h.b16 %v170
    %v1246 = vunpack.c.l.b16 %v171
    %v1247 = vunpack.c.h.b16 %v171
    %v1248 = vunpack.c.l.b16 %v172
    %v1249 = vunpack.c.h.b16 %v172
    %v1250 = vunpack.c.l.b16 %v173
    %v1251 = vunpack.c.h.b16 %v173
    %v1252 = vunpack.c.l.b16 %v174
    %v1253 = vunpack.c.h.b16 %v174
    %v1254 = vunpack.c.l.b16 %v175
    %v1255 = vunpack.c.h.b16 %v175
    %v1256 = vunpack.c.l.b16 %v176
    %v1257 = vunpack.c.h.b16 %v176
    %v1258 = vunpack.c.l.b16 %v177
    %v1259 = vunpack.c.h.b16 %v177
    %v1260 = vunpack.c.l.b16 %v178
    %v1261 = vunpack.c.h.b16 %v178
    %v1262 = vunpack.c.l.b16 %v179
    %v1263 = vunpack.c.h.b16 %v179
    %v1264 = vunpack.c.l.b16 %v180
    %v1265 = vunpack.c.h.b16 %v180
    %v1266 = vunpack.c.l.b16 %v181
    %v1267 = vunpack.c.h.b16 %v181
    %v1268 = vunpack.c.l.b16 %v182
    %v1269 = vunpack.c.h.b16 %v182
    %v1270 = vunpack.c.l.b16 %v183
    %v1271 = vunpack.c.h.b16 %v183
    %v1272 = vunpack.c.l.b16 %v184
    %v1273 = vunpack.c.h.b16 %v184
    %v1274 = vunpack.c.l.b16 %v185
    %v1275 = vunpack.c.h.b16 %v185
    %v1276 = vunpack.c.l.b16 %v186
    %v1277 = vunpack.c.h.b16 %v186
    %v1278 = vunpack.c.l.b16 %v187
    %v1279 = vunpack.c.h.b16 %v187
    %v1280 = vunpack.c.l.b16 %v188
    %v1281 = vunpack.c.h.b16 %v188
    %v1282 = vunpack.c.l.b16 %v189
    %v1283 = vunpack.c.h.b16 %v189
    %v1284 = vunpack.c.l.b16 %v190
    %v1285 = vunpack.c.h.b16 %v190
    %v1286 = vunpack.c.l.b16 %v191
    %v1287 = vunpack.c.h.b16 %v191
    %v1288 = vunpack.c.l.b16 %v192
    %v1289 = vunpack.c.h.b16 %v192
    %v1290 = vunpack.c.l.b16 %v193
    %v1291 = vunpack.c.h.b16 %v193
    %v1292 = vunpack.c.l.b16 %v194
    %v1293 = vunpack.c.h.b16 %v194
    %v1294 = vunpack.c.l.b16 %v195
    %v1295 = vunpack.c.h.b16 %v195
    %v1296 = vunpack.c.l.b16 %v196
    %v1297 = vunpack.c.h.b16 %v196
    %v1298 = vunpack.c.l.b16 %v197
    %v1299 = vunpack.c.h.b16 %v197
    %v1300 = vunpack.c.l.b16 %v198
    %v1301 = vunpack.c.h.b16 %v198
    %v1302 = vunpack.c.l.b16 %v199
    %v1303 = vunpack.c.h.b16 %v199
    %v1304 = vunpack.c.l.b16 %v200
    %v1305 = vunpack.c.h.b16 %v200
    %v1306 = vunpack.c.l.b16 %v201
    %v1307 = vunpack.c.h.b16 %v201
    %v1308 = vunpack.c.l.b16 %v202
    %v1309 = vunpack.c.h.b16 %v202
    %v1310 = vunpack.c.l.b16 %v203
    %v1311 = vunpack.c.h.b16 %v203
    %v1312 = vunpack.c.l.b16 %v204
    %v1313 = vunpack.c.h.b16 %v204
    %v1314 = vunpack.c.l.b16 %v205
    %v1315 = vunpack.c.h.b16 %v205
    %v1316 = vunpack.c.l.b16 %v206
    %v1317 = vunpack.c.h.b16 %v206
    %v1318 = vunpack.c.l.b16 %v207
    %v1319 = vunpack.c.h.b16 %v207
    %v1320 = vunpack.c.l.b16 %v208
    %v1321 = vunpack.c.h.b16 %v208
    %v1322 = vunpack.c.l.b16 %v209
    %v1323 = vunpack.c.h.b16 %v209
    %v1324 = vunpack.c.l.b16 %v210
    %v1325 = vunpack.c.h.b16 %v210
    %v1326 = vunpack.c.l.b16 %v211
    %v1327 = vunpack.c.h.b16 %v211
    %v1328 = vunpack.c.l.b16 %v212
    %v1329 = vunpack.c.h.b16 %v212
    %v1330 = vunpack.c.l.b16 %v213
    %v1331 = vunpack.c.h.b16 %v213
    %v1332 = vunpack.c.l.b16 %v214
    %v1333 = vunpack.c.h.b16 %v214
    %v1334 = vunpack.c.l.b16 %v215
    %v1335 = vunpack.c.h.b16 %v215
    %v1336 = vunpack.c.l.b16 %v216
    %v1337 = vunpack.c.h.b16 %v216
    %v1338 = vunpack.c.l.b16 %v217
    %v1339 = vunpack.c.h.b16 %v217
    %v1340 = vunpack.c.l.b16 %v218
    %v1341 = vunpack.c.h.b16 %v218
    %v1342 = vunpack.c.l.b16 %v219
    %v1343 = vunpack.c.h.b16 %v219
    %v1344 = vunpack.c.l.b16 %v220
    %v1345 = vunpack.c.h.b16 %v220
    %v1346 = vunpack.c.l.b16 %v221
    %v1347 = vunpack.c.h.b16 %v221
    %v1348 = vunpack.c.l.b16 %v222
    %v1349 = vunpack.c.h.b16 %v222
    %v1350 = vunpack.c.l.b16 %v223
    %v1351 = vunpack.c.h.b16 %v223
    %v1352 = vunpack.c.l.b16 %v224
    %v1353 = vunpack.c.h.b16 %v224
    %v1354 = vunpack.c.l.b16 %v225
    %v1355 = vunpack.c.h.b16 %v225
    %v1356 = vunpack.c.l.b16 %v226
    %v1357 = vunpack.c.h.b16 %v226
    %v1358 = vunpack.c.l.b16 %v227
    %v1359 = vunpack.c.h.b16 %v227
    %v1360 = vunpack.c.l.b16 %v228
    %v1361 = vunpack.c.h.b16 %v228
    %v1362 = vunpack.c.l.b16 %v229
    %v1363 = vunpack.c.h.b16 %v229
    %v1364 = vunpack.c.l.b16 %v230
    %v1365 = vunpack.c.h.b16 %v230
    %v1366 = vunpack.c.l.b16 %v231
    %v1367 = vunpack.c.h.b16 %v231
    %v1368 = vunpack.c.l.b16 %v232
    %v1369 = vunpack.c.h.b16 %v232
    %v1370 = vunpack.c.l.b16 %v233
    %v1371 = vunpack.c.h.b16 %v233
    %v1372 = vunpack.c.l.b16 %v234
    %v1373 = vunpack.c.h.b16 %v234
    %v1374 = vunpack.c.l.b16 %v235
    %v1375 = vunpack.c.h.b16 %v235
    %v1376 = vunpack.c.l.b16 %v236
    %v1377 = vunpack.c.h.b16 %v236
    %v1378 = vunpack.c.l.b16 %v237
    %v1379 = vunpack.c.h.b16 %v237
    %v1380 = vunpack.c.l.b16 %v238
    %v1381 = vunpack.c.h.b16 %v238
    %v1382 = vunpack.c.l.b16 %v239
    %v1383 = vunpack.c.h.b16 %v239
    %v1384 = vunpack.c.l.b16 %v240
    %v1385 = vunpack.c.h.b16 %v240
    %v1386 = vunpack.c.l.b16 %v241
    %v1387 = vunpack.c.h.b16 %v241
    %v1388 = vunpack.c.l.b16 %v242
    %v1389 = vunpack.c.h.b16 %v242
    %v1390 = vunpack.c.l.b16 %v243
    %v1391 = vunpack.c.h.b16 %v243
    %v1392 = vunpack.c.l.b16 %v244
    %v1393 = vunpack.c.h.b16 %v244
    %v1394 = vunpack.c.l.b16 %v245
    %v1395 = vunpack.c.h.b16 %v245
    %v1396 = vunpack.c.l.b16 %v246
    %v1397 = vunpack.c.h.b16 %v246
    %v1398 = vunpack.c.l.b16 %v247
    %v1399 = vunpack.c.h.b16 %v247
    %v1400 = vunpack.c.l.b16 %v248
    %v1401 = vunpack.c.h.b16 %v248
    %v1402 = vunpack.c.l.b16 %v249
    %v1403 = vunpack.c.h.b16 %v249
    %v1404 = vunpack.c.l.b16 %v250
    %v1405 = vunpack.c.h.b16 %v250
    %v1406 = vunpack.c.l.b16 %v251
    %v1407 = vunpack.c.h.b16 %v251
    %v1408 = vunpack.c.l.b16 %v252
    %v1409 = vunpack.c.h.b16 %v252
    %v1410 = vunpack.c.l.b16 %v253
    %v1411 = vunpack.c.h.b16 %v253
    %v1412 = vunpack.c.l.b16 %v254
    %v1413 = vunpack.c.h.b16 %v254
    %v1414 = vunpack.c.l.b16 %v255
    %v1415 = vunpack.c.h.b16 %v255
    %v1416 = vunpack.c.l.b16 %v256
    %v1417 = vunpack.c.h.b16 %v256
    %v1418 = vunpack.c.l.b16 %v257
    %v1419 = vunpack.c.h.b16 %v257
    %v1420 = vunpack.c.l.b16 %v258
    %v1421 = vunpack.c.h.b16 %v258
    %v1422 = vunpack.c.l.b16 %v259
    %v1423 = vunpack.c.h.b16 %v259
    %v1424 = vunpack.c.l.b16 %v260
    %v1425 = vunpack.c.h.b16 %v260
    %v1426 = vunpack.c.l.b16 %v261
    %v1427 = vunpack.c.h.b16 %v261
    %v1428 = vunpack.c.l.b16 %v262
    %v1429 = vunpack.c.h.b16 %v262
    %v1430 = vunpack.c.l.b16 %v263
    %v1431 = vunpack.c.h.b16 %v263
    %v1432 = vunpack.c.l.b16 %v264
    %v1433 = vunpack.c.h.b16 %v264
    %v1434 = vunpack.c.l.b16 %v265
    %v1435 = vunpack.c.h.b16 %v265
    %v1436 = vunpack.c.l.b16 %v266
    %v1437 = vunpack.c.h.b16 %v266
    %v1438 = vunpack.c.l.b16 %v267
    %v1439 = vunpack.c.h.b16 %v267
    %v1440 = vunpack.c.l.b16 %v268
    %v1441 = vunpack.c.h.b16 %v268
    %v1442 = vunpack.c.l.b16 %v269
    %v1443 = vunpack.c.h.b16 %v269
    %v1444 = vunpack.c.l.b16 %v270
    %v1445 = vunpack.c.h.b16 %v270
    %v1446 = vunpack.c.l.b16 %v271
    %v1447 = vunpack.c.h.b16 %v271
    %v1448 = vunpack.c.l.b16 %v272
    %v1449 = vunpack.c.h.b16 %v272
    %v1450 = vunpack.c.l.b16 %v273
    %v1451 = vunpack.c.h.b16 %v273
    %v1452 = vunpack.c.l.b16 %v274
    %v1453 = vunpack.c.h.b16 %v274
    %v1454 = vunpack.c.l.b16 %v275
    %v1455 = vunpack.c.h.b16 %v275
    %v1456 = vunpack.c.l.b16 %v276
    %v1457 = vunpack.c.h.b16 %v276
    %v1458 = vunpack.c.l.b16 %v277
    %v1459 = vunpack.c.h.b16 %v277
    %v1460 = vunpack.c.l.b16 %v278
    %v1461 = vunpack.c.h.b16 %v278
    %v1462 = vunpack.c.l.b16 %v279
    %v1463 = vunpack.c.h.b16 %v279
    %v1464 = vunpack.c.l.b16 %v280
    %v1465 = vunpack.c.h.b16 %v280
    %v1466 = vunpack.c.l.b16 %v281
    %v1467 = vunpack.c.h.b16 %v281
    %v1468 = vunpack.c.l.b16 %v282
    %v1469 = vunpack.c.h.b16 %v282
    %v1470 = vunpack.c.l.b16 %v283
    %v1471 = vunpack.c.h.b16 %v283
    %v1472 = vunpack.c.l.b16 %v284
    %v1473 = vunpack.c.h.b16 %v284
    %v1474 = vunpack.c.l.b16 %v285
    %v1475 = vunpack.c.h.b16 %v285
    %v1476 = vunpack.c.l.b16 %v286
    %v1477 = vunpack.c.h.b16 %v286
    %v1478 = vunpack.c.l.b16 %v287
    %v1479 = vunpack.c.h.b16 %v287
    %v1480 = vunpack.c.l.b16 %v288
    %v1481 = vunpack.c.h.b16 %v288
    %v1482 = vunpack.c.l.b16 %v289
    %v1483 = vunpack.c.h.b16 %v289
    %v1484 = vunpack.c.l.b16 %v290
    %v1485 = vunpack.c.h.b16 %v290
    %v1486 = vunpack.c.l.b16 %v291
    %v1487 = vunpack.c.h.b16 %v291
    %v1488 = vunpack.c.l.b16 %v292
    %v1489 = vunpack.c.h.b16 %v292
    %v1490 = vunpack.c.l.b16 %v293
    %v1491 = vunpack.c.h.b16 %v293
    %v1492 = vunpack.c.l.b16 %v294
    %v1493 = vunpack.c.h.b16 %v294
    %v1494 = vunpack.c.l.b16 %v295
    %v1495 = vunpack.c.h.b16 %v295
    %v1496 = vunpack.c.l.b16 %v296
    %v1497 = vunpack.c.h.b16 %v296
    %v1498 = vunpack.c.l.b16 %v297
    %v1499 = vunpack.c.h.b16 %v297
    %v1500 = vunpack.c.l.b16 %v298
    %v1501 = vunpack.c.h.b16 %v298
    %v1502 = vunpack.c.l.b16 %v299
    %v1503 = vunpack.c.h.b16 %v299
    %v1504 = vunpack.c.l.b16 %v300
    %v1505 = vunpack.c.h.b16 %v300
    %v1506 = vunpack.c.l.b16 %v301
    %v1507 = vunpack.c.h.b16 %v301
    %v1508 = vunpack.c.l.b16 %v302
    %v1509 = vunpack.c.h.b16 %v302
    %v1510 = vunpack.c.l.b16 %v303
    %v1511 = vunpack.c.h.b16 %v303
    %v1512 = vunpack.c.l.b16 %v304
    %v1513 = vunpack.c.h.b16 %v304
    %v1514 = vunpack.c.l.b16 %v305
    %v1515 = vunpack.c.h.b16 %v305
    %v1516 = vunpack.c.l.b16 %v306
    %v1517 = vunpack.c.h.b16 %v306
    %v1518 = vunpack.c.l.b16 %v307
    %v1519 = vunpack.c.h.b16 %v307
    %v1520 = vunpack.c.l.b16 %v308
    %v1521 = vunpack.c.h.b16 %v308
    %v1522 = vunpack.c.l.b16 %v309
    %v1523 = vunpack.c.h.b16 %v309
    %v1524 = vunpack.c.l.b16 %v310
    %v1525 = vunpack.c.h.b16 %v310
    %v1526 = vunpack.c.l.b16 %v311
    %v1527 = vunpack.c.h.b16 %v311
    %v1528 = vunpack.c.l.b16 %v312
    %v1529 = vunpack.c.h.b16 %v312
    %v1530 = vunpack.c.l.b16 %v313
    %v1531 = vunpack.c.h.b16 %v313
    %v1532 = vunpack.c.l.b16 %v314
    %v1533 = vunpack.c.h.b16 %v314
    %v1534 = vunpack.c.l.b16 %v315
    %v1535 = vunpack.c.h.b16 %v315
    %v1536 = vunpack.c.l.b16 %v316
    %v1537 = vunpack.c.h.b16 %v316
    %v1538 = vunpack.c.l.b16 %v317
    %v1539 = vunpack.c.h.b16 %v317
    %v1540 = vunpack.c.l.b16 %v318
    %v1541 = vunpack.c.h.b16 %v318
    %v1542 = vunpack.c.l.b16 %v319
    %v1543 = vunpack.c.h.b16 %v319
    %v1544 = vunpack.c.l.b16 %v320
    %v1545 = vunpack.c.h.b16 %v320
    %v1546 = vunpack.c.l.b16 %v321
    %v1547 = vunpack.c.h.b16 %v321
    %v1548 = vunpack.c.l.b16 %v322
    %v1549 = vunpack.c.h.b16 %v322
    %v1550 = vunpack.c.l.b16 %v323
    %v1551 = vunpack.c.h.b16 %v323
    %v1552 = vunpack.c.l.b16 %v324
    %v1553 = vunpack.c.h.b16 %v324
    %v1554 = vunpack.c.l.b16 %v325
    %v1555 = vunpack.c.h.b16 %v325
    %v1556 = vunpack.c.l.b16 %v326
    %v1557 = vunpack.c.h.b16 %v326
    %v1558 = vunpack.c.l.b16 %v327
    %v1559 = vunpack.c.h.b16 %v327
    %v1560 = vunpack.c.l.b16 %v328
    %v1561 = vunpack.c.h.b16 %v328
    %v1562 = vunpack.c.l.b16 %v329
    %v1563 = vunpack.c.h.b16 %v329
    %v1564 = vunpack.c.l.b16 %v330
    %v1565 = vunpack.c.h.b16 %v330
    %v1566 = vunpack.c.l.b16 %v331
    %v1567 = vunpack.c.h.b16 %v331
    %v1568 = vunpack.c.l.b16 %v332
    %v1569 = vunpack.c.h.b16 %v332
    %v1570 = vunpack.c.l.b16 %v333
    %v1571 = vunpack.c.h.b16 %v333
    %v1572 = vunpack.c.l.b16 %v334
    %v1573 = vunpack.c.h.b16 %v334
    %v1574 = vunpack.c.l.b16 %v335
    %v1575 = vunpack.c.h.b16 %v335
    %v1576 = vunpack.c.l.b16 %v336
    %v1577 = vunpack.c.h.b16 %v336
    %v1578 = vunpack.c.l.b16 %v337
    %v1579 = vunpack.c.h.b16 %v337
    %v1580 = vunpack.c.l.b16 %v338
    %v1581 = vunpack.c.h.b16 %v338
    %v1582 = vunpack.c.l.b16 %v339
    %v1583 = vunpack.c.h.b16 %v339
    %v1584 = vunpack.c.l.b16 %v340
    %v1585 = vunpack.c.h.b16 %v340
    %v1586 = vunpack.c.l.b16 %v341
    %v1587 = vunpack.c.h.b16 %v341
    %v1588 = vunpack.c.l.b16 %v342
    %v1589 = vunpack.c.h.b16 %v342
    %v1590 = vunpack.c.l.b16 %v343
    %v1591 = vunpack.c.h.b16 %v343
    %v1592 = vunpack.c.l.b16 %v344
    %v1593 = vunpack.c.h.b16 %v344
    %v1594 = vunpack.c.l.b16 %v345
    %v1595 = vunpack.c.h.b16 %v345
    %v1596 = vunpack.c.l.b16 %v346
    %v1597 = vunpack.c.h.b16 %v346
    %v1598 = vunpack.c.l.b16 %v347
    %v1599 = vunpack.c.h.b16 %v347
    %v1600 = vunpack.c.l.b16 %v348
    %v1601 = vunpack.c.h.b16 %v348
    %v1602 = vunpack.c.l.b16 %v349
    %v1603 = vunpack.c.h.b16 %v349
    %v1604 = vunpack.c.l.b16 %v350
    %v1605 = vunpack.c.h.b16 %v350
    %v1606 = vunpack.c.l.b16 %v351
    %v1607 = vunpack.c.h.b16 %v351
    %v1608 = vunpack.c.l.b16 %v352
    %v1609 = vunpack.c.h.b16 %v352
    %v1610 = vunpack.c.l.b16 %v353
    %v1611 = vunpack.c.h.b16 %v353
    %v1612 = vunpack.c.l.b16 %v354
    %v1613 = vunpack.c.h.b16 %v354
    %v1614 = vunpack.c.l.b16 %v355
    %v1615 = vunpack.c.h.b16 %v355
    %v1616 = vunpack.c.l.b16 %v356
    %v1617 = vunpack.c.h.b16 %v356
    %v1618 = vunpack.c.l.b16 %v357
    %v1619 = vunpack.c.h.b16 %v357
    %v1620 = vunpack.c.l.b16 %v358
    %v1621 = vunpack.c.h.b16 %v358
    %v1622 = vunpack.c.l.b16 %v359
    %v1623 = vunpack.c.h.b16 %v359
    %v1624 = vunpack.c.l.b16 %v360
    %v1625 = vunpack.c.h.b16 %v360
    %v1626 = vunpack.c.l.b16 %v361
    %v1627 = vunpack.c.h.b16 %v361
    %v1628 = vunpack.c.l.b16 %v362
    %v1629 = vunpack.c.h.b16 %v362
    %v1630 = vunpack.c.l.b16 %v363
    %v1631 = vunpack.c.h.b16 %v363
    %v1632 = vunpack.c.l.b16 %v364
    %v1633 = vunpack.c.h.b16 %v364
    %v1634 = vunpack.c.l.b16 %v365
    %v1635 = vunpack.c.h.b16 %v365
    %v1636 = vunpack.c.l.b16 %v366
    %v1637 = vunpack.c.h.b16 %v366
    %v1638 = vunpack.c.l.b16 %v367
    %v1639 = vunpack.c.h.b16 %v367
    %v1640 = vunpack.c.l.b16 %v368
    %v1641 = vunpack.c.h.b16 %v368
    %v1642 = vunpack.c.l.b16 %v369
    %v1643 = vunpack.c.h.b16 %v369
    %v1644 = vunpack.c.l.b16 %v370
    %v1645 = vunpack.c.h.b16 %v370
    %v1646 = vunpack.c.l.b16 %v371
    %v1647 = vunpack.c.h.b16 %v371
    %v1648 = vunpack.c.l.b16 %v372
    %v1649 = vunpack.c.h.b16 %v372
    %v1650 = vunpack.c.l.b16 %v373
    %v1651 = vunpack.c.h.b16 %v373
    %v1652 = vunpack.c.l.b16 %v374
    %v1653 = vunpack.c.h.b16 %v374
    %v1654 = vunpack.c.l.b16 %v375
    %v1655 = vunpack.c.h.b16 %v375
    %v1656 = vunpack.c.l.b16 %v376
    %v1657 = vunpack.c.h.b16 %v376
    %v1658 = vunpack.c.l.b16 %v377
    %v1659 = vunpack.c.h.b16 %v377
    %v1660 = vunpack.c.l.b16 %v378
    %v1661 = vunpack.c.h.b16 %v378
    %v1662 = vunpack.c.l.b16 %v379
    %v1663 = vunpack.c.h.b16 %v379
    %v1664 = vunpack.c.l.b16 %v380
    %v1665 = vunpack.c.h.b16 %v380
    %v1666 = vunpack.c.l.b16 %v381
    %v1667 = vunpack.c.h.b16 %v381
    %v1668 = vunpack.c.l.b16 %v382
    %v1669 = vunpack.c.h.b16 %v382
    %v1670 = vunpack.c.l.b16 %v383
    %v1671 = vunpack.c.h.b16 %v383
    %v1672 = vunpack.c.l.b16 %v384
    %v1673 = vunpack.c.h.b16 %v384
    %v1674 = vunpack.c.l.b16 %v385
    %v1675 = vunpack.c.h.b16 %v385
    %v1676 = vunpack.c.l.b16 %v386
    %v1677 = vunpack.c.h.b16 %v386
    %v1678 = vunpack.c.l.b16 %v387
    %v1679 = vunpack.c.h.b16 %v387
    %v1680 = vunpack.c.l.b16 %v388
    %v1681 = vunpack.c.h.b16 %v388
    %v1682 = vunpack.c.l.b16 %v389
    %v1683 = vunpack.c.h.b16 %v389
    %v1684 = vunpack.c.l.b16 %v390
    %v1685 = vunpack.c.h.b16 %v390
    %v1686 = vunpack.c.l.b16 %v391
    %v1687 = vunpack.c.h.b16 %v391
    %v1688 = vunpack.c.l.b16 %v392
    %v1689 = vunpack.c.h.b16 %v392
    %v1690 = vunpack.c.l.b16 %v393
    %v1691 = vunpack.c.h.b16 %v393
    %v1692 = vunpack.c.l.b16 %v394
    %v1693 = vunpack.c.h.b16 %v394
    %v1694 = vunpack.c.l.b16 %v395
    %v1695 = vunpack.c.h.b16 %v395
    %v1696 = vunpack.c.l.b16 %v396
    %v1697 = vunpack.c.h.b16 %v396
    %v1698 = vunpack.c.l.b16 %v397
    %v1699 = vunpack.c.h.b16 %v397
    %v1700 = vunpack.c.l.b16 %v398
    %v1701 = vunpack.c.h.b16 %v398
    %v1702 = vunpack.c.l.b16 %v399
    %v1703 = vunpack.c.h.b16 %v399
    %v1704 = vunpack.c.l.b16 %v400
    %v1705 = vunpack.c.h.b16 %v400
    %v1706 = vunpack.c.l.b16 %v401
    %v1707 = vunpack.c.h.b16 %v401
    %v1708 = vunpack.c.l.b16 %v402
    %v1709 = vunpack.c.h.b16 %v402
    %v1710 = vunpack.c.l.b16 %v403
    %v1711 = vunpack.c.h.b16 %v403
    %v1712 = vunpack.c.l.b16 %v404
    %v1713 = vunpack.c.h.b16 %v404
    %v1714 = vunpack.c.l.b16 %v405
    %v1715 = vunpack.c.h.b16 %v405
    %v1716 = vunpack.c.l.b16 %v406
    %v1717 = vunpack.c.h.b16 %v406
    %v1718 = vunpack.c.l.b16 %v407
    %v1719 = vunpack.c.h.b16 %v407
    %v1720 = vunpack.c.l.b16 %v408
    %v1721 = vunpack.c.h.b16 %v408
    %v1722 = vunpack.c.l.b16 %v409
    %v1723 = vunpack.c.h.b16 %v409
    %v1724 = vunpack.c.l.b16 %v410
    %v1725 = vunpack.c.h.b16 %v410
    %v1726 = vunpack.c.l.b16 %v411
    %v1727 = vunpack.c.h.b16 %v411
    %v1728 = vunpack.c.l.b16 %v412
    %v1729 = vunpack.c.h.b16 %v412
    %v1730 = vunpack.c.l.b16 %v413
    %v1731 = vunpack.c.h.b16 %v413
    %v1732 = vunpack.c.l.b16 %v414
    %v1733 = vunpack.c.h.b16 %v414
    %v1734 = vunpack.c.l.b16 %v415
    %v1735 = vunpack.c.h.b16 %v415
    %v1736 = vunpack.c.l.b16 %v416
    %v1737 = vunpack.c.h.b16 %v416
    %v1738 = vunpack.c.l.b16 %v417
    %v1739 = vunpack.c.h.b16 %v417
    %v1740 = vunpack.c.l.b16 %v418
    %v1741 = vunpack.c.h.b16 %v418
    %v1742 = vunpack.c.l.b16 %v419
    %v1743 = vunpack.c.h.b16 %v419
    %v1744 = vunpack.c.l.b16 %v420
    %v1745 = vunpack.c.h.b16 %v420
    %v1746 = vunpack.c.l.b16 %v421
    %v1747 = vunpack.c.h.b16 %v421
    %v1748 = vunpack.c.l.b16 %v422
    %v1749 = vunpack.c.h.b16 %v422
    %v1750 = vunpack.c.l.b16 %v423
    %v1751 = vunpack.c.h.b16 %v423
    %v1752 = vunpack.c.l.b16 %v424
    %v1753 = vunpack.c.h.b16 %v424
    %v1754 = vunpack.c.l.b16 %v425
    %v1755 = vunpack.c.h.b16 %v425
    %v1756 = vunpack.c.l.b16 %v426
    %v1757 = vunpack.c.h.b16 %v426
    %v1758 = vunpack.c.l.b16 %v427
    %v1759 = vunpack.c.h.b16 %v427
    %v1760 = vunpack.c.l.b16 %v428
    %v1761 = vunpack.c.h.b16 %v428
    %v1762 = vunpack.c.l.b16 %v429
    %v1763 = vunpack.c.h.b16 %v429
    %v1764 = vunpack.c.l.b16 %v430
    %v1765 = vunpack.c.h.b16 %v430
    %v1766 = vunpack.c.l.b16 %v431
    %v1767 = vunpack.c.h.b16 %v431
    %v1768 = vunpack.c.l.b16 %v432
    %v1769 = vunpack.c.h.b16 %v432
    %v1770 = vunpack.c.l.b16 %v433
    %v1771 = vunpack.c.h.b16 %v433
    %v1772 = vunpack.c.l.b16 %v434
    %v1773 = vunpack.c.h.b16 %v434
    %v1774 = vunpack.c.l.b16 %v435
    %v1775 = vunpack.c.h.b16 %v435
    %v1776 = vunpack.c.l.b16 %v436
    %v1777 = vunpack.c.h.b16 %v436
    %v1778 = vunpack.c.l.b16 %v437
    %v1779 = vunpack.c.h.b16 %v437
    %v1780 = vunpack.c.l.b16 %v438
    %v1781 = vunpack.c.h.b16 %v438
    %v1782 = vunpack.c.l.b16 %v439
    %v1783 = vunpack.c.h.b16 %v439
    %v1784 = vpack.c.b16 %v1214, %v1208
    %v1785 = vpack.c.b16 %v1215, %v1209
    %v1786 = vpack.c.b16 %v1216, %v1210
    %v1787 = vpack.c.b16 %v1217, %v1211
    %v1788 = vpack.c.b16 %v1218, %v1212
    %v1789 = vpack.c.b16 %v1219, %v1213
    %v1790 = vpack.c.b16 %v1226, %v1220
    %v1791 = vpack.c.b16 %v1227, %v1221
    %v1792 = vpack.c.b16 %v1228, %v1222
    %v1793 = vpack.c.b16 %v1229, %v1223
    %v1794 = vpack.c.b16 %v1230, %v1224
    %v1795 = vpack.c.b16 %v1231, %v1225
    %v1796 = vpack.c.b16 %v1238, %v1232
    %v1797 = vpack.c.b16 %v1239, %v1233
    %v1798 = vpack.c.b16 %v1240, %v1234
    %v1799 = vpack.c.b16 %v1241, %v1235
    %v1800 = vpack.c.b16 %v1242, %v1236
    %v1801 = vpack.c.b16 %v1243, %v1237
    %v1802 = vpack.c.b16 %v1250, %v1244
    %v1803 = vpack.c.b16 %v1251, %v1245
    %v1804 = vpack.c.b16 %v1252, %v1246
    %v1805 = vpack.c.b16 %v1253, %v1247
    %v1806 = vpack.c.b16 %v1254, %v1248
    %v1807 = vpack.c.b16 %v1255, %v1249
    %v1808 = vpack.c.b16 %v1262, %v1256
    %v1809 = vpack.c.b16 %v1263, %v1257
    %v1810 = vpack.c.b16 %v1264, %v1258
    %v1811 = vpack.c.b16 %v1265, %v1259
    %v1812 = vpack.c.b16 %v1266, %v1260
    %v1813 = vpack.c.b16 %v1267, %v1261
    %v1814 = vpack.c.b16 %v1274, %v1268
    %v1815 = vpack.c.b16 %v1275, %v1269
    %v1816 = vpack.c.b16 %v1276, %v1270
    %v1817 = vpack.c.b16 %v1277, %v1271
    %v1818 = vpack.c.b16 %v1278, %v1272
    %v1819 = vpack.c.b16 %v1279, %v1273
    %v1820 = vpack.c.b16 %v1286, %v1280
    %v1821 = vpack.c.b16 %v1287, %v1281
    %v1822 = vpack.c.b16 %v1288, %v1282
    %v1823 = vpack.c.b16 %v1289, %v1283
    %v1824 = vpack.c.b16 %v1290, %v1284
    %v1825 = vpack.c.b16 %v1291, %v1285
    %v1826 = vpack.c.b16 %v1298, %v1292
    %v1827 = vpack.c.b16 %v1299, %v1293
    %v1828 = vpack.c.b16 %v1300, %v1294
    %v1829 = vpack.c.b16 %v1301, %v1295
    %v1830 = vpack.c.b16 %v1302, %v1296
    %v1831 = vpack.c.b16 %v1303, %v1297
    %v1832 = vpack.c.b16 %v1310, %v1304
    %v1833 = vpack.c.b16 %v1311, %v1305
    %v1834 = vpack.c.b16 %v1312, %v1306
    %v1835 = vpack.c.b16 %v1313, %v1307
    %v1836 = vpack.c.b16 %v1314, %v1308
    %v1837 = vpack.c.b16 %v1315, %v1309
    %v1838 = vpack.c.b16 %v1322, %v1316
    %v1839 = vpack.c.b16 %v1323, %v1317
    %v1840 = vpack.c.b16 %v1324, %v1318
    %v1841 = vpack.c.b16 %v1325, %v1319
    %v1842 = vpack.c.b16 %v1326, %v1320
    %v1843 = vpack.c.b16 %v1327, %v1321
    %v1844 = vpack.c.b16 %v1334, %v1328
    %v1845 = vpack.c.b16 %v1335, %v1329
    %v1846 = vpack.c.b16 %v1336, %v1330
    %v1847 = vpack.c.b16 %v1337, %v1331
    %v1848 = vpack.c.b16 %v1338, %v1332
    %v1849 = vpack.c.b16 %v1339, %v1333
    %v1850 = vpack.c.b16 %v1346, %v1340
    %v1851 = vpack.c.b16 %v1347, %v1341
    %v1852 = vpack.c.b16 %v1348, %v1342
    %v1853 = vpack.c.b16 %v1349, %v1343
    %v1854 = vpack.c.b16 %v1350, %v1344
    %v1855 = vpack.c.b16 %v1351, %v1345
    %v1856 = vpack.c.b16 %v1358, %v1352
    %v1857 = vpack.c.b16 %v1359, %v1353
    %v1858 = vpack.c.b16 %v1360, %v1354
    %v1859 = vpack.c.b16 %v1361, %v1355
    %v1860 = vpack.c.b16 %v1362, %v1356
    %v1861 = vpack.c.b16 %v1363, %v1357
    %v1862 = vpack.c.b16 %v1370, %v1364
    %v1863 = vpack.c.b16 %v1371, %v1365
    %v1864 = vpack.c.b16 %v1372, %v1366
    %v1865 = vpack.c.b16 %v1373, %v1367
    %v1866 = vpack.c.b16 %v1374, %v1368
    %v1867 = vpack.c.b16 %v1375, %v1369
    %v1868 = vpack.c.b16 %v1382, %v1376
    %v1869 = vpack.c.b16 %v1383, %v1377
    %v1870 = vpack.c.b16 %v1384, %v1378
    %v1871 = vpack.c.b16 %v1385, %v1379
    %v1872 = vpack.c.b16 %v1386, %v1380
    %v1873 = vpack.c.b16 %v1387, %v1381
    %v1874 = vpack.c.b16 %v1394, %v1388
    %v1875 = vpack.c.b16 %v1395, %v1389
    %v1876 = vpack.c.b16 %v1396, %v1390
    %v1877 = vpack.c.b16 %v1397, %v1391
    %v1878 = vpack.c.b16 %v1398, %v1392
    %v1879 = vpack.c.b16 %v1399, %v1393
    %v1880 = vpack.c.b16 %v1406, %v1400
    %v1881 = vpack.c.b16 %v1407, %v1401
    %v1882 = vpack.c.b16 %v1408, %v1402
    %v1883 = vpack.c.b16 %v1409, %v1403
    %v1884 = vpack.c.b16 %v1410, %v1404
    %v1885 = vpack.c.b16 %v1411, %v1405
    %v1886 = vpack.c.b16 %v1418, %v1412
    %v1887 = vpack.c.b16 %v1419, %v1413
    %v1888 = vpack.c.b16 %v1420, %v1414
    %v1889 = vpack.c.b16 %v1421, %v1415
    %v1890 = vpack.c.b16 %v1422, %v1416
    %v1891 = vpack.c.b16 %v1423, %v1417
    %v1892 = vpack.c.b16 %v1430, %v1424
    %v1893 = vpack.c.b16 %v1431, %v1425
    %v1894 = vpack.c.b16 %v1432, %v1426
    %v1895 = vpack.c.b16 %v1433, %v1427
    %v1896 = vpack.c.b16 %v1434, %v1428
    %v1897 = vpack.c.b16 %v1435, %v1429
    %v1898 = vpack.c.b16 %v1442, %v1436
    %v1899 = vpack.c.b16 %v1443, %v1437
    %v1900 = vpack.c.b16 %v1444, %v1438
    %v1901 = vpack.c.b16 %v1445, %v1439
    %v1902 = vpack.c.b16 %v1446, %v1440
    %v1903 = vpack.c.b16 %v1447, %v1441
    %v1904 = vpack.c.b16 %v1454, %v1448
    %v1905 = vpack.c.b16 %v1455, %v1449
    %v1906 = vpack.c.b16 %v1456, %v1450
    %v1907 = vpack.c.b16 %v1457, %v1451
    %v1908 = vpack.c.b16 %v1458, %v1452
    %v1909 = vpack.c.b16 %v1459, %v1453
    %v1910 = vpack.c.b16 %v1466, %v1460
    %v1911 = vpack.c.b16 %v1467, %v1461
    %v1912 = vpack.c.b16 %v1468, %v1462
    %v1913 = vpack.c.b16 %v1469, %v1463
    %v1914 = vpack.c.b16 %v1470, %v1464
    %v1915 = vpack.c.b16 %v1471, %v1465
    %v1916 = vpack.c.b16 %v1478, %v1472
    %v1917 = vpack.c.b16 %v1479, %v1473
    %v1918 = vpack.c.b16 %v1480, %v1474
    %v1919 = vpack.c.b16 %v1481, %v1475
    %v1920 = vpack.c.b16 %v1482, %v1476
    %v1921 = vpack.c.b16 %v1483, %v1477
    %v1922 = vpack.c.b16 %v1490, %v1484
    %v1923 = vpack.c.b16 %v1491, %v1485
    %v1924 = vpack.c.b16 %v1492, %v1486
    %v1925 = vpack.c.b16 %v1493, %v1487
    %v1926 = vpack.c.b16 %v1494, %v1488
    %v1927 = vpack.c.b16 %v1495, %v1489
    %v1928 = vpack.c.b16 %v1502, %v1496
    %v1929 = vpack.c.b16 %v1503, %v1497
    %v1930 = vpack.c.b16 %v1504, %v1498
    %v1931 = vpack.c.b16 %v1505, %v1499
    %v1932 = vpack.c.b16 %v1506, %v1500
    %v1933 = vpack.c.b16 %v1507, %v1501
    %v1934 = vpack.c.b16 %v1514, %v1508
    %v1935 = vpack.c.b16 %v1515, %v1509
    %v1936 = vpack.c.b16 %v1516, %v1510
    %v1937 = vpack.c.b16 %v1517, %v1511
    %v1938 = vpack.c.b16 %v1518, %v1512
    %v1939 = vpack.c.b16 %v1519, %v1513
    %v1940 = vpack.c.b16 %v1526, %v1520
    %v1941 = vpack.c.b16 %v1527, %v1521
    %v1942 = vpack.c.b16 %v1528, %v1522
    %v1943 = vpack.c.b16 %v1529, %v1523
    %v1944 = vpack.c.b16 %v1530, %v1524
    %v1945 = vpack.c.b16 %v1531, %v1525
    %v1946 = vpack.c.b16 %v1538, %v1532
    %v1947 = vpack.c.b16 %v1539, %v1533
    %v1948 = vpack.c.b16 %v1540, %v1534
    %v1949 = vpack.c.b16 %v1541, %v1535
    %v1950 = vpack.c.b16 %v1542, %v1536
    %v1951 = vpack.c.b16 %v1543, %v1537
    %v1952 = vpack.c.b16 %v1550, %v1544
    %v1953 = vpack.c.b16 %v1551, %v1545
    %v1954 = vpack.c.b16 %v1552, %v1546
    %v1955 = vpack.c.b16 %v1553, %v1547
    %v1956 = vpack.c.b16 %v1554, %v1548
    %v1957 = vpack.c.b16 %v1555, %v1549
    %v1958 = vpack.c.b16 %v1562, %v1556
    %v1959 = vpack.c.b16 %v1563, %v1557
    %v1960 = vpack.c.b16 %v1564, %v1558
    %v1961 = vpack.c.b16 %v1565, %v1559
    %v1962 = vpack.c.b16 %v1566, %v1560
    %v1963 = vpack.c.b16 %v1567, %v1561
    %v1964 = vpack.c.b16 %v1574, %v1568
    %v1965 = vpack.c.b16 %v1575, %v1569
    %v1966 = vpack.c.b16 %v1576, %v1570
    %v1967 = vpack.c.b16 %v1577, %v1571
    %v1968 = vpack.c.b16 %v1578, %v1572
    %v1969 = vpack.c.b16 %v1579, %v1573
    %v1970 = vpack.c.b16 %v1586, %v1580
    %v1971 = vpack.c.b16 %v1587, %v1581
    %v1972 = vpack.c.b16 %v1588, %v1582
    %v1973 = vpack.c.b16 %v1589, %v1583
    %v1974 = vpack.c.b16 %v1590, %v1584
    %v1975 = vpack.c.b16 %v1591, %v1585
    %v1976 = vpack.c.b16 %v1598, %v1592
    %v1977 = vpack.c.b16 %v1599, %v1593
    %v1978 = vpack.c.b16 %v1600, %v1594
    %v1979 = vpack.c.b16 %v1601, %v1595
    %v1980 = vpack.c.b16 %v1602, %v1596
    %v1981 = vpack.c.b16 %v1603, %v1597
    %v1982 = vpack.c.b16 %v1610, %v1604
    %v1983 = vpack.c.b16 %v1611, %v1605
    %v1984 = vpack.c.b16 %v1612, %v1606
    %v1985 = vpack.c.b16 %v1613, %v1607
    %v1986 = vpack.c.b16 %v1614, %v1608
    %v1987 = vpack.c.b16 %v1615, %v1609
    %v1988 = vpack.c.b16 %v1622, %v1616
    %v1989 = vpack.c.b16 %v1623, %v1617
    %v1990 = vpack.c.b16 %v1624, %v1618
    %v1991 = vpack.c.b16 %v1625, %v1619
    %v1992 = vpack.c.b16 %v1626, %v1620
    %v1993 = vpack.c.b16 %v1627, %v1621
    %v1994 = vpack.c.b16 %v1634, %v1628
    %v1995 = vpack.c.b16 %v1635, %v1629
    %v1996 = vpack.c.b16 %v1636, %v1630
    %v1997 = vpack.c.b16 %v1637, %v1631
    %v1998 = vpack.c.b16 %v1638, %v1632
    %v1999 = vpack.c.b16 %v1639, %v1633
    %v2000 = vpack.c.b16 %v1646, %v1640
    %v2001 = vpack.c.b16 %v1647, %v1641
    %v2002 = vpack.c.b16 %v1648, %v1642
    %v2003 = vpack.c.b16 %v1649, %v1643
    %v2004 = vpack.c.b16 %v1650, %v1644
    %v2005 = vpack.c.b16 %v1651, %v1645
    %v2006 = vpack.c.b16 %v1658, %v1652
    %v2007 = vpack.c.b16 %v1659, %v1653
    %v2008 = vpack.c.b16 %v1660, %v1654
    %v2009 = vpack.c.b16 %v1661, %v1655
    %v2010 = vpack.c.b16 %v1662, %v1656
    %v2011 = vpack.c.b16 %v1663, %v1657
    %v2012 = vpack.c.b16 %v1670, %v1664
    %v2013 = vpack.c.b16 %v1671, %v1665
    %v2014 = vpack.c.b16 %v1672, %v1666
    %v2015 = vpack.c.b16 %v1673, %v1667
    %v2016 = vpack.c.b16 %v1674, %v1668
    %v2017 = vpack.c.b16 %v1675, %v1669
    %v2018 = vpack.c.b16 %v1682, %v1676
    %v2019 = vpack.c.b16 %v1683, %v1677
    %v2020 = vpack.c.b16 %v1684, %v1678
    %v2021 = vpack.c.b16 %v1685, %v1679
    %v2022 = vpack.c.b16 %v1686, %v1680
    %v2023 = vpack.c.b16 %v1687, %v1681
    %v2024 = vpack.c.b16 %v1694, %v1688
    %v2025 = vpack.c.b16 %v1695, %v1689
    %v2026 = vpack.c.b16 %v1696, %v1690
    %v2027 = vpack.c.b16 %v1697, %v1691
    %v2028 = vpack.c.b16 %v1698, %v1692
    %v2029 = vpack.c.b16 %v1699, %v1693
    %v2030 = vpack.c.b16 %v1706, %v1700
    %v2031 = vpack.c.b16 %v1707, %v1701
    %v2032 = vpack.c.b16 %v1708, %v1702
    %v2033 = vpack.c.b16 %v1709, %v1703
    %v2034 = vpack.c.b16 %v1710, %v1704
    %v2035 = vpack.c.b16 %v1711, %v1705
    %v2036 = vpack.c.b16 %v1718, %v1712
    %v2037 = vpack.c.b16 %v1719, %v1713
    %v2038 = vpack.c.b16 %v1720, %v1714
    %v2039 = vpack.c.b16 %v1721, %v1715
    %v2040 = vpack.c.b16 %v1722, %v1716
    %v2041 = vpack.c.b16 %v1723, %v1717
    %v2042 = vpack.c.b16 %v1730, %v1724
    %v2043 = vpack.c.b16 %v1731, %v1725
    %v2044 = vpack.c.b16 %v1732, %v1726
    %v2045 = vpack.c.b16 %v1733, %v1727
    %v2046 = vpack.c.b16 %v1734, %v1728
    %v2047 = vpack.c.b16 %v1735, %v1729
    %v2048 = vpack.c.b16 %v1742, %v1736
    %v2049 = vpack.c.b16 %v1743, %v1737
    %v2050 = vpack.c.b16 %v1744, %v1738
    %v2051 = vpack.c.b16 %v1745, %v1739
    %v2052 = vpack.c.b16 %v1746, %v1740
    %v2053 = vpack.c.b16 %v1747, %v1741
    %v2054 = vpack.c.b16 %v1754, %v1748
    %v2055 = vpack.c.b16 %v1755, %v1749
    %v2056 = vpack.c.b16 %v1756, %v1750
    %v2057 = vpack.c.b16 %v1757, %v1751
    %v2058 = vpack.c.b16 %v1758, %v1752
    %v2059 = vpack.c.b16 %v1759, %v1753
    %v2060 = vpack.c.b16 %v1766, %v1760
    %v2061 = vpack.c.b16 %v1767, %v1761
    %v2062 = vpack.c.b16 %v1768, %v1762
    %v2063 = vpack.c.b16 %v1769, %v1763
    %v2064 = vpack.c.b16 %v1770, %v1764
    %v2065 = vpack.c.b16 %v1771, %v1765
    %v2066 = vpack.c.b16 %v1778, %v1772
    %v2067 = vpack.c.b16 %v1779, %v1773
    %v2068 = vpack.c.b16 %v1780, %v1774
    %v2069 = vpack.c.b16 %v1781, %v1775
    %v2070 = vpack.c.b16 %v1782, %v1776
    %v2071 = vpack.c.b16 %v1783, %v1777
    %2360 = vmatprep.subr.bf16.mxu0 %v1785
    %2361 = vmatpush1.bf16.msra.mxu0 %v1784
    %2362 = vmatprep.subr.bf16.mxu0 %v1791
    %2363 = vmatpush1.bf16.msra.mxu0 %v1790
    %2364 = vmatprep.subr.bf16.mxu0 %v1797
    %2365 = vmatpush1.bf16.msra.mxu0 %v1796
    %2366 = vmatprep.subr.bf16.mxu0 %v1803
    %2367 = vmatpush1.bf16.msra.mxu0 %v1802
    %2368 = vmatprep.subr.bf16.mxu0 %v1809
    %2369 = vmatpush1.bf16.msra.mxu0 %v1808
    %2370 = vmatprep.subr.bf16.mxu0 %v1815
    %2371 = vmatpush1.bf16.msra.mxu0 %v1814
    %2372 = vmatprep.subr.bf16.mxu0 %v1821
    %2373 = vmatpush1.bf16.msra.mxu0 %v1820
    %2374 = vmatprep.subr.bf16.mxu0 %v1827
    %2375 = vmatpush1.bf16.msra.mxu0 %v1826
    %2376 = vmatprep.subr.bf16.mxu0 %v1833
    %2377 = vmatpush1.bf16.msra.mxu0 %v1832
    %2378 = vmatprep.subr.bf16.mxu0 %v1839
    %2379 = vmatpush1.bf16.msra.mxu0 %v1838
    %2380 = vmatprep.subr.bf16.mxu0 %v1845
    %2381 = vmatpush1.bf16.msra.mxu0 %v1844
    %2382 = vmatprep.subr.bf16.mxu0 %v1851
    %2383 = vmatpush1.bf16.msra.mxu0 %v1850
    %2384 = vmatprep.subr.bf16.mxu0 %v1857
    %2385 = vmatpush1.bf16.msra.mxu0 %v1856
    %2386 = vmatprep.subr.bf16.mxu0 %v1863
    %2387 = vmatpush1.bf16.msra.mxu0 %v1862
    %2388 = vmatprep.subr.bf16.mxu0 %v1869
    %2389 = vmatpush1.bf16.msra.mxu0 %v1868
    %2390 = vmatprep.subr.bf16.mxu0 %v1875
    %2391 = vmatpush1.bf16.msra.mxu0 %v1874
    %2392 = vmatprep.mubr.bf16.mxu0 %v729
    %2393 = vmatmul.mubr.bf16.gmra.mrb[0].mxu0 %v728
    %v2394 = vpop.f32.mrb[0].mxu0
    %v2395 = vadd.f32 0.0, %v2394
    %v2396 = vpop.f32.mrb[0].mxu0
    %v2397 = vadd.f32 0.0, %v2396
    %v2398 = vpop.f32.mrb[0].mxu0
    %v2399 = vadd.f32 0.0, %v2398
    %v2400 = vpop.f32.mrb[0].mxu0
    %v2401 = vadd.f32 0.0, %v2400
    %2402 = vmatprep.mubr.bf16.mxu0 %v735
    %2403 = vmatmul.mubr.bf16.gmra.mrb[0].mxu0 %v734
    %v2404 = vpop.f32.mrb[0].mxu0
    %v2405 = vadd.f32 0.0, %v2404
    %v2406 = vpop.f32.mrb[0].mxu0
    %v2407 = vadd.f32 0.0, %v2406
    %v2408 = vpop.f32.mrb[0].mxu0
    %v2409 = vadd.f32 0.0, %v2408
    %v2410 = vpop.f32.mrb[0].mxu0
    %v2411 = vadd.f32 0.0, %v2410
    %2412 = vmatprep.mubr.bf16.mxu0 %v741
    %2413 = vmatmul.mubr.bf16.gmra.mrb[0].mxu0 %v740
    %v2414 = vpop.f32.mrb[0].mxu0
    %v2415 = vadd.f32 0.0, %v2414
    %v2416 = vpop.f32.mrb[0].mxu0
    %v2417 = vadd.f32 0.0, %v2416
    %v2418 = vpop.f32.mrb[0].mxu0
    %v2419 = vadd.f32 0.0, %v2418
    %v2420 = vpop.f32.mrb[0].mxu0
    %v2421 = vadd.f32 0.0, %v2420
    %2422 = vmatprep.mubr.bf16.mxu0 %v747
    %2423 = vmatmul.mubr.bf16.gmra.mrb[0].mxu0 %v746
    %v2424 = vpop.f32.mrb[0].mxu0
    %v2425 = vadd.f32 0.0, %v2424
    %v2426 = vpop.f32.mrb[0].mxu0
    %v2427 = vadd.f32 0.0, %v2426
    %v2428 = vpop.f32.mrb[0].mxu0
    %v2429 = vadd.f32 0.0, %v2428
    %v2430 = vpop.f32.mrb[0].mxu0
    %v2431 = vadd.f32 0.0, %v2430
    %2432 = vmatprep.mubr.bf16.mxu0 %v753
    %2433 = vmatmul.mubr.bf16.gmra.mrb[0].mxu0 %v752
    %v2434 = vpop.f32.mrb[0].mxu0
    %v2435 = vadd.f32 0.0, %v2434
    %v2436 = vpop.f32.mrb[0].mxu0
    %v2437 = vadd.f32 0.0, %v2436
    %v2438 = vpop.f32.mrb[0].mxu0
    %v2439 = vadd.f32 0.0, %v2438
    %v2440 = vpop.f32.mrb[0].mxu0
    %v2441 = vadd.f32 0.0, %v2440
    %2442 = vmatprep.mubr.bf16.mxu0 %v759
    %2443 = vmatmul.mubr.bf16.gmra.mrb[0].mxu0 %v758
    %v2444 = vpop.f32.mrb[0].mxu0
    %v2445 = vadd.f32 0.0, %v2444
    %v2446 = vpop.f32.mrb[0].mxu0
    %v2447 = vadd.f32 0.0, %v2446
    %v2448 = vpop.f32.mrb[0].mxu0
    %v2449 = vadd.f32 0.0, %v2448
    %v2450 = vpop.f32.mrb[0].mxu0
    %v2451 = vadd.f32 0.0, %v2450
    %2452 = vmatprep.mubr.bf16.mxu0 %v765
    %2453 = vmatmul.mubr.bf16.gmra.mrb[0].mxu0 %v764
    %v2454 = vpop.f32.mrb[0].mxu0
    %v2455 = vadd.f32 0.0, %v2454
    %v2456 = vpop.f32.mrb[0].mxu0
    %v2457 = vadd.f32 0.0, %v2456
    %v2458 = vpop.f32.mrb[0].mxu0
    %v2459 = vadd.f32 0.0, %v2458
    %v2460 = vpop.f32.mrb[0].mxu0
    %v2461 = vadd.f32 0.0, %v2460
    %2462 = vmatprep.mubr.bf16.mxu0 %v771
    %2463 = vmatmul.mubr.bf16.gmra.mrb[0].mxu0 %v770
    %v2464 = vpop.f32.mrb[0].mxu0
    %v2465 = vadd.f32 0.0, %v2464
    %v2466 = vpop.f32.mrb[0].mxu0
    %v2467 = vadd.f32 0.0, %v2466
    %v2468 = vpop.f32.mrb[0].mxu0
    %v2469 = vadd.f32 0.0, %v2468
    %v2470 = vpop.f32.mrb[0].mxu0
    %v2471 = vadd.f32 0.0, %v2470
    %2472 = vmatprep.mubr.bf16.mxu0 %v777
    %2473 = vmatmul.mubr.bf16.gmra.mrb[0].mxu0 %v776
    %v2474 = vpop.f32.mrb[0].mxu0
    %v2475 = vadd.f32 0.0, %v2474
    %v2476 = vpop.f32.mrb[0].mxu0
    %v2477 = vadd.f32 0.0, %v2476
    %v2478 = vpop.f32.mrb[0].mxu0
    %v2479 = vadd.f32 0.0, %v2478
    %v2480 = vpop.f32.mrb[0].mxu0
    %v2481 = vadd.f32 0.0, %v2480
    %2482 = vmatprep.mubr.bf16.mxu0 %v783
    %2483 = vmatmul.mubr.bf16.gmra.mrb[0].mxu0 %v782
    %v2484 = vpop.f32.mrb[0].mxu0
    %v2485 = vadd.f32 0.0, %v2484
    %v2486 = vpop.f32.mrb[0].mxu0
    %v2487 = vadd.f32 0.0, %v2486
    %v2488 = vpop.f32.mrb[0].mxu0
    %v2489 = vadd.f32 0.0, %v2488
    %v2490 = vpop.f32.mrb[0].mxu0
    %v2491 = vadd.f32 0.0, %v2490
    %2492 = vmatprep.mubr.bf16.mxu0 %v789
    %2493 = vmatmul.mubr.bf16.gmra.mrb[0].mxu0 %v788
    %v2494 = vpop.f32.mrb[0].mxu0
    %v2495 = vadd.f32 0.0, %v2494
    %v2496 = vpop.f32.mrb[0].mxu0
    %v2497 = vadd.f32 0.0, %v2496
    %v2498 = vpop.f32.mrb[0].mxu0
    %v2499 = vadd.f32 0.0, %v2498
    %v2500 = vpop.f32.mrb[0].mxu0
    %v2501 = vadd.f32 0.0, %v2500
    %2502 = vmatprep.mubr.bf16.mxu0 %v795
    %2503 = vmatmul.mubr.bf16.gmra.mrb[0].mxu0 %v794
    %v2504 = vpop.f32.mrb[0].mxu0
    %v2505 = vadd.f32 0.0, %v2504
    %v2506 = vpop.f32.mrb[0].mxu0
    %v2507 = vadd.f32 0.0, %v2506
    %v2508 = vpop.f32.mrb[0].mxu0
    %v2509 = vadd.f32 0.0, %v2508
    %v2510 = vpop.f32.mrb[0].mxu0
    %v2511 = vadd.f32 0.0, %v2510
    %2512 = vmatprep.mubr.bf16.mxu0 %v801
    %2513 = vmatmul.mubr.bf16.gmra.mrb[0].mxu0 %v800
    %v2514 = vpop.f32.mrb[0].mxu0
    %v2515 = vadd.f32 0.0, %v2514
    %v2516 = vpop.f32.mrb[0].mxu0
    %v2517 = vadd.f32 0.0, %v2516
    %v2518 = vpop.f32.mrb[0].mxu0
    %v2519 = vadd.f32 0.0, %v2518
    %v2520 = vpop.f32.mrb[0].mxu0
    %v2521 = vadd.f32 0.0, %v2520
    %2522 = vmatprep.mubr.bf16.mxu0 %v807
    %2523 = vmatmul.mubr.bf16.gmra.mrb[0].mxu0 %v806
    %v2524 = vpop.f32.mrb[0].mxu0
    %v2525 = vadd.f32 0.0, %v2524
    %v2526 = vpop.f32.mrb[0].mxu0
    %v2527 = vadd.f32 0.0, %v2526
    %v2528 = vpop.f32.mrb[0].mxu0
    %v2529 = vadd.f32 0.0, %v2528
    %v2530 = vpop.f32.mrb[0].mxu0
    %v2531 = vadd.f32 0.0, %v2530
    %2532 = vmatprep.mubr.bf16.mxu0 %v813
    %2533 = vmatmul.mubr.bf16.gmra.mrb[0].mxu0 %v812
    %v2534 = vpop.f32.mrb[0].mxu0
    %v2535 = vadd.f32 0.0, %v2534
    %v2536 = vpop.f32.mrb[0].mxu0
    %v2537 = vadd.f32 0.0, %v2536
    %v2538 = vpop.f32.mrb[0].mxu0
    %v2539 = vadd.f32 0.0, %v2538
    %v2540 = vpop.f32.mrb[0].mxu0
    %v2541 = vadd.f32 0.0, %v2540
    %2542 = vmatprep.mubr.bf16.mxu0 %v819
    %2543 = vmatmul.mubr.bf16.gmra.mrb[0].mxu0 %v818
    %v2544 = vpop.f32.mrb[0].mxu0
    %v2545 = vadd.f32 0.0, %v2544
    %v2546 = vpop.f32.mrb[0].mxu0
    %v2547 = vadd.f32 0.0, %v2546
    %v2548 = vpop.f32.mrb[0].mxu0
    %v2549 = vadd.f32 0.0, %v2548
    %v2550 = vpop.f32.mrb[0].mxu0
    %v2551 = vadd.f32 0.0, %v2550
    %2552 = vdwg.mxu0
    %2553 = vmatprep.subr.bf16.mxu0 %v1881
    %2554 = vmatpush1.bf16.msra.mxu0 %v1880
    %2555 = vmatprep.subr.bf16.mxu0 %v1887
    %2556 = vmatpush1.bf16.msra.mxu0 %v1886
    %2557 = vmatprep.subr.bf16.mxu0 %v1893
    %2558 = vmatpush1.bf16.msra.mxu0 %v1892
    %2559 = vmatprep.subr.bf16.mxu0 %v1899
    %2560 = vmatpush1.bf16.msra.mxu0 %v1898
    %2561 = vmatprep.subr.bf16.mxu0 %v1905
    %2562 = vmatpush1.bf16.msra.mxu0 %v1904
    %2563 = vmatprep.subr.bf16.mxu0 %v1911
    %2564 = vmatpush1.bf16.msra.mxu0 %v1910
    %2565 = vmatprep.subr.bf16.mxu0 %v1917
    %2566 = vmatpush1.bf16.msra.mxu0 %v1916
    %2567 = vmatprep.subr.bf16.mxu0 %v1923
    %2568 = vmatpush1.bf16.msra.mxu0 %v1922
    %2569 = vmatprep.subr.bf16.mxu0 %v1929
    %2570 = vmatpush1.bf16.msra.mxu0 %v1928
    %2571 = vmatprep.subr.bf16.mxu0 %v1935
    %2572 = vmatpush1.bf16.msra.mxu0 %v1934
    %2573 = vmatprep.subr.bf16.mxu0 %v1941
    %2574 = vmatpush1.bf16.msra.mxu0 %v1940
    %2575 = vmatprep.subr.bf16.mxu0 %v1947
    %2576 = vmatpush1.bf16.msra.mxu0 %v1946
    %2577 = vmatprep.subr.bf16.mxu0 %v1953
    %2578 = vmatpush1.bf16.msra.mxu0 %v1952
    %2579 = vmatprep.subr.bf16.mxu0 %v1959
    %2580 = vmatpush1.bf16.msra.mxu0 %v1958
    %2581 = vmatprep.subr.bf16.mxu0 %v1965
    %2582 = vmatpush1.bf16.msra.mxu0 %v1964
    %2583 = vmatprep.subr.bf16.mxu0 %v1971
    %2584 = vmatpush1.bf16.msra.mxu0 %v1970
    %2585 = vmatprep.mubr.bf16.mxu0 %v731
    %2586 = vmatmul.mubr.bf16.gmra.mrb[0].mxu0 %v730
    %v2587 = vpop.f32.mrb[0].mxu0
    %v2588 = vadd.f32 %v2395, %v2587
    %v2589 = vpop.f32.mrb[0].mxu0
    %v2590 = vadd.f32 %v2397, %v2589
    %v2591 = vpop.f32.mrb[0].mxu0
    %v2592 = vadd.f32 %v2399, %v2591
    %v2593 = vpop.f32.mrb[0].mxu0
    %v2594 = vadd.f32 %v2401, %v2593
    %2595 = vmatprep.mubr.bf16.mxu0 %v737
    %2596 = vmatmul.mubr.bf16.gmra.mrb[0].mxu0 %v736
    %v2597 = vpop.f32.mrb[0].mxu0
    %v2598 = vadd.f32 %v2405, %v2597
    %v2599 = vpop.f32.mrb[0].mxu0
    %v2600 = vadd.f32 %v2407, %v2599
    %v2601 = vpop.f32.mrb[0].mxu0
    %v2602 = vadd.f32 %v2409, %v2601
    %v2603 = vpop.f32.mrb[0].mxu0
    %v2604 = vadd.f32 %v2411, %v2603
    %2605 = vmatprep.mubr.bf16.mxu0 %v743
    %2606 = vmatmul.mubr.bf16.gmra.mrb[0].mxu0 %v742
    %v2607 = vpop.f32.mrb[0].mxu0
    %v2608 = vadd.f32 %v2415, %v2607
    %v2609 = vpop.f32.mrb[0].mxu0
    %v2610 = vadd.f32 %v2417, %v2609
    %v2611 = vpop.f32.mrb[0].mxu0
    %v2612 = vadd.f32 %v2419, %v2611
    %v2613 = vpop.f32.mrb[0].mxu0
    %v2614 = vadd.f32 %v2421, %v2613
    %2615 = vmatprep.mubr.bf16.mxu0 %v749
    %2616 = vmatmul.mubr.bf16.gmra.mrb[0].mxu0 %v748
    %v2617 = vpop.f32.mrb[0].mxu0
    %v2618 = vadd.f32 %v2425, %v2617
    %v2619 = vpop.f32.mrb[0].mxu0
    %v2620 = vadd.f32 %v2427, %v2619
    %v2621 = vpop.f32.mrb[0].mxu0
    %v2622 = vadd.f32 %v2429, %v2621
    %v2623 = vpop.f32.mrb[0].mxu0
    %v2624 = vadd.f32 %v2431, %v2623
    %2625 = vmatprep.mubr.bf16.mxu0 %v755
    %2626 = vmatmul.mubr.bf16.gmra.mrb[0].mxu0 %v754
    %v2627 = vpop.f32.mrb[0].mxu0
    %v2628 = vadd.f32 %v2435, %v2627
    %v2629 = vpop.f32.mrb[0].mxu0
    %v2630 = vadd.f32 %v2437, %v2629
    %v2631 = vpop.f32.mrb[0].mxu0
    %v2632 = vadd.f32 %v2439, %v2631
    %v2633 = vpop.f32.mrb[0].mxu0
    %v2634 = vadd.f32 %v2441, %v2633
    %2635 = vmatprep.mubr.bf16.mxu0 %v761
    %2636 = vmatmul.mubr.bf16.gmra.mrb[0].mxu0 %v760
    %v2637 = vpop.f32.mrb[0].mxu0
    %v2638 = vadd.f32 %v2445, %v2637
    %v2639 = vpop.f32.mrb[0].mxu0
    %v2640 = vadd.f32 %v2447, %v2639
    %v2641 = vpop.f32.mrb[0].mxu0
    %v2642 = vadd.f32 %v2449, %v2641
    %v2643 = vpop.f32.mrb[0].mxu0
    %v2644 = vadd.f32 %v2451, %v2643
    %2645 = vmatprep.mubr.bf16.mxu0 %v767
    %2646 = vmatmul.mubr.bf16.gmra.mrb[0].mxu0 %v766
    %v2647 = vpop.f32.mrb[0].mxu0
    %v2648 = vadd.f32 %v2455, %v2647
    %v2649 = vpop.f32.mrb[0].mxu0
    %v2650 = vadd.f32 %v2457, %v2649
    %v2651 = vpop.f32.mrb[0].mxu0
    %v2652 = vadd.f32 %v2459, %v2651
    %v2653 = vpop.f32.mrb[0].mxu0
    %v2654 = vadd.f32 %v2461, %v2653
    %2655 = vmatprep.mubr.bf16.mxu0 %v773
    %2656 = vmatmul.mubr.bf16.gmra.mrb[0].mxu0 %v772
    %v2657 = vpop.f32.mrb[0].mxu0
    %v2658 = vadd.f32 %v2465, %v2657
    %v2659 = vpop.f32.mrb[0].mxu0
    %v2660 = vadd.f32 %v2467, %v2659
    %v2661 = vpop.f32.mrb[0].mxu0
    %v2662 = vadd.f32 %v2469, %v2661
    %v2663 = vpop.f32.mrb[0].mxu0
    %v2664 = vadd.f32 %v2471, %v2663
    %2665 = vmatprep.mubr.bf16.mxu0 %v779
    %2666 = vmatmul.mubr.bf16.gmra.mrb[0].mxu0 %v778
    %v2667 = vpop.f32.mrb[0].mxu0
    %v2668 = vadd.f32 %v2475, %v2667
    %v2669 = vpop.f32.mrb[0].mxu0
    %v2670 = vadd.f32 %v2477, %v2669
    %v2671 = vpop.f32.mrb[0].mxu0
    %v2672 = vadd.f32 %v2479, %v2671
    %v2673 = vpop.f32.mrb[0].mxu0
    %v2674 = vadd.f32 %v2481, %v2673
    %2675 = vmatprep.mubr.bf16.mxu0 %v785
    %2676 = vmatmul.mubr.bf16.gmra.mrb[0].mxu0 %v784
    %v2677 = vpop.f32.mrb[0].mxu0
    %v2678 = vadd.f32 %v2485, %v2677
    %v2679 = vpop.f32.mrb[0].mxu0
    %v2680 = vadd.f32 %v2487, %v2679
    %v2681 = vpop.f32.mrb[0].mxu0
    %v2682 = vadd.f32 %v2489, %v2681
    %v2683 = vpop.f32.mrb[0].mxu0
    %v2684 = vadd.f32 %v2491, %v2683
    %2685 = vmatprep.mubr.bf16.mxu0 %v791
    %2686 = vmatmul.mubr.bf16.gmra.mrb[0].mxu0 %v790
    %v2687 = vpop.f32.mrb[0].mxu0
    %v2688 = vadd.f32 %v2495, %v2687
    %v2689 = vpop.f32.mrb[0].mxu0
    %v2690 = vadd.f32 %v2497, %v2689
    %v2691 = vpop.f32.mrb[0].mxu0
    %v2692 = vadd.f32 %v2499, %v2691
    %v2693 = vpop.f32.mrb[0].mxu0
    %v2694 = vadd.f32 %v2501, %v2693
    %2695 = vmatprep.mubr.bf16.mxu0 %v797
    %2696 = vmatmul.mubr.bf16.gmra.mrb[0].mxu0 %v796
    %v2697 = vpop.f32.mrb[0].mxu0
    %v2698 = vadd.f32 %v2505, %v2697
    %v2699 = vpop.f32.mrb[0].mxu0
    %v2700 = vadd.f32 %v2507, %v2699
    %v2701 = vpop.f32.mrb[0].mxu0
    %v2702 = vadd.f32 %v2509, %v2701
    %v2703 = vpop.f32.mrb[0].mxu0
    %v2704 = vadd.f32 %v2511, %v2703
    %2705 = vmatprep.mubr.bf16.mxu0 %v803
    %2706 = vmatmul.mubr.bf16.gmra.mrb[0].mxu0 %v802
    %v2707 = vpop.f32.mrb[0].mxu0
    %v2708 = vadd.f32 %v2515, %v2707
    %v2709 = vpop.f32.mrb[0].mxu0
    %v2710 = vadd.f32 %v2517, %v2709
    %v2711 = vpop.f32.mrb[0].mxu0
    %v2712 = vadd.f32 %v2519, %v2711
    %v2713 = vpop.f32.mrb[0].mxu0
    %v2714 = vadd.f32 %v2521, %v2713
    %2715 = vmatprep.mubr.bf16.mxu0 %v809
    %2716 = vmatmul.mubr.bf16.gmra.mrb[0].mxu0 %v808
    %v2717 = vpop.f32.mrb[0].mxu0
    %v2718 = vadd.f32 %v2525, %v2717
    %v2719 = vpop.f32.mrb[0].mxu0
    %v2720 = vadd.f32 %v2527, %v2719
    %v2721 = vpop.f32.mrb[0].mxu0
    %v2722 = vadd.f32 %v2529, %v2721
    %v2723 = vpop.f32.mrb[0].mxu0
    %v2724 = vadd.f32 %v2531, %v2723
    %2725 = vmatprep.mubr.bf16.mxu0 %v815
    %2726 = vmatmul.mubr.bf16.gmra.mrb[0].mxu0 %v814
    %v2727 = vpop.f32.mrb[0].mxu0
    %v2728 = vadd.f32 %v2535, %v2727
    %v2729 = vpop.f32.mrb[0].mxu0
    %v2730 = vadd.f32 %v2537, %v2729
    %v2731 = vpop.f32.mrb[0].mxu0
    %v2732 = vadd.f32 %v2539, %v2731
    %v2733 = vpop.f32.mrb[0].mxu0
    %v2734 = vadd.f32 %v2541, %v2733
    %2735 = vmatprep.mubr.bf16.mxu0 %v821
    %2736 = vmatmul.mubr.bf16.gmra.mrb[0].mxu0 %v820
    %v2737 = vpop.f32.mrb[0].mxu0
    %v2738 = vadd.f32 %v2545, %v2737
    %v2739 = vpop.f32.mrb[0].mxu0
    %v2740 = vadd.f32 %v2547, %v2739
    %v2741 = vpop.f32.mrb[0].mxu0
    %v2742 = vadd.f32 %v2549, %v2741
    %v2743 = vpop.f32.mrb[0].mxu0
    %v2744 = vadd.f32 %v2551, %v2743
    %2745 = vdwg.mxu0
    %2746 = vmatprep.subr.bf16.mxu0 %v1977
    %2747 = vmatpush1.bf16.msra.mxu0 %v1976
    %2748 = vmatprep.subr.bf16.mxu0 %v1983
    %2749 = vmatpush1.bf16.msra.mxu0 %v1982
    %2750 = vmatprep.subr.bf16.mxu0 %v1989
    %2751 = vmatpush1.bf16.msra.mxu0 %v1988
    %2752 = vmatprep.subr.bf16.mxu0 %v1995
    %2753 = vmatpush1.bf16.msra.mxu0 %v1994
    %2754 = vmatprep.subr.bf16.mxu0 %v2001
    %2755 = vmatpush1.bf16.msra.mxu0 %v2000
    %2756 = vmatprep.subr.bf16.mxu0 %v2007
    %2757 = vmatpush1.bf16.msra.mxu0 %v2006
    %2758 = vmatprep.subr.bf16.mxu0 %v2013
    %2759 = vmatpush1.bf16.msra.mxu0 %v2012
    %2760 = vmatprep.subr.bf16.mxu0 %v2019
    %2761 = vmatpush1.bf16.msra.mxu0 %v2018
    %2762 = vmatprep.subr.bf16.mxu0 %v2025
    %2763 = vmatpush1.bf16.msra.mxu0 %v2024
    %2764 = vmatprep.subr.bf16.mxu0 %v2031
    %2765 = vmatpush1.bf16.msra.mxu0 %v2030
    %2766 = vmatprep.subr.bf16.mxu0 %v2037
    %2767 = vmatpush1.bf16.msra.mxu0 %v2036
    %2768 = vmatprep.subr.bf16.mxu0 %v2043
    %2769 = vmatpush1.bf16.msra.mxu0 %v2042
    %2770 = vmatprep.subr.bf16.mxu0 %v2049
    %2771 = vmatpush1.bf16.msra.mxu0 %v2048
    %2772 = vmatprep.subr.bf16.mxu0 %v2055
    %2773 = vmatpush1.bf16.msra.mxu0 %v2054
    %2774 = vmatprep.subr.bf16.mxu0 %v2061
    %2775 = vmatpush1.bf16.msra.mxu0 %v2060
    %2776 = vmatprep.subr.bf16.mxu0 %v2067
    %2777 = vmatpush1.bf16.msra.mxu0 %v2066
    %2778 = vmatprep.mubr.bf16.mxu0 %v733
    %2779 = vmatmul.mubr.bf16.gmra.mrb[0].mxu0 %v732
    %v2780 = vpop.f32.mrb[0].mxu0
    %v2781 = vadd.f32 %v2588, %v2780
    %v2782 = vpop.f32.mrb[0].mxu0
    %v2783 = vadd.f32 %v2590, %v2782
    %v2784 = vpop.f32.mrb[0].mxu0
    %v2785 = vadd.f32 %v2592, %v2784
    %v2786 = vpop.f32.mrb[0].mxu0
    %v2787 = vadd.f32 %v2594, %v2786
    %2788 = vmatprep.mubr.bf16.mxu0 %v739
    %2789 = vmatmul.mubr.bf16.gmra.mrb[0].mxu0 %v738
    %v2790 = vpop.f32.mrb[0].mxu0
    %v2791 = vadd.f32 %v2598, %v2790
    %v2792 = vpop.f32.mrb[0].mxu0
    %v2793 = vadd.f32 %v2600, %v2792
    %v2794 = vpop.f32.mrb[0].mxu0
    %v2795 = vadd.f32 %v2602, %v2794
    %v2796 = vpop.f32.mrb[0].mxu0
    %v2797 = vadd.f32 %v2604, %v2796
    %2798 = vmatprep.mubr.bf16.mxu0 %v745
    %2799 = vmatmul.mubr.bf16.gmra.mrb[0].mxu0 %v744
    %v2800 = vpop.f32.mrb[0].mxu0
    %v2801 = vadd.f32 %v2608, %v2800
    %v2802 = vpop.f32.mrb[0].mxu0
    %v2803 = vadd.f32 %v2610, %v2802
    %v2804 = vpop.f32.mrb[0].mxu0
    %v2805 = vadd.f32 %v2612, %v2804
    %v2806 = vpop.f32.mrb[0].mxu0
    %v2807 = vadd.f32 %v2614, %v2806
    %2808 = vmatprep.mubr.bf16.mxu0 %v751
    %2809 = vmatmul.mubr.bf16.gmra.mrb[0].mxu0 %v750
    %v2810 = vpop.f32.mrb[0].mxu0
    %v2811 = vadd.f32 %v2618, %v2810
    %v2812 = vpop.f32.mrb[0].mxu0
    %v2813 = vadd.f32 %v2620, %v2812
    %v2814 = vpop.f32.mrb[0].mxu0
    %v2815 = vadd.f32 %v2622, %v2814
    %v2816 = vpop.f32.mrb[0].mxu0
    %v2817 = vadd.f32 %v2624, %v2816
    %2818 = vmatprep.mubr.bf16.mxu0 %v757
    %2819 = vmatmul.mubr.bf16.gmra.mrb[0].mxu0 %v756
    %v2820 = vpop.f32.mrb[0].mxu0
    %v2821 = vadd.f32 %v2628, %v2820
    %v2822 = vpop.f32.mrb[0].mxu0
    %v2823 = vadd.f32 %v2630, %v2822
    %v2824 = vpop.f32.mrb[0].mxu0
    %v2825 = vadd.f32 %v2632, %v2824
    %v2826 = vpop.f32.mrb[0].mxu0
    %v2827 = vadd.f32 %v2634, %v2826
    %2828 = vmatprep.mubr.bf16.mxu0 %v763
    %2829 = vmatmul.mubr.bf16.gmra.mrb[0].mxu0 %v762
    %v2830 = vpop.f32.mrb[0].mxu0
    %v2831 = vadd.f32 %v2638, %v2830
    %v2832 = vpop.f32.mrb[0].mxu0
    %v2833 = vadd.f32 %v2640, %v2832
    %v2834 = vpop.f32.mrb[0].mxu0
    %v2835 = vadd.f32 %v2642, %v2834
    %v2836 = vpop.f32.mrb[0].mxu0
    %v2837 = vadd.f32 %v2644, %v2836
    %2838 = vmatprep.mubr.bf16.mxu0 %v769
    %2839 = vmatmul.mubr.bf16.gmra.mrb[0].mxu0 %v768
    %v2840 = vpop.f32.mrb[0].mxu0
    %v2841 = vadd.f32 %v2648, %v2840
    %v2842 = vpop.f32.mrb[0].mxu0
    %v2843 = vadd.f32 %v2650, %v2842
    %v2844 = vpop.f32.mrb[0].mxu0
    %v2845 = vadd.f32 %v2652, %v2844
    %v2846 = vpop.f32.mrb[0].mxu0
    %v2847 = vadd.f32 %v2654, %v2846
    %2848 = vmatprep.mubr.bf16.mxu0 %v775
    %2849 = vmatmul.mubr.bf16.gmra.mrb[0].mxu0 %v774
    %v2850 = vpop.f32.mrb[0].mxu0
    %v2851 = vadd.f32 %v2658, %v2850
    %v2852 = vpop.f32.mrb[0].mxu0
    %v2853 = vadd.f32 %v2660, %v2852
    %v2854 = vpop.f32.mrb[0].mxu0
    %v2855 = vadd.f32 %v2662, %v2854
    %v2856 = vpop.f32.mrb[0].mxu0
    %v2857 = vadd.f32 %v2664, %v2856
    %2858 = vmatprep.mubr.bf16.mxu0 %v781
    %2859 = vmatmul.mubr.bf16.gmra.mrb[0].mxu0 %v780
    %v2860 = vpop.f32.mrb[0].mxu0
    %v2861 = vadd.f32 %v2668, %v2860
    %v2862 = vpop.f32.mrb[0].mxu0
    %v2863 = vadd.f32 %v2670, %v2862
    %v2864 = vpop.f32.mrb[0].mxu0
    %v2865 = vadd.f32 %v2672, %v2864
    %v2866 = vpop.f32.mrb[0].mxu0
    %v2867 = vadd.f32 %v2674, %v2866
    %2868 = vmatprep.mubr.bf16.mxu0 %v787
    %2869 = vmatmul.mubr.bf16.gmra.mrb[0].mxu0 %v786
    %v2870 = vpop.f32.mrb[0].mxu0
    %v2871 = vadd.f32 %v2678, %v2870
    %v2872 = vpop.f32.mrb[0].mxu0
    %v2873 = vadd.f32 %v2680, %v2872
    %v2874 = vpop.f32.mrb[0].mxu0
    %v2875 = vadd.f32 %v2682, %v2874
    %v2876 = vpop.f32.mrb[0].mxu0
    %v2877 = vadd.f32 %v2684, %v2876
    %2878 = vmatprep.mubr.bf16.mxu0 %v793
    %2879 = vmatmul.mubr.bf16.gmra.mrb[0].mxu0 %v792
    %v2880 = vpop.f32.mrb[0].mxu0
    %v2881 = vadd.f32 %v2688, %v2880
    %v2882 = vpop.f32.mrb[0].mxu0
    %v2883 = vadd.f32 %v2690, %v2882
    %v2884 = vpop.f32.mrb[0].mxu0
    %v2885 = vadd.f32 %v2692, %v2884
    %v2886 = vpop.f32.mrb[0].mxu0
    %v2887 = vadd.f32 %v2694, %v2886
    %2888 = vmatprep.mubr.bf16.mxu0 %v799
    %2889 = vmatmul.mubr.bf16.gmra.mrb[0].mxu0 %v798
    %v2890 = vpop.f32.mrb[0].mxu0
    %v2891 = vadd.f32 %v2698, %v2890
    %v2892 = vpop.f32.mrb[0].mxu0
    %v2893 = vadd.f32 %v2700, %v2892
    %v2894 = vpop.f32.mrb[0].mxu0
    %v2895 = vadd.f32 %v2702, %v2894
    %v2896 = vpop.f32.mrb[0].mxu0
    %v2897 = vadd.f32 %v2704, %v2896
    %2898 = vmatprep.mubr.bf16.mxu0 %v805
    %2899 = vmatmul.mubr.bf16.gmra.mrb[0].mxu0 %v804
    %v2900 = vpop.f32.mrb[0].mxu0
    %v2901 = vadd.f32 %v2708, %v2900
    %v2902 = vpop.f32.mrb[0].mxu0
    %v2903 = vadd.f32 %v2710, %v2902
    %v2904 = vpop.f32.mrb[0].mxu0
    %v2905 = vadd.f32 %v2712, %v2904
    %v2906 = vpop.f32.mrb[0].mxu0
    %v2907 = vadd.f32 %v2714, %v2906
    %2908 = vmatprep.mubr.bf16.mxu0 %v811
    %2909 = vmatmul.mubr.bf16.gmra.mrb[0].mxu0 %v810
    %v2910 = vpop.f32.mrb[0].mxu0
    %v2911 = vadd.f32 %v2718, %v2910
    %v2912 = vpop.f32.mrb[0].mxu0
    %v2913 = vadd.f32 %v2720, %v2912
    %v2914 = vpop.f32.mrb[0].mxu0
    %v2915 = vadd.f32 %v2722, %v2914
    %v2916 = vpop.f32.mrb[0].mxu0
    %v2917 = vadd.f32 %v2724, %v2916
    %2918 = vmatprep.mubr.bf16.mxu0 %v817
    %2919 = vmatmul.mubr.bf16.gmra.mrb[0].mxu0 %v816
    %v2920 = vpop.f32.mrb[0].mxu0
    %v2921 = vadd.f32 %v2728, %v2920
    %v2922 = vpop.f32.mrb[0].mxu0
    %v2923 = vadd.f32 %v2730, %v2922
    %v2924 = vpop.f32.mrb[0].mxu0
    %v2925 = vadd.f32 %v2732, %v2924
    %v2926 = vpop.f32.mrb[0].mxu0
    %v2927 = vadd.f32 %v2734, %v2926
    %2928 = vmatprep.mubr.bf16.mxu0 %v823
    %2929 = vmatmul.mubr.bf16.gmra.mrb[0].mxu0 %v822
    %v2930 = vpop.f32.mrb[0].mxu0
    %v2931 = vadd.f32 %v2738, %v2930
    %v2932 = vpop.f32.mrb[0].mxu0
    %v2933 = vadd.f32 %v2740, %v2932
    %v2934 = vpop.f32.mrb[0].mxu0
    %v2935 = vadd.f32 %v2742, %v2934
    %v2936 = vpop.f32.mrb[0].mxu0
    %v2937 = vadd.f32 %v2744, %v2936
    %2938 = vdwg.mxu0
    %2939 = vmatprep.subr.bf16.mxu0 %v1787
    %2940 = vmatpush1.bf16.msra.mxu0 %v1786
    %2941 = vmatprep.subr.bf16.mxu0 %v1793
    %2942 = vmatpush1.bf16.msra.mxu0 %v1792
    %2943 = vmatprep.subr.bf16.mxu0 %v1799
    %2944 = vmatpush1.bf16.msra.mxu0 %v1798
    %2945 = vmatprep.subr.bf16.mxu0 %v1805
    %2946 = vmatpush1.bf16.msra.mxu0 %v1804
    %2947 = vmatprep.subr.bf16.mxu0 %v1811
    %2948 = vmatpush1.bf16.msra.mxu0 %v1810
    %2949 = vmatprep.subr.bf16.mxu0 %v1817
    %2950 = vmatpush1.bf16.msra.mxu0 %v1816
    %2951 = vmatprep.subr.bf16.mxu0 %v1823
    %2952 = vmatpush1.bf16.msra.mxu0 %v1822
    %2953 = vmatprep.subr.bf16.mxu0 %v1829
    %2954 = vmatpush1.bf16.msra.mxu0 %v1828
    %2955 = vmatprep.subr.bf16.mxu0 %v1835
    %2956 = vmatpush1.bf16.msra.mxu0 %v1834
    %2957 = vmatprep.subr.bf16.mxu0 %v1841
    %2958 = vmatpush1.bf16.msra.mxu0 %v1840
    %2959 = vmatprep.subr.bf16.mxu0 %v1847
    %2960 = vmatpush1.bf16.msra.mxu0 %v1846
    %2961 = vmatprep.subr.bf16.mxu0 %v1853
    %2962 = vmatpush1.bf16.msra.mxu0 %v1852
    %2963 = vmatprep.subr.bf16.mxu0 %v1859
    %2964 = vmatpush1.bf16.msra.mxu0 %v1858
    %2965 = vmatprep.subr.bf16.mxu0 %v1865
    %2966 = vmatpush1.bf16.msra.mxu0 %v1864
    %2967 = vmatprep.subr.bf16.mxu0 %v1871
    %2968 = vmatpush1.bf16.msra.mxu0 %v1870
    %2969 = vmatprep.subr.bf16.mxu0 %v1877
    %2970 = vmatpush1.bf16.msra.mxu0 %v1876
    %2971 = vmatprep.mubr.bf16.mxu0 %v729
    %2972 = vmatmul.mubr.bf16.gmra.mrb[0].mxu0 %v728
    %v2973 = vpop.f32.mrb[0].mxu0
    %v2974 = vadd.f32 0.0, %v2973
    %v2975 = vpop.f32.mrb[0].mxu0
    %v2976 = vadd.f32 0.0, %v2975
    %v2977 = vpop.f32.mrb[0].mxu0
    %v2978 = vadd.f32 0.0, %v2977
    %v2979 = vpop.f32.mrb[0].mxu0
    %v2980 = vadd.f32 0.0, %v2979
    %2981 = vmatprep.mubr.bf16.mxu0 %v735
    %2982 = vmatmul.mubr.bf16.gmra.mrb[0].mxu0 %v734
    %v2983 = vpop.f32.mrb[0].mxu0
    %v2984 = vadd.f32 0.0, %v2983
    %v2985 = vpop.f32.mrb[0].mxu0
    %v2986 = vadd.f32 0.0, %v2985
    %v2987 = vpop.f32.mrb[0].mxu0
    %v2988 = vadd.f32 0.0, %v2987
    %v2989 = vpop.f32.mrb[0].mxu0
    %v2990 = vadd.f32 0.0, %v2989
    %2991 = vmatprep.mubr.bf16.mxu0 %v741
    %2992 = vmatmul.mubr.bf16.gmra.mrb[0].mxu0 %v740
    %v2993 = vpop.f32.mrb[0].mxu0
    %v2994 = vadd.f32 0.0, %v2993
    %v2995 = vpop.f32.mrb[0].mxu0
    %v2996 = vadd.f32 0.0, %v2995
    %v2997 = vpop.f32.mrb[0].mxu0
    %v2998 = vadd.f32 0.0, %v2997
    %v2999 = vpop.f32.mrb[0].mxu0
    %v3000 = vadd.f32 0.0, %v2999
    %3001 = vmatprep.mubr.bf16.mxu0 %v747
    %3002 = vmatmul.mubr.bf16.gmra.mrb[0].mxu0 %v746
    %v3003 = vpop.f32.mrb[0].mxu0
    %v3004 = vadd.f32 0.0, %v3003
    %v3005 = vpop.f32.mrb[0].mxu0
    %v3006 = vadd.f32 0.0, %v3005
    %v3007 = vpop.f32.mrb[0].mxu0
    %v3008 = vadd.f32 0.0, %v3007
    %v3009 = vpop.f32.mrb[0].mxu0
    %v3010 = vadd.f32 0.0, %v3009
    %3011 = vmatprep.mubr.bf16.mxu0 %v753
    %3012 = vmatmul.mubr.bf16.gmra.mrb[0].mxu0 %v752
    %v3013 = vpop.f32.mrb[0].mxu0
    %v3014 = vadd.f32 0.0, %v3013
    %v3015 = vpop.f32.mrb[0].mxu0
    %v3016 = vadd.f32 0.0, %v3015
    %v3017 = vpop.f32.mrb[0].mxu0
    %v3018 = vadd.f32 0.0, %v3017
    %v3019 = vpop.f32.mrb[0].mxu0
    %v3020 = vadd.f32 0.0, %v3019
    %3021 = vmatprep.mubr.bf16.mxu0 %v759
    %3022 = vmatmul.mubr.bf16.gmra.mrb[0].mxu0 %v758
    %v3023 = vpop.f32.mrb[0].mxu0
    %v3024 = vadd.f32 0.0, %v3023
    %v3025 = vpop.f32.mrb[0].mxu0
    %v3026 = vadd.f32 0.0, %v3025
    %v3027 = vpop.f32.mrb[0].mxu0
    %v3028 = vadd.f32 0.0, %v3027
    %v3029 = vpop.f32.mrb[0].mxu0
    %v3030 = vadd.f32 0.0, %v3029
    %3031 = vmatprep.mubr.bf16.mxu0 %v765
    %3032 = vmatmul.mubr.bf16.gmra.mrb[0].mxu0 %v764
    %v3033 = vpop.f32.mrb[0].mxu0
    %v3034 = vadd.f32 0.0, %v3033
    %v3035 = vpop.f32.mrb[0].mxu0
    %v3036 = vadd.f32 0.0, %v3035
    %v3037 = vpop.f32.mrb[0].mxu0
    %v3038 = vadd.f32 0.0, %v3037
    %v3039 = vpop.f32.mrb[0].mxu0
    %v3040 = vadd.f32 0.0, %v3039
    %3041 = vmatprep.mubr.bf16.mxu0 %v771
    %3042 = vmatmul.mubr.bf16.gmra.mrb[0].mxu0 %v770
    %v3043 = vpop.f32.mrb[0].mxu0
    %v3044 = vadd.f32 0.0, %v3043
    %v3045 = vpop.f32.mrb[0].mxu0
    %v3046 = vadd.f32 0.0, %v3045
    %v3047 = vpop.f32.mrb[0].mxu0
    %v3048 = vadd.f32 0.0, %v3047
    %v3049 = vpop.f32.mrb[0].mxu0
    %v3050 = vadd.f32 0.0, %v3049
    %3051 = vmatprep.mubr.bf16.mxu0 %v777
    %3052 = vmatmul.mubr.bf16.gmra.mrb[0].mxu0 %v776
    %v3053 = vpop.f32.mrb[0].mxu0
    %v3054 = vadd.f32 0.0, %v3053
    %v3055 = vpop.f32.mrb[0].mxu0
    %v3056 = vadd.f32 0.0, %v3055
    %v3057 = vpop.f32.mrb[0].mxu0
    %v3058 = vadd.f32 0.0, %v3057
    %v3059 = vpop.f32.mrb[0].mxu0
    %v3060 = vadd.f32 0.0, %v3059
    %3061 = vmatprep.mubr.bf16.mxu0 %v783
    %3062 = vmatmul.mubr.bf16.gmra.mrb[0].mxu0 %v782
    %v3063 = vpop.f32.mrb[0].mxu0
    %v3064 = vadd.f32 0.0, %v3063
    %v3065 = vpop.f32.mrb[0].mxu0
    %v3066 = vadd.f32 0.0, %v3065
    %v3067 = vpop.f32.mrb[0].mxu0
    %v3068 = vadd.f32 0.0, %v3067
    %v3069 = vpop.f32.mrb[0].mxu0
    %v3070 = vadd.f32 0.0, %v3069
    %3071 = vmatprep.mubr.bf16.mxu0 %v789
    %3072 = vmatmul.mubr.bf16.gmra.mrb[0].mxu0 %v788
    %v3073 = vpop.f32.mrb[0].mxu0
    %v3074 = vadd.f32 0.0, %v3073
    %v3075 = vpop.f32.mrb[0].mxu0
    %v3076 = vadd.f32 0.0, %v3075
    %v3077 = vpop.f32.mrb[0].mxu0
    %v3078 = vadd.f32 0.0, %v3077
    %v3079 = vpop.f32.mrb[0].mxu0
    %v3080 = vadd.f32 0.0, %v3079
    %3081 = vmatprep.mubr.bf16.mxu0 %v795
    %3082 = vmatmul.mubr.bf16.gmra.mrb[0].mxu0 %v794
    %v3083 = vpop.f32.mrb[0].mxu0
    %v3084 = vadd.f32 0.0, %v3083
    %v3085 = vpop.f32.mrb[0].mxu0
    %v3086 = vadd.f32 0.0, %v3085
    %v3087 = vpop.f32.mrb[0].mxu0
    %v3088 = vadd.f32 0.0, %v3087
    %v3089 = vpop.f32.mrb[0].mxu0
    %v3090 = vadd.f32 0.0, %v3089
    %3091 = vmatprep.mubr.bf16.mxu0 %v801
    %3092 = vmatmul.mubr.bf16.gmra.mrb[0].mxu0 %v800
    %v3093 = vpop.f32.mrb[0].mxu0
    %v3094 = vadd.f32 0.0, %v3093
    %v3095 = vpop.f32.mrb[0].mxu0
    %v3096 = vadd.f32 0.0, %v3095
    %v3097 = vpop.f32.mrb[0].mxu0
    %v3098 = vadd.f32 0.0, %v3097
    %v3099 = vpop.f32.mrb[0].mxu0
    %v3100 = vadd.f32 0.0, %v3099
    %3101 = vmatprep.mubr.bf16.mxu0 %v807
    %3102 = vmatmul.mubr.bf16.gmra.mrb[0].mxu0 %v806
    %v3103 = vpop.f32.mrb[0].mxu0
    %v3104 = vadd.f32 0.0, %v3103
    %v3105 = vpop.f32.mrb[0].mxu0
    %v3106 = vadd.f32 0.0, %v3105
    %v3107 = vpop.f32.mrb[0].mxu0
    %v3108 = vadd.f32 0.0, %v3107
    %v3109 = vpop.f32.mrb[0].mxu0
    %v3110 = vadd.f32 0.0, %v3109
    %3111 = vmatprep.mubr.bf16.mxu0 %v813
    %3112 = vmatmul.mubr.bf16.gmra.mrb[0].mxu0 %v812
    %v3113 = vpop.f32.mrb[0].mxu0
    %v3114 = vadd.f32 0.0, %v3113
    %v3115 = vpop.f32.mrb[0].mxu0
    %v3116 = vadd.f32 0.0, %v3115
    %v3117 = vpop.f32.mrb[0].mxu0
    %v3118 = vadd.f32 0.0, %v3117
    %v3119 = vpop.f32.mrb[0].mxu0
    %v3120 = vadd.f32 0.0, %v3119
    %3121 = vmatprep.mubr.bf16.mxu0 %v819
    %3122 = vmatmul.mubr.bf16.gmra.mrb[0].mxu0 %v818
    %v3123 = vpop.f32.mrb[0].mxu0
    %v3124 = vadd.f32 0.0, %v3123
    %v3125 = vpop.f32.mrb[0].mxu0
    %v3126 = vadd.f32 0.0, %v3125
    %v3127 = vpop.f32.mrb[0].mxu0
    %v3128 = vadd.f32 0.0, %v3127
    %v3129 = vpop.f32.mrb[0].mxu0
    %v3130 = vadd.f32 0.0, %v3129
    %3131 = vdwg.mxu0
    %3132 = vmatprep.subr.bf16.mxu0 %v1883
    %3133 = vmatpush1.bf16.msra.mxu0 %v1882
    %3134 = vmatprep.subr.bf16.mxu0 %v1889
    %3135 = vmatpush1.bf16.msra.mxu0 %v1888
    %3136 = vmatprep.subr.bf16.mxu0 %v1895
    %3137 = vmatpush1.bf16.msra.mxu0 %v1894
    %3138 = vmatprep.subr.bf16.mxu0 %v1901
    %3139 = vmatpush1.bf16.msra.mxu0 %v1900
    %3140 = vmatprep.subr.bf16.mxu0 %v1907
    %3141 = vmatpush1.bf16.msra.mxu0 %v1906
    %3142 = vmatprep.subr.bf16.mxu0 %v1913
    %3143 = vmatpush1.bf16.msra.mxu0 %v1912
    %3144 = vmatprep.subr.bf16.mxu0 %v1919
    %3145 = vmatpush1.bf16.msra.mxu0 %v1918
    %3146 = vmatprep.subr.bf16.mxu0 %v1925
    %3147 = vmatpush1.bf16.msra.mxu0 %v1924
    %3148 = vmatprep.subr.bf16.mxu0 %v1931
    %3149 = vmatpush1.bf16.msra.mxu0 %v1930
    %3150 = vmatprep.subr.bf16.mxu0 %v1937
    %3151 = vmatpush1.bf16.msra.mxu0 %v1936
    %3152 = vmatprep.subr.bf16.mxu0 %v1943
    %3153 = vmatpush1.bf16.msra.mxu0 %v1942
    %3154 = vmatprep.subr.bf16.mxu0 %v1949
    %3155 = vmatpush1.bf16.msra.mxu0 %v1948
    %3156 = vmatprep.subr.bf16.mxu0 %v1955
    %3157 = vmatpush1.bf16.msra.mxu0 %v1954
    %3158 = vmatprep.subr.bf16.mxu0 %v1961
    %3159 = vmatpush1.bf16.msra.mxu0 %v1960
    %3160 = vmatprep.subr.bf16.mxu0 %v1967
    %3161 = vmatpush1.bf16.msra.mxu0 %v1966
    %3162 = vmatprep.subr.bf16.mxu0 %v1973
    %3163 = vmatpush1.bf16.msra.mxu0 %v1972
    %3164 = vmatprep.mubr.bf16.mxu0 %v731
    %3165 = vmatmul.mubr.bf16.gmra.mrb[0].mxu0 %v730
    %v3166 = vpop.f32.mrb[0].mxu0
    %v3167 = vadd.f32 %v2974, %v3166
    %v3168 = vpop.f32.mrb[0].mxu0
    %v3169 = vadd.f32 %v2976, %v3168
    %v3170 = vpop.f32.mrb[0].mxu0
    %v3171 = vadd.f32 %v2978, %v3170
    %v3172 = vpop.f32.mrb[0].mxu0
    %v3173 = vadd.f32 %v2980, %v3172
    %3174 = vmatprep.mubr.bf16.mxu0 %v737
    %3175 = vmatmul.mubr.bf16.gmra.mrb[0].mxu0 %v736
    %v3176 = vpop.f32.mrb[0].mxu0
    %v3177 = vadd.f32 %v2984, %v3176
    %v3178 = vpop.f32.mrb[0].mxu0
    %v3179 = vadd.f32 %v2986, %v3178
    %v3180 = vpop.f32.mrb[0].mxu0
    %v3181 = vadd.f32 %v2988, %v3180
    %v3182 = vpop.f32.mrb[0].mxu0
    %v3183 = vadd.f32 %v2990, %v3182
    %3184 = vmatprep.mubr.bf16.mxu0 %v743
    %3185 = vmatmul.mubr.bf16.gmra.mrb[0].mxu0 %v742
    %v3186 = vpop.f32.mrb[0].mxu0
    %v3187 = vadd.f32 %v2994, %v3186
    %v3188 = vpop.f32.mrb[0].mxu0
    %v3189 = vadd.f32 %v2996, %v3188
    %v3190 = vpop.f32.mrb[0].mxu0
    %v3191 = vadd.f32 %v2998, %v3190
    %v3192 = vpop.f32.mrb[0].mxu0
    %v3193 = vadd.f32 %v3000, %v3192
    %3194 = vmatprep.mubr.bf16.mxu0 %v749
    %3195 = vmatmul.mubr.bf16.gmra.mrb[0].mxu0 %v748
    %v3196 = vpop.f32.mrb[0].mxu0
    %v3197 = vadd.f32 %v3004, %v3196
    %v3198 = vpop.f32.mrb[0].mxu0
    %v3199 = vadd.f32 %v3006, %v3198
    %v3200 = vpop.f32.mrb[0].mxu0
    %v3201 = vadd.f32 %v3008, %v3200
    %v3202 = vpop.f32.mrb[0].mxu0
    %v3203 = vadd.f32 %v3010, %v3202
    %3204 = vmatprep.mubr.bf16.mxu0 %v755
    %3205 = vmatmul.mubr.bf16.gmra.mrb[0].mxu0 %v754
    %v3206 = vpop.f32.mrb[0].mxu0
    %v3207 = vadd.f32 %v3014, %v3206
    %v3208 = vpop.f32.mrb[0].mxu0
    %v3209 = vadd.f32 %v3016, %v3208
    %v3210 = vpop.f32.mrb[0].mxu0
    %v3211 = vadd.f32 %v3018, %v3210
    %v3212 = vpop.f32.mrb[0].mxu0
    %v3213 = vadd.f32 %v3020, %v3212
    %3214 = vmatprep.mubr.bf16.mxu0 %v761
    %3215 = vmatmul.mubr.bf16.gmra.mrb[0].mxu0 %v760
    %v3216 = vpop.f32.mrb[0].mxu0
    %v3217 = vadd.f32 %v3024, %v3216
    %v3218 = vpop.f32.mrb[0].mxu0
    %v3219 = vadd.f32 %v3026, %v3218
    %v3220 = vpop.f32.mrb[0].mxu0
    %v3221 = vadd.f32 %v3028, %v3220
    %v3222 = vpop.f32.mrb[0].mxu0
    %v3223 = vadd.f32 %v3030, %v3222
    %3224 = vmatprep.mubr.bf16.mxu0 %v767
    %3225 = vmatmul.mubr.bf16.gmra.mrb[0].mxu0 %v766
    %v3226 = vpop.f32.mrb[0].mxu0
    %v3227 = vadd.f32 %v3034, %v3226
    %v3228 = vpop.f32.mrb[0].mxu0
    %v3229 = vadd.f32 %v3036, %v3228
    %v3230 = vpop.f32.mrb[0].mxu0
    %v3231 = vadd.f32 %v3038, %v3230
    %v3232 = vpop.f32.mrb[0].mxu0
    %v3233 = vadd.f32 %v3040, %v3232
    %3234 = vmatprep.mubr.bf16.mxu0 %v773
    %3235 = vmatmul.mubr.bf16.gmra.mrb[0].mxu0 %v772
    %v3236 = vpop.f32.mrb[0].mxu0
    %v3237 = vadd.f32 %v3044, %v3236
    %v3238 = vpop.f32.mrb[0].mxu0
    %v3239 = vadd.f32 %v3046, %v3238
    %v3240 = vpop.f32.mrb[0].mxu0
    %v3241 = vadd.f32 %v3048, %v3240
    %v3242 = vpop.f32.mrb[0].mxu0
    %v3243 = vadd.f32 %v3050, %v3242
    %3244 = vmatprep.mubr.bf16.mxu0 %v779
    %3245 = vmatmul.mubr.bf16.gmra.mrb[0].mxu0 %v778
    %v3246 = vpop.f32.mrb[0].mxu0
    %v3247 = vadd.f32 %v3054, %v3246
    %v3248 = vpop.f32.mrb[0].mxu0
    %v3249 = vadd.f32 %v3056, %v3248
    %v3250 = vpop.f32.mrb[0].mxu0
    %v3251 = vadd.f32 %v3058, %v3250
    %v3252 = vpop.f32.mrb[0].mxu0
    %v3253 = vadd.f32 %v3060, %v3252
    %3254 = vmatprep.mubr.bf16.mxu0 %v785
    %3255 = vmatmul.mubr.bf16.gmra.mrb[0].mxu0 %v784
    %v3256 = vpop.f32.mrb[0].mxu0
    %v3257 = vadd.f32 %v3064, %v3256
    %v3258 = vpop.f32.mrb[0].mxu0
    %v3259 = vadd.f32 %v3066, %v3258
    %v3260 = vpop.f32.mrb[0].mxu0
    %v3261 = vadd.f32 %v3068, %v3260
    %v3262 = vpop.f32.mrb[0].mxu0
    %v3263 = vadd.f32 %v3070, %v3262
    %3264 = vmatprep.mubr.bf16.mxu0 %v791
    %3265 = vmatmul.mubr.bf16.gmra.mrb[0].mxu0 %v790
    %v3266 = vpop.f32.mrb[0].mxu0
    %v3267 = vadd.f32 %v3074, %v3266
    %v3268 = vpop.f32.mrb[0].mxu0
    %v3269 = vadd.f32 %v3076, %v3268
    %v3270 = vpop.f32.mrb[0].mxu0
    %v3271 = vadd.f32 %v3078, %v3270
    %v3272 = vpop.f32.mrb[0].mxu0
    %v3273 = vadd.f32 %v3080, %v3272
    %3274 = vmatprep.mubr.bf16.mxu0 %v797
    %3275 = vmatmul.mubr.bf16.gmra.mrb[0].mxu0 %v796
    %v3276 = vpop.f32.mrb[0].mxu0
    %v3277 = vadd.f32 %v3084, %v3276
    %v3278 = vpop.f32.mrb[0].mxu0
    %v3279 = vadd.f32 %v3086, %v3278
    %v3280 = vpop.f32.mrb[0].mxu0
    %v3281 = vadd.f32 %v3088, %v3280
    %v3282 = vpop.f32.mrb[0].mxu0
    %v3283 = vadd.f32 %v3090, %v3282
    %3284 = vmatprep.mubr.bf16.mxu0 %v803
    %3285 = vmatmul.mubr.bf16.gmra.mrb[0].mxu0 %v802
    %v3286 = vpop.f32.mrb[0].mxu0
    %v3287 = vadd.f32 %v3094, %v3286
    %v3288 = vpop.f32.mrb[0].mxu0
    %v3289 = vadd.f32 %v3096, %v3288
    %v3290 = vpop.f32.mrb[0].mxu0
    %v3291 = vadd.f32 %v3098, %v3290
    %v3292 = vpop.f32.mrb[0].mxu0
    %v3293 = vadd.f32 %v3100, %v3292
    %3294 = vmatprep.mubr.bf16.mxu0 %v809
    %3295 = vmatmul.mubr.bf16.gmra.mrb[0].mxu0 %v808
    %v3296 = vpop.f32.mrb[0].mxu0
    %v3297 = vadd.f32 %v3104, %v3296
    %v3298 = vpop.f32.mrb[0].mxu0
    %v3299 = vadd.f32 %v3106, %v3298
    %v3300 = vpop.f32.mrb[0].mxu0
    %v3301 = vadd.f32 %v3108, %v3300
    %v3302 = vpop.f32.mrb[0].mxu0
    %v3303 = vadd.f32 %v3110, %v3302
    %3304 = vmatprep.mubr.bf16.mxu0 %v815
    %3305 = vmatmul.mubr.bf16.gmra.mrb[0].mxu0 %v814
    %v3306 = vpop.f32.mrb[0].mxu0
    %v3307 = vadd.f32 %v3114, %v3306
    %v3308 = vpop.f32.mrb[0].mxu0
    %v3309 = vadd.f32 %v3116, %v3308
    %v3310 = vpop.f32.mrb[0].mxu0
    %v3311 = vadd.f32 %v3118, %v3310
    %v3312 = vpop.f32.mrb[0].mxu0
    %v3313 = vadd.f32 %v3120, %v3312
    %3314 = vmatprep.mubr.bf16.mxu0 %v821
    %3315 = vmatmul.mubr.bf16.gmra.mrb[0].mxu0 %v820
    %v3316 = vpop.f32.mrb[0].mxu0
    %v3317 = vadd.f32 %v3124, %v3316
    %v3318 = vpop.f32.mrb[0].mxu0
    %v3319 = vadd.f32 %v3126, %v3318
    %v3320 = vpop.f32.mrb[0].mxu0
    %v3321 = vadd.f32 %v3128, %v3320
    %v3322 = vpop.f32.mrb[0].mxu0
    %v3323 = vadd.f32 %v3130, %v3322
    %3324 = vdwg.mxu0
    %3325 = vmatprep.subr.bf16.mxu0 %v1979
    %3326 = vmatpush1.bf16.msra.mxu0 %v1978
    %3327 = vmatprep.subr.bf16.mxu0 %v1985
    %3328 = vmatpush1.bf16.msra.mxu0 %v1984
    %3329 = vmatprep.subr.bf16.mxu0 %v1991
    %3330 = vmatpush1.bf16.msra.mxu0 %v1990
    %3331 = vmatprep.subr.bf16.mxu0 %v1997
    %3332 = vmatpush1.bf16.msra.mxu0 %v1996
    %3333 = vmatprep.subr.bf16.mxu0 %v2003
    %3334 = vmatpush1.bf16.msra.mxu0 %v2002
    %3335 = vmatprep.subr.bf16.mxu0 %v2009
    %3336 = vmatpush1.bf16.msra.mxu0 %v2008
    %3337 = vmatprep.subr.bf16.mxu0 %v2015
    %3338 = vmatpush1.bf16.msra.mxu0 %v2014
    %3339 = vmatprep.subr.bf16.mxu0 %v2021
    %3340 = vmatpush1.bf16.msra.mxu0 %v2020
    %3341 = vmatprep.subr.bf16.mxu0 %v2027
    %3342 = vmatpush1.bf16.msra.mxu0 %v2026
    %3343 = vmatprep.subr.bf16.mxu0 %v2033
    %3344 = vmatpush1.bf16.msra.mxu0 %v2032
    %3345 = vmatprep.subr.bf16.mxu0 %v2039
    %3346 = vmatpush1.bf16.msra.mxu0 %v2038
    %3347 = vmatprep.subr.bf16.mxu0 %v2045
    %3348 = vmatpush1.bf16.msra.mxu0 %v2044
    %3349 = vmatprep.subr.bf16.mxu0 %v2051
    %3350 = vmatpush1.bf16.msra.mxu0 %v2050
    %3351 = vmatprep.subr.bf16.mxu0 %v2057
    %3352 = vmatpush1.bf16.msra.mxu0 %v2056
    %3353 = vmatprep.subr.bf16.mxu0 %v2063
    %3354 = vmatpush1.bf16.msra.mxu0 %v2062
    %3355 = vmatprep.subr.bf16.mxu0 %v2069
    %3356 = vmatpush1.bf16.msra.mxu0 %v2068
    %3357 = vmatprep.mubr.bf16.mxu0 %v733
    %3358 = vmatmul.mubr.bf16.gmra.mrb[0].mxu0 %v732
    %v3359 = vpop.f32.mrb[0].mxu0
    %v3360 = vadd.f32 %v3167, %v3359
    %v3361 = vpop.f32.mrb[0].mxu0
    %v3362 = vadd.f32 %v3169, %v3361
    %v3363 = vpop.f32.mrb[0].mxu0
    %v3364 = vadd.f32 %v3171, %v3363
    %v3365 = vpop.f32.mrb[0].mxu0
    %v3366 = vadd.f32 %v3173, %v3365
    %3367 = vmatprep.mubr.bf16.mxu0 %v739
    %3368 = vmatmul.mubr.bf16.gmra.mrb[0].mxu0 %v738
    %v3369 = vpop.f32.mrb[0].mxu0
    %v3370 = vadd.f32 %v3177, %v3369
    %v3371 = vpop.f32.mrb[0].mxu0
    %v3372 = vadd.f32 %v3179, %v3371
    %v3373 = vpop.f32.mrb[0].mxu0
    %v3374 = vadd.f32 %v3181, %v3373
    %v3375 = vpop.f32.mrb[0].mxu0
    %v3376 = vadd.f32 %v3183, %v3375
    %3377 = vmatprep.mubr.bf16.mxu0 %v745
    %3378 = vmatmul.mubr.bf16.gmra.mrb[0].mxu0 %v744
    %v3379 = vpop.f32.mrb[0].mxu0
    %v3380 = vadd.f32 %v3187, %v3379
    %v3381 = vpop.f32.mrb[0].mxu0
    %v3382 = vadd.f32 %v3189, %v3381
    %v3383 = vpop.f32.mrb[0].mxu0
    %v3384 = vadd.f32 %v3191, %v3383
    %v3385 = vpop.f32.mrb[0].mxu0
    %v3386 = vadd.f32 %v3193, %v3385
    %3387 = vmatprep.mubr.bf16.mxu0 %v751
    %3388 = vmatmul.mubr.bf16.gmra.mrb[0].mxu0 %v750
    %v3389 = vpop.f32.mrb[0].mxu0
    %v3390 = vadd.f32 %v3197, %v3389
    %v3391 = vpop.f32.mrb[0].mxu0
    %v3392 = vadd.f32 %v3199, %v3391
    %v3393 = vpop.f32.mrb[0].mxu0
    %v3394 = vadd.f32 %v3201, %v3393
    %v3395 = vpop.f32.mrb[0].mxu0
    %v3396 = vadd.f32 %v3203, %v3395
    %3397 = vmatprep.mubr.bf16.mxu0 %v757
    %3398 = vmatmul.mubr.bf16.gmra.mrb[0].mxu0 %v756
    %v3399 = vpop.f32.mrb[0].mxu0
    %v3400 = vadd.f32 %v3207, %v3399
    %v3401 = vpop.f32.mrb[0].mxu0
    %v3402 = vadd.f32 %v3209, %v3401
    %v3403 = vpop.f32.mrb[0].mxu0
    %v3404 = vadd.f32 %v3211, %v3403
    %v3405 = vpop.f32.mrb[0].mxu0
    %v3406 = vadd.f32 %v3213, %v3405
    %3407 = vmatprep.mubr.bf16.mxu0 %v763
    %3408 = vmatmul.mubr.bf16.gmra.mrb[0].mxu0 %v762
    %v3409 = vpop.f32.mrb[0].mxu0
    %v3410 = vadd.f32 %v3217, %v3409
    %v3411 = vpop.f32.mrb[0].mxu0
    %v3412 = vadd.f32 %v3219, %v3411
    %v3413 = vpop.f32.mrb[0].mxu0
    %v3414 = vadd.f32 %v3221, %v3413
    %v3415 = vpop.f32.mrb[0].mxu0
    %v3416 = vadd.f32 %v3223, %v3415
    %3417 = vmatprep.mubr.bf16.mxu0 %v769
    %3418 = vmatmul.mubr.bf16.gmra.mrb[0].mxu0 %v768
    %v3419 = vpop.f32.mrb[0].mxu0
    %v3420 = vadd.f32 %v3227, %v3419
    %v3421 = vpop.f32.mrb[0].mxu0
    %v3422 = vadd.f32 %v3229, %v3421
    %v3423 = vpop.f32.mrb[0].mxu0
    %v3424 = vadd.f32 %v3231, %v3423
    %v3425 = vpop.f32.mrb[0].mxu0
    %v3426 = vadd.f32 %v3233, %v3425
    %3427 = vmatprep.mubr.bf16.mxu0 %v775
    %3428 = vmatmul.mubr.bf16.gmra.mrb[0].mxu0 %v774
    %v3429 = vpop.f32.mrb[0].mxu0
    %v3430 = vadd.f32 %v3237, %v3429
    %v3431 = vpop.f32.mrb[0].mxu0
    %v3432 = vadd.f32 %v3239, %v3431
    %v3433 = vpop.f32.mrb[0].mxu0
    %v3434 = vadd.f32 %v3241, %v3433
    %v3435 = vpop.f32.mrb[0].mxu0
    %v3436 = vadd.f32 %v3243, %v3435
    %3437 = vmatprep.mubr.bf16.mxu0 %v781
    %3438 = vmatmul.mubr.bf16.gmra.mrb[0].mxu0 %v780
    %v3439 = vpop.f32.mrb[0].mxu0
    %v3440 = vadd.f32 %v3247, %v3439
    %v3441 = vpop.f32.mrb[0].mxu0
    %v3442 = vadd.f32 %v3249, %v3441
    %v3443 = vpop.f32.mrb[0].mxu0
    %v3444 = vadd.f32 %v3251, %v3443
    %v3445 = vpop.f32.mrb[0].mxu0
    %v3446 = vadd.f32 %v3253, %v3445
    %3447 = vmatprep.mubr.bf16.mxu0 %v787
    %3448 = vmatmul.mubr.bf16.gmra.mrb[0].mxu0 %v786
    %v3449 = vpop.f32.mrb[0].mxu0
    %v3450 = vadd.f32 %v3257, %v3449
    %v3451 = vpop.f32.mrb[0].mxu0
    %v3452 = vadd.f32 %v3259, %v3451
    %v3453 = vpop.f32.mrb[0].mxu0
    %v3454 = vadd.f32 %v3261, %v3453
    %v3455 = vpop.f32.mrb[0].mxu0
    %v3456 = vadd.f32 %v3263, %v3455
    %3457 = vmatprep.mubr.bf16.mxu0 %v793
    %3458 = vmatmul.mubr.bf16.gmra.mrb[0].mxu0 %v792
    %v3459 = vpop.f32.mrb[0].mxu0
    %v3460 = vadd.f32 %v3267, %v3459
    %v3461 = vpop.f32.mrb[0].mxu0
    %v3462 = vadd.f32 %v3269, %v3461
    %v3463 = vpop.f32.mrb[0].mxu0
    %v3464 = vadd.f32 %v3271, %v3463
    %v3465 = vpop.f32.mrb[0].mxu0
    %v3466 = vadd.f32 %v3273, %v3465
    %3467 = vmatprep.mubr.bf16.mxu0 %v799
    %3468 = vmatmul.mubr.bf16.gmra.mrb[0].mxu0 %v798
    %v3469 = vpop.f32.mrb[0].mxu0
    %v3470 = vadd.f32 %v3277, %v3469
    %v3471 = vpop.f32.mrb[0].mxu0
    %v3472 = vadd.f32 %v3279, %v3471
    %v3473 = vpop.f32.mrb[0].mxu0
    %v3474 = vadd.f32 %v3281, %v3473
    %v3475 = vpop.f32.mrb[0].mxu0
    %v3476 = vadd.f32 %v3283, %v3475
    %3477 = vmatprep.mubr.bf16.mxu0 %v805
    %3478 = vmatmul.mubr.bf16.gmra.mrb[0].mxu0 %v804
    %v3479 = vpop.f32.mrb[0].mxu0
    %v3480 = vadd.f32 %v3287, %v3479
    %v3481 = vpop.f32.mrb[0].mxu0
    %v3482 = vadd.f32 %v3289, %v3481
    %v3483 = vpop.f32.mrb[0].mxu0
    %v3484 = vadd.f32 %v3291, %v3483
    %v3485 = vpop.f32.mrb[0].mxu0
    %v3486 = vadd.f32 %v3293, %v3485
    %3487 = vmatprep.mubr.bf16.mxu0 %v811
    %3488 = vmatmul.mubr.bf16.gmra.mrb[0].mxu0 %v810
    %v3489 = vpop.f32.mrb[0].mxu0
    %v3490 = vadd.f32 %v3297, %v3489
    %v3491 = vpop.f32.mrb[0].mxu0
    %v3492 = vadd.f32 %v3299, %v3491
    %v3493 = vpop.f32.mrb[0].mxu0
    %v3494 = vadd.f32 %v3301, %v3493
    %v3495 = vpop.f32.mrb[0].mxu0
    %v3496 = vadd.f32 %v3303, %v3495
    %3497 = vmatprep.mubr.bf16.mxu0 %v817
    %3498 = vmatmul.mubr.bf16.gmra.mrb[0].mxu0 %v816
    %v3499 = vpop.f32.mrb[0].mxu0
    %v3500 = vadd.f32 %v3307, %v3499
    %v3501 = vpop.f32.mrb[0].mxu0
    %v3502 = vadd.f32 %v3309, %v3501
    %v3503 = vpop.f32.mrb[0].mxu0
    %v3504 = vadd.f32 %v3311, %v3503
    %v3505 = vpop.f32.mrb[0].mxu0
    %v3506 = vadd.f32 %v3313, %v3505
    %3507 = vmatprep.mubr.bf16.mxu0 %v823
    %3508 = vmatmul.mubr.bf16.gmra.mrb[0].mxu0 %v822
    %v3509 = vpop.f32.mrb[0].mxu0
    %v3510 = vadd.f32 %v3317, %v3509
    %v3511 = vpop.f32.mrb[0].mxu0
    %v3512 = vadd.f32 %v3319, %v3511
    %v3513 = vpop.f32.mrb[0].mxu0
    %v3514 = vadd.f32 %v3321, %v3513
    %v3515 = vpop.f32.mrb[0].mxu0
    %v3516 = vadd.f32 %v3323, %v3515
    %3517 = vdwg.mxu0
    %3518 = vmatprep.subr.bf16.mxu0 %v1789
    %3519 = vmatpush1.bf16.msra.mxu0 %v1788
    %3520 = vmatprep.subr.bf16.mxu0 %v1795
    %3521 = vmatpush1.bf16.msra.mxu0 %v1794
    %3522 = vmatprep.subr.bf16.mxu0 %v1801
    %3523 = vmatpush1.bf16.msra.mxu0 %v1800
    %3524 = vmatprep.subr.bf16.mxu0 %v1807
    %3525 = vmatpush1.bf16.msra.mxu0 %v1806
    %3526 = vmatprep.subr.bf16.mxu0 %v1813
    %3527 = vmatpush1.bf16.msra.mxu0 %v1812
    %3528 = vmatprep.subr.bf16.mxu0 %v1819
    %3529 = vmatpush1.bf16.msra.mxu0 %v1818
    %3530 = vmatprep.subr.bf16.mxu0 %v1825
    %3531 = vmatpush1.bf16.msra.mxu0 %v1824
    %3532 = vmatprep.subr.bf16.mxu0 %v1831
    %3533 = vmatpush1.bf16.msra.mxu0 %v1830
    %3534 = vmatprep.subr.bf16.mxu0 %v1837
    %3535 = vmatpush1.bf16.msra.mxu0 %v1836
    %3536 = vmatprep.subr.bf16.mxu0 %v1843
    %3537 = vmatpush1.bf16.msra.mxu0 %v1842
    %3538 = vmatprep.subr.bf16.mxu0 %v1849
    %3539 = vmatpush1.bf16.msra.mxu0 %v1848
    %3540 = vmatprep.subr.bf16.mxu0 %v1855
    %3541 = vmatpush1.bf16.msra.mxu0 %v1854
    %3542 = vmatprep.subr.bf16.mxu0 %v1861
    %3543 = vmatpush1.bf16.msra.mxu0 %v1860
    %3544 = vmatprep.subr.bf16.mxu0 %v1867
    %3545 = vmatpush1.bf16.msra.mxu0 %v1866
    %3546 = vmatprep.subr.bf16.mxu0 %v1873
    %3547 = vmatpush1.bf16.msra.mxu0 %v1872
    %3548 = vmatprep.subr.bf16.mxu0 %v1879
    %3549 = vmatpush1.bf16.msra.mxu0 %v1878
    %3550 = vmatprep.mubr.bf16.mxu0 %v729
    %3551 = vmatmul.mubr.bf16.gmra.mrb[0].mxu0 %v728
    %v3552 = vpop.f32.mrb[0].mxu0
    %v3553 = vadd.f32 0.0, %v3552
    %v3554 = vpop.f32.mrb[0].mxu0
    %v3555 = vadd.f32 0.0, %v3554
    %v3556 = vpop.f32.mrb[0].mxu0
    %v3557 = vadd.f32 0.0, %v3556
    %v3558 = vpop.f32.mrb[0].mxu0
    %v3559 = vadd.f32 0.0, %v3558
    %3560 = vmatprep.mubr.bf16.mxu0 %v735
    %3561 = vmatmul.mubr.bf16.gmra.mrb[0].mxu0 %v734
    %v3562 = vpop.f32.mrb[0].mxu0
    %v3563 = vadd.f32 0.0, %v3562
    %v3564 = vpop.f32.mrb[0].mxu0
    %v3565 = vadd.f32 0.0, %v3564
    %v3566 = vpop.f32.mrb[0].mxu0
    %v3567 = vadd.f32 0.0, %v3566
    %v3568 = vpop.f32.mrb[0].mxu0
    %v3569 = vadd.f32 0.0, %v3568
    %3570 = vmatprep.mubr.bf16.mxu0 %v741
    %3571 = vmatmul.mubr.bf16.gmra.mrb[0].mxu0 %v740
    %v3572 = vpop.f32.mrb[0].mxu0
    %v3573 = vadd.f32 0.0, %v3572
    %v3574 = vpop.f32.mrb[0].mxu0
    %v3575 = vadd.f32 0.0, %v3574
    %v3576 = vpop.f32.mrb[0].mxu0
    %v3577 = vadd.f32 0.0, %v3576
    %v3578 = vpop.f32.mrb[0].mxu0
    %v3579 = vadd.f32 0.0, %v3578
    %3580 = vmatprep.mubr.bf16.mxu0 %v747
    %3581 = vmatmul.mubr.bf16.gmra.mrb[0].mxu0 %v746
    %v3582 = vpop.f32.mrb[0].mxu0
    %v3583 = vadd.f32 0.0, %v3582
    %v3584 = vpop.f32.mrb[0].mxu0
    %v3585 = vadd.f32 0.0, %v3584
    %v3586 = vpop.f32.mrb[0].mxu0
    %v3587 = vadd.f32 0.0, %v3586
    %v3588 = vpop.f32.mrb[0].mxu0
    %v3589 = vadd.f32 0.0, %v3588
    %3590 = vmatprep.mubr.bf16.mxu0 %v753
    %3591 = vmatmul.mubr.bf16.gmra.mrb[0].mxu0 %v752
    %v3592 = vpop.f32.mrb[0].mxu0
    %v3593 = vadd.f32 0.0, %v3592
    %v3594 = vpop.f32.mrb[0].mxu0
    %v3595 = vadd.f32 0.0, %v3594
    %v3596 = vpop.f32.mrb[0].mxu0
    %v3597 = vadd.f32 0.0, %v3596
    %v3598 = vpop.f32.mrb[0].mxu0
    %v3599 = vadd.f32 0.0, %v3598
    %3600 = vmatprep.mubr.bf16.mxu0 %v759
    %3601 = vmatmul.mubr.bf16.gmra.mrb[0].mxu0 %v758
    %v3602 = vpop.f32.mrb[0].mxu0
    %v3603 = vadd.f32 0.0, %v3602
    %v3604 = vpop.f32.mrb[0].mxu0
    %v3605 = vadd.f32 0.0, %v3604
    %v3606 = vpop.f32.mrb[0].mxu0
    %v3607 = vadd.f32 0.0, %v3606
    %v3608 = vpop.f32.mrb[0].mxu0
    %v3609 = vadd.f32 0.0, %v3608
    %3610 = vmatprep.mubr.bf16.mxu0 %v765
    %3611 = vmatmul.mubr.bf16.gmra.mrb[0].mxu0 %v764
    %v3612 = vpop.f32.mrb[0].mxu0
    %v3613 = vadd.f32 0.0, %v3612
    %v3614 = vpop.f32.mrb[0].mxu0
    %v3615 = vadd.f32 0.0, %v3614
    %v3616 = vpop.f32.mrb[0].mxu0
    %v3617 = vadd.f32 0.0, %v3616
    %v3618 = vpop.f32.mrb[0].mxu0
    %v3619 = vadd.f32 0.0, %v3618
    %3620 = vmatprep.mubr.bf16.mxu0 %v771
    %3621 = vmatmul.mubr.bf16.gmra.mrb[0].mxu0 %v770
    %v3622 = vpop.f32.mrb[0].mxu0
    %v3623 = vadd.f32 0.0, %v3622
    %v3624 = vpop.f32.mrb[0].mxu0
    %v3625 = vadd.f32 0.0, %v3624
    %v3626 = vpop.f32.mrb[0].mxu0
    %v3627 = vadd.f32 0.0, %v3626
    %v3628 = vpop.f32.mrb[0].mxu0
    %v3629 = vadd.f32 0.0, %v3628
    %3630 = vmatprep.mubr.bf16.mxu0 %v777
    %3631 = vmatmul.mubr.bf16.gmra.mrb[0].mxu0 %v776
    %v3632 = vpop.f32.mrb[0].mxu0
    %v3633 = vadd.f32 0.0, %v3632
    %v3634 = vpop.f32.mrb[0].mxu0
    %v3635 = vadd.f32 0.0, %v3634
    %v3636 = vpop.f32.mrb[0].mxu0
    %v3637 = vadd.f32 0.0, %v3636
    %v3638 = vpop.f32.mrb[0].mxu0
    %v3639 = vadd.f32 0.0, %v3638
    %3640 = vmatprep.mubr.bf16.mxu0 %v783
    %3641 = vmatmul.mubr.bf16.gmra.mrb[0].mxu0 %v782
    %v3642 = vpop.f32.mrb[0].mxu0
    %v3643 = vadd.f32 0.0, %v3642
    %v3644 = vpop.f32.mrb[0].mxu0
    %v3645 = vadd.f32 0.0, %v3644
    %v3646 = vpop.f32.mrb[0].mxu0
    %v3647 = vadd.f32 0.0, %v3646
    %v3648 = vpop.f32.mrb[0].mxu0
    %v3649 = vadd.f32 0.0, %v3648
    %3650 = vmatprep.mubr.bf16.mxu0 %v789
    %3651 = vmatmul.mubr.bf16.gmra.mrb[0].mxu0 %v788
    %v3652 = vpop.f32.mrb[0].mxu0
    %v3653 = vadd.f32 0.0, %v3652
    %v3654 = vpop.f32.mrb[0].mxu0
    %v3655 = vadd.f32 0.0, %v3654
    %v3656 = vpop.f32.mrb[0].mxu0
    %v3657 = vadd.f32 0.0, %v3656
    %v3658 = vpop.f32.mrb[0].mxu0
    %v3659 = vadd.f32 0.0, %v3658
    %3660 = vmatprep.mubr.bf16.mxu0 %v795
    %3661 = vmatmul.mubr.bf16.gmra.mrb[0].mxu0 %v794
    %v3662 = vpop.f32.mrb[0].mxu0
    %v3663 = vadd.f32 0.0, %v3662
    %v3664 = vpop.f32.mrb[0].mxu0
    %v3665 = vadd.f32 0.0, %v3664
    %v3666 = vpop.f32.mrb[0].mxu0
    %v3667 = vadd.f32 0.0, %v3666
    %v3668 = vpop.f32.mrb[0].mxu0
    %v3669 = vadd.f32 0.0, %v3668
    %3670 = vmatprep.mubr.bf16.mxu0 %v801
    %3671 = vmatmul.mubr.bf16.gmra.mrb[0].mxu0 %v800
    %v3672 = vpop.f32.mrb[0].mxu0
    %v3673 = vadd.f32 0.0, %v3672
    %v3674 = vpop.f32.mrb[0].mxu0
    %v3675 = vadd.f32 0.0, %v3674
    %v3676 = vpop.f32.mrb[0].mxu0
    %v3677 = vadd.f32 0.0, %v3676
    %v3678 = vpop.f32.mrb[0].mxu0
    %v3679 = vadd.f32 0.0, %v3678
    %3680 = vmatprep.mubr.bf16.mxu0 %v807
    %3681 = vmatmul.mubr.bf16.gmra.mrb[0].mxu0 %v806
    %v3682 = vpop.f32.mrb[0].mxu0
    %v3683 = vadd.f32 0.0, %v3682
    %v3684 = vpop.f32.mrb[0].mxu0
    %v3685 = vadd.f32 0.0, %v3684
    %v3686 = vpop.f32.mrb[0].mxu0
    %v3687 = vadd.f32 0.0, %v3686
    %v3688 = vpop.f32.mrb[0].mxu0
    %v3689 = vadd.f32 0.0, %v3688
    %3690 = vmatprep.mubr.bf16.mxu0 %v813
    %3691 = vmatmul.mubr.bf16.gmra.mrb[0].mxu0 %v812
    %v3692 = vpop.f32.mrb[0].mxu0
    %v3693 = vadd.f32 0.0, %v3692
    %v3694 = vpop.f32.mrb[0].mxu0
    %v3695 = vadd.f32 0.0, %v3694
    %v3696 = vpop.f32.mrb[0].mxu0
    %v3697 = vadd.f32 0.0, %v3696
    %v3698 = vpop.f32.mrb[0].mxu0
    %v3699 = vadd.f32 0.0, %v3698
    %3700 = vmatprep.mubr.bf16.mxu0 %v819
    %3701 = vmatmul.mubr.bf16.gmra.mrb[0].mxu0 %v818
    %v3702 = vpop.f32.mrb[0].mxu0
    %v3703 = vadd.f32 0.0, %v3702
    %v3704 = vpop.f32.mrb[0].mxu0
    %v3705 = vadd.f32 0.0, %v3704
    %v3706 = vpop.f32.mrb[0].mxu0
    %v3707 = vadd.f32 0.0, %v3706
    %v3708 = vpop.f32.mrb[0].mxu0
    %v3709 = vadd.f32 0.0, %v3708
    %3710 = vdwg.mxu0
    %3711 = vmatprep.subr.bf16.mxu0 %v1885
    %3712 = vmatpush1.bf16.msra.mxu0 %v1884
    %3713 = vmatprep.subr.bf16.mxu0 %v1891
    %3714 = vmatpush1.bf16.msra.mxu0 %v1890
    %3715 = vmatprep.subr.bf16.mxu0 %v1897
    %3716 = vmatpush1.bf16.msra.mxu0 %v1896
    %3717 = vmatprep.subr.bf16.mxu0 %v1903
    %3718 = vmatpush1.bf16.msra.mxu0 %v1902
    %3719 = vmatprep.subr.bf16.mxu0 %v1909
    %3720 = vmatpush1.bf16.msra.mxu0 %v1908
    %3721 = vmatprep.subr.bf16.mxu0 %v1915
    %3722 = vmatpush1.bf16.msra.mxu0 %v1914
    %3723 = vmatprep.subr.bf16.mxu0 %v1921
    %3724 = vmatpush1.bf16.msra.mxu0 %v1920
    %3725 = vmatprep.subr.bf16.mxu0 %v1927
    %3726 = vmatpush1.bf16.msra.mxu0 %v1926
    %3727 = vmatprep.subr.bf16.mxu0 %v1933
    %3728 = vmatpush1.bf16.msra.mxu0 %v1932
    %3729 = vmatprep.subr.bf16.mxu0 %v1939
    %3730 = vmatpush1.bf16.msra.mxu0 %v1938
    %3731 = vmatprep.subr.bf16.mxu0 %v1945
    %3732 = vmatpush1.bf16.msra.mxu0 %v1944
    %3733 = vmatprep.subr.bf16.mxu0 %v1951
    %3734 = vmatpush1.bf16.msra.mxu0 %v1950
    %3735 = vmatprep.subr.bf16.mxu0 %v1957
    %3736 = vmatpush1.bf16.msra.mxu0 %v1956
    %3737 = vmatprep.subr.bf16.mxu0 %v1963
    %3738 = vmatpush1.bf16.msra.mxu0 %v1962
    %3739 = vmatprep.subr.bf16.mxu0 %v1969
    %3740 = vmatpush1.bf16.msra.mxu0 %v1968
    %3741 = vmatprep.subr.bf16.mxu0 %v1975
    %3742 = vmatpush1.bf16.msra.mxu0 %v1974
    %3743 = vmatprep.mubr.bf16.mxu0 %v731
    %3744 = vmatmul.mubr.bf16.gmra.mrb[0].mxu0 %v730
    %v3745 = vpop.f32.mrb[0].mxu0
    %v3746 = vadd.f32 %v3553, %v3745
    %v3747 = vpop.f32.mrb[0].mxu0
    %v3748 = vadd.f32 %v3555, %v3747
    %v3749 = vpop.f32.mrb[0].mxu0
    %v3750 = vadd.f32 %v3557, %v3749
    %v3751 = vpop.f32.mrb[0].mxu0
    %v3752 = vadd.f32 %v3559, %v3751
    %3753 = vmatprep.mubr.bf16.mxu0 %v737
    %3754 = vmatmul.mubr.bf16.gmra.mrb[0].mxu0 %v736
    %v3755 = vpop.f32.mrb[0].mxu0
    %v3756 = vadd.f32 %v3563, %v3755
    %v3757 = vpop.f32.mrb[0].mxu0
    %v3758 = vadd.f32 %v3565, %v3757
    %v3759 = vpop.f32.mrb[0].mxu0
    %v3760 = vadd.f32 %v3567, %v3759
    %v3761 = vpop.f32.mrb[0].mxu0
    %v3762 = vadd.f32 %v3569, %v3761
    %3763 = vmatprep.mubr.bf16.mxu0 %v743
    %3764 = vmatmul.mubr.bf16.gmra.mrb[0].mxu0 %v742
    %v3765 = vpop.f32.mrb[0].mxu0
    %v3766 = vadd.f32 %v3573, %v3765
    %v3767 = vpop.f32.mrb[0].mxu0
    %v3768 = vadd.f32 %v3575, %v3767
    %v3769 = vpop.f32.mrb[0].mxu0
    %v3770 = vadd.f32 %v3577, %v3769
    %v3771 = vpop.f32.mrb[0].mxu0
    %v3772 = vadd.f32 %v3579, %v3771
    %3773 = vmatprep.mubr.bf16.mxu0 %v749
    %3774 = vmatmul.mubr.bf16.gmra.mrb[0].mxu0 %v748
    %v3775 = vpop.f32.mrb[0].mxu0
    %v3776 = vadd.f32 %v3583, %v3775
    %v3777 = vpop.f32.mrb[0].mxu0
    %v3778 = vadd.f32 %v3585, %v3777
    %v3779 = vpop.f32.mrb[0].mxu0
    %v3780 = vadd.f32 %v3587, %v3779
    %v3781 = vpop.f32.mrb[0].mxu0
    %v3782 = vadd.f32 %v3589, %v3781
    %3783 = vmatprep.mubr.bf16.mxu0 %v755
    %3784 = vmatmul.mubr.bf16.gmra.mrb[0].mxu0 %v754
    %v3785 = vpop.f32.mrb[0].mxu0
    %v3786 = vadd.f32 %v3593, %v3785
    %v3787 = vpop.f32.mrb[0].mxu0
    %v3788 = vadd.f32 %v3595, %v3787
    %v3789 = vpop.f32.mrb[0].mxu0
    %v3790 = vadd.f32 %v3597, %v3789
    %v3791 = vpop.f32.mrb[0].mxu0
    %v3792 = vadd.f32 %v3599, %v3791
    %3793 = vmatprep.mubr.bf16.mxu0 %v761
    %3794 = vmatmul.mubr.bf16.gmra.mrb[0].mxu0 %v760
    %v3795 = vpop.f32.mrb[0].mxu0
    %v3796 = vadd.f32 %v3603, %v3795
    %v3797 = vpop.f32.mrb[0].mxu0
    %v3798 = vadd.f32 %v3605, %v3797
    %v3799 = vpop.f32.mrb[0].mxu0
    %v3800 = vadd.f32 %v3607, %v3799
    %v3801 = vpop.f32.mrb[0].mxu0
    %v3802 = vadd.f32 %v3609, %v3801
    %3803 = vmatprep.mubr.bf16.mxu0 %v767
    %3804 = vmatmul.mubr.bf16.gmra.mrb[0].mxu0 %v766
    %v3805 = vpop.f32.mrb[0].mxu0
    %v3806 = vadd.f32 %v3613, %v3805
    %v3807 = vpop.f32.mrb[0].mxu0
    %v3808 = vadd.f32 %v3615, %v3807
    %v3809 = vpop.f32.mrb[0].mxu0
    %v3810 = vadd.f32 %v3617, %v3809
    %v3811 = vpop.f32.mrb[0].mxu0
    %v3812 = vadd.f32 %v3619, %v3811
    %3813 = vmatprep.mubr.bf16.mxu0 %v773
    %3814 = vmatmul.mubr.bf16.gmra.mrb[0].mxu0 %v772
    %v3815 = vpop.f32.mrb[0].mxu0
    %v3816 = vadd.f32 %v3623, %v3815
    %v3817 = vpop.f32.mrb[0].mxu0
    %v3818 = vadd.f32 %v3625, %v3817
    %v3819 = vpop.f32.mrb[0].mxu0
    %v3820 = vadd.f32 %v3627, %v3819
    %v3821 = vpop.f32.mrb[0].mxu0
    %v3822 = vadd.f32 %v3629, %v3821
    %3823 = vmatprep.mubr.bf16.mxu0 %v779
    %3824 = vmatmul.mubr.bf16.gmra.mrb[0].mxu0 %v778
    %v3825 = vpop.f32.mrb[0].mxu0
    %v3826 = vadd.f32 %v3633, %v3825
    %v3827 = vpop.f32.mrb[0].mxu0
    %v3828 = vadd.f32 %v3635, %v3827
    %v3829 = vpop.f32.mrb[0].mxu0
    %v3830 = vadd.f32 %v3637, %v3829
    %v3831 = vpop.f32.mrb[0].mxu0
    %v3832 = vadd.f32 %v3639, %v3831
    %3833 = vmatprep.mubr.bf16.mxu0 %v785
    %3834 = vmatmul.mubr.bf16.gmra.mrb[0].mxu0 %v784
    %v3835 = vpop.f32.mrb[0].mxu0
    %v3836 = vadd.f32 %v3643, %v3835
    %v3837 = vpop.f32.mrb[0].mxu0
    %v3838 = vadd.f32 %v3645, %v3837
    %v3839 = vpop.f32.mrb[0].mxu0
    %v3840 = vadd.f32 %v3647, %v3839
    %v3841 = vpop.f32.mrb[0].mxu0
    %v3842 = vadd.f32 %v3649, %v3841
    %3843 = vmatprep.mubr.bf16.mxu0 %v791
    %3844 = vmatmul.mubr.bf16.gmra.mrb[0].mxu0 %v790
    %v3845 = vpop.f32.mrb[0].mxu0
    %v3846 = vadd.f32 %v3653, %v3845
    %v3847 = vpop.f32.mrb[0].mxu0
    %v3848 = vadd.f32 %v3655, %v3847
    %v3849 = vpop.f32.mrb[0].mxu0
    %v3850 = vadd.f32 %v3657, %v3849
    %v3851 = vpop.f32.mrb[0].mxu0
    %v3852 = vadd.f32 %v3659, %v3851
    %3853 = vmatprep.mubr.bf16.mxu0 %v797
    %3854 = vmatmul.mubr.bf16.gmra.mrb[0].mxu0 %v796
    %v3855 = vpop.f32.mrb[0].mxu0
    %v3856 = vadd.f32 %v3663, %v3855
    %v3857 = vpop.f32.mrb[0].mxu0
    %v3858 = vadd.f32 %v3665, %v3857
    %v3859 = vpop.f32.mrb[0].mxu0
    %v3860 = vadd.f32 %v3667, %v3859
    %v3861 = vpop.f32.mrb[0].mxu0
    %v3862 = vadd.f32 %v3669, %v3861
    %3863 = vmatprep.mubr.bf16.mxu0 %v803
    %3864 = vmatmul.mubr.bf16.gmra.mrb[0].mxu0 %v802
    %v3865 = vpop.f32.mrb[0].mxu0
    %v3866 = vadd.f32 %v3673, %v3865
    %v3867 = vpop.f32.mrb[0].mxu0
    %v3868 = vadd.f32 %v3675, %v3867
    %v3869 = vpop.f32.mrb[0].mxu0
    %v3870 = vadd.f32 %v3677, %v3869
    %v3871 = vpop.f32.mrb[0].mxu0
    %v3872 = vadd.f32 %v3679, %v3871
    %3873 = vmatprep.mubr.bf16.mxu0 %v809
    %3874 = vmatmul.mubr.bf16.gmra.mrb[0].mxu0 %v808
    %v3875 = vpop.f32.mrb[0].mxu0
    %v3876 = vadd.f32 %v3683, %v3875
    %v3877 = vpop.f32.mrb[0].mxu0
    %v3878 = vadd.f32 %v3685, %v3877
    %v3879 = vpop.f32.mrb[0].mxu0
    %v3880 = vadd.f32 %v3687, %v3879
    %v3881 = vpop.f32.mrb[0].mxu0
    %v3882 = vadd.f32 %v3689, %v3881
    %3883 = vmatprep.mubr.bf16.mxu0 %v815
    %3884 = vmatmul.mubr.bf16.gmra.mrb[0].mxu0 %v814
    %v3885 = vpop.f32.mrb[0].mxu0
    %v3886 = vadd.f32 %v3693, %v3885
    %v3887 = vpop.f32.mrb[0].mxu0
    %v3888 = vadd.f32 %v3695, %v3887
    %v3889 = vpop.f32.mrb[0].mxu0
    %v3890 = vadd.f32 %v3697, %v3889
    %v3891 = vpop.f32.mrb[0].mxu0
    %v3892 = vadd.f32 %v3699, %v3891
    %3893 = vmatprep.mubr.bf16.mxu0 %v821
    %3894 = vmatmul.mubr.bf16.gmra.mrb[0].mxu0 %v820
    %v3895 = vpop.f32.mrb[0].mxu0
    %v3896 = vadd.f32 %v3703, %v3895
    %v3897 = vpop.f32.mrb[0].mxu0
    %v3898 = vadd.f32 %v3705, %v3897
    %v3899 = vpop.f32.mrb[0].mxu0
    %v3900 = vadd.f32 %v3707, %v3899
    %v3901 = vpop.f32.mrb[0].mxu0
    %v3902 = vadd.f32 %v3709, %v3901
    %3903 = vdwg.mxu0
    %3904 = vmatprep.subr.bf16.mxu0 %v1981
    %3905 = vmatpush1.bf16.msra.mxu0 %v1980
    %3906 = vmatprep.subr.bf16.mxu0 %v1987
    %3907 = vmatpush1.bf16.msra.mxu0 %v1986
    %3908 = vmatprep.subr.bf16.mxu0 %v1993
    %3909 = vmatpush1.bf16.msra.mxu0 %v1992
    %3910 = vmatprep.subr.bf16.mxu0 %v1999
    %3911 = vmatpush1.bf16.msra.mxu0 %v1998
    %3912 = vmatprep.subr.bf16.mxu0 %v2005
    %3913 = vmatpush1.bf16.msra.mxu0 %v2004
    %3914 = vmatprep.subr.bf16.mxu0 %v2011
    %3915 = vmatpush1.bf16.msra.mxu0 %v2010
    %3916 = vmatprep.subr.bf16.mxu0 %v2017
    %3917 = vmatpush1.bf16.msra.mxu0 %v2016
    %3918 = vmatprep.subr.bf16.mxu0 %v2023
    %3919 = vmatpush1.bf16.msra.mxu0 %v2022
    %3920 = vmatprep.subr.bf16.mxu0 %v2029
    %3921 = vmatpush1.bf16.msra.mxu0 %v2028
    %3922 = vmatprep.subr.bf16.mxu0 %v2035
    %3923 = vmatpush1.bf16.msra.mxu0 %v2034
    %3924 = vmatprep.subr.bf16.mxu0 %v2041
    %3925 = vmatpush1.bf16.msra.mxu0 %v2040
    %3926 = vmatprep.subr.bf16.mxu0 %v2047
    %3927 = vmatpush1.bf16.msra.mxu0 %v2046
    %3928 = vmatprep.subr.bf16.mxu0 %v2053
    %3929 = vmatpush1.bf16.msra.mxu0 %v2052
    %3930 = vmatprep.subr.bf16.mxu0 %v2059
    %3931 = vmatpush1.bf16.msra.mxu0 %v2058
    %3932 = vmatprep.subr.bf16.mxu0 %v2065
    %3933 = vmatpush1.bf16.msra.mxu0 %v2064
    %3934 = vmatprep.subr.bf16.mxu0 %v2071
    %3935 = vmatpush1.bf16.msra.mxu0 %v2070
    %3936 = vmatprep.mubr.bf16.mxu0 %v733
    %3937 = vmatmul.mubr.bf16.gmra.mrb[0].mxu0 %v732
    %v3938 = vpop.f32.mrb[0].mxu0
    %v3939 = vadd.f32 %v3746, %v3938
    %v3940 = vpop.f32.mrb[0].mxu0
    %v3941 = vadd.f32 %v3748, %v3940
    %v3942 = vpop.f32.mrb[0].mxu0
    %v3943 = vadd.f32 %v3750, %v3942
    %v3944 = vpop.f32.mrb[0].mxu0
    %v3945 = vadd.f32 %v3752, %v3944
    %3946 = vmatprep.mubr.bf16.mxu0 %v739
    %3947 = vmatmul.mubr.bf16.gmra.mrb[0].mxu0 %v738
    %v3948 = vpop.f32.mrb[0].mxu0
    %v3949 = vadd.f32 %v3756, %v3948
    %v3950 = vpop.f32.mrb[0].mxu0
    %v3951 = vadd.f32 %v3758, %v3950
    %v3952 = vpop.f32.mrb[0].mxu0
    %v3953 = vadd.f32 %v3760, %v3952
    %v3954 = vpop.f32.mrb[0].mxu0
    %v3955 = vadd.f32 %v3762, %v3954
    %3956 = vmatprep.mubr.bf16.mxu0 %v745
    %3957 = vmatmul.mubr.bf16.gmra.mrb[0].mxu0 %v744
    %v3958 = vpop.f32.mrb[0].mxu0
    %v3959 = vadd.f32 %v3766, %v3958
    %v3960 = vpop.f32.mrb[0].mxu0
    %v3961 = vadd.f32 %v3768, %v3960
    %v3962 = vpop.f32.mrb[0].mxu0
    %v3963 = vadd.f32 %v3770, %v3962
    %v3964 = vpop.f32.mrb[0].mxu0
    %v3965 = vadd.f32 %v3772, %v3964
    %3966 = vmatprep.mubr.bf16.mxu0 %v751
    %3967 = vmatmul.mubr.bf16.gmra.mrb[0].mxu0 %v750
    %v3968 = vpop.f32.mrb[0].mxu0
    %v3969 = vadd.f32 %v3776, %v3968
    %v3970 = vpop.f32.mrb[0].mxu0
    %v3971 = vadd.f32 %v3778, %v3970
    %v3972 = vpop.f32.mrb[0].mxu0
    %v3973 = vadd.f32 %v3780, %v3972
    %v3974 = vpop.f32.mrb[0].mxu0
    %v3975 = vadd.f32 %v3782, %v3974
    %3976 = vmatprep.mubr.bf16.mxu0 %v757
    %3977 = vmatmul.mubr.bf16.gmra.mrb[0].mxu0 %v756
    %v3978 = vpop.f32.mrb[0].mxu0
    %v3979 = vadd.f32 %v3786, %v3978
    %v3980 = vpop.f32.mrb[0].mxu0
    %v3981 = vadd.f32 %v3788, %v3980
    %v3982 = vpop.f32.mrb[0].mxu0
    %v3983 = vadd.f32 %v3790, %v3982
    %v3984 = vpop.f32.mrb[0].mxu0
    %v3985 = vadd.f32 %v3792, %v3984
    %3986 = vmatprep.mubr.bf16.mxu0 %v763
    %3987 = vmatmul.mubr.bf16.gmra.mrb[0].mxu0 %v762
    %v3988 = vpop.f32.mrb[0].mxu0
    %v3989 = vadd.f32 %v3796, %v3988
    %v3990 = vpop.f32.mrb[0].mxu0
    %v3991 = vadd.f32 %v3798, %v3990
    %v3992 = vpop.f32.mrb[0].mxu0
    %v3993 = vadd.f32 %v3800, %v3992
    %v3994 = vpop.f32.mrb[0].mxu0
    %v3995 = vadd.f32 %v3802, %v3994
    %3996 = vmatprep.mubr.bf16.mxu0 %v769
    %3997 = vmatmul.mubr.bf16.gmra.mrb[0].mxu0 %v768
    %v3998 = vpop.f32.mrb[0].mxu0
    %v3999 = vadd.f32 %v3806, %v3998
    %v4000 = vpop.f32.mrb[0].mxu0
    %v4001 = vadd.f32 %v3808, %v4000
    %v4002 = vpop.f32.mrb[0].mxu0
    %v4003 = vadd.f32 %v3810, %v4002
    %v4004 = vpop.f32.mrb[0].mxu0
    %v4005 = vadd.f32 %v3812, %v4004
    %4006 = vmatprep.mubr.bf16.mxu0 %v775
    %4007 = vmatmul.mubr.bf16.gmra.mrb[0].mxu0 %v774
    %v4008 = vpop.f32.mrb[0].mxu0
    %v4009 = vadd.f32 %v3816, %v4008
    %v4010 = vpop.f32.mrb[0].mxu0
    %v4011 = vadd.f32 %v3818, %v4010
    %v4012 = vpop.f32.mrb[0].mxu0
    %v4013 = vadd.f32 %v3820, %v4012
    %v4014 = vpop.f32.mrb[0].mxu0
    %v4015 = vadd.f32 %v3822, %v4014
    %4016 = vmatprep.mubr.bf16.mxu0 %v781
    %4017 = vmatmul.mubr.bf16.gmra.mrb[0].mxu0 %v780
    %v4018 = vpop.f32.mrb[0].mxu0
    %v4019 = vadd.f32 %v3826, %v4018
    %v4020 = vpop.f32.mrb[0].mxu0
    %v4021 = vadd.f32 %v3828, %v4020
    %v4022 = vpop.f32.mrb[0].mxu0
    %v4023 = vadd.f32 %v3830, %v4022
    %v4024 = vpop.f32.mrb[0].mxu0
    %v4025 = vadd.f32 %v3832, %v4024
    %4026 = vmatprep.mubr.bf16.mxu0 %v787
    %4027 = vmatmul.mubr.bf16.gmra.mrb[0].mxu0 %v786
    %v4028 = vpop.f32.mrb[0].mxu0
    %v4029 = vadd.f32 %v3836, %v4028
    %v4030 = vpop.f32.mrb[0].mxu0
    %v4031 = vadd.f32 %v3838, %v4030
    %v4032 = vpop.f32.mrb[0].mxu0
    %v4033 = vadd.f32 %v3840, %v4032
    %v4034 = vpop.f32.mrb[0].mxu0
    %v4035 = vadd.f32 %v3842, %v4034
    %4036 = vmatprep.mubr.bf16.mxu0 %v793
    %4037 = vmatmul.mubr.bf16.gmra.mrb[0].mxu0 %v792
    %v4038 = vpop.f32.mrb[0].mxu0
    %v4039 = vadd.f32 %v3846, %v4038
    %v4040 = vpop.f32.mrb[0].mxu0
    %v4041 = vadd.f32 %v3848, %v4040
    %v4042 = vpop.f32.mrb[0].mxu0
    %v4043 = vadd.f32 %v3850, %v4042
    %v4044 = vpop.f32.mrb[0].mxu0
    %v4045 = vadd.f32 %v3852, %v4044
    %4046 = vmatprep.mubr.bf16.mxu0 %v799
    %4047 = vmatmul.mubr.bf16.gmra.mrb[0].mxu0 %v798
    %v4048 = vpop.f32.mrb[0].mxu0
    %v4049 = vadd.f32 %v3856, %v4048
    %v4050 = vpop.f32.mrb[0].mxu0
    %v4051 = vadd.f32 %v3858, %v4050
    %v4052 = vpop.f32.mrb[0].mxu0
    %v4053 = vadd.f32 %v3860, %v4052
    %v4054 = vpop.f32.mrb[0].mxu0
    %v4055 = vadd.f32 %v3862, %v4054
    %4056 = vmatprep.mubr.bf16.mxu0 %v805
    %4057 = vmatmul.mubr.bf16.gmra.mrb[0].mxu0 %v804
    %v4058 = vpop.f32.mrb[0].mxu0
    %v4059 = vadd.f32 %v3866, %v4058
    %v4060 = vpop.f32.mrb[0].mxu0
    %v4061 = vadd.f32 %v3868, %v4060
    %v4062 = vpop.f32.mrb[0].mxu0
    %v4063 = vadd.f32 %v3870, %v4062
    %v4064 = vpop.f32.mrb[0].mxu0
    %v4065 = vadd.f32 %v3872, %v4064
    %4066 = vmatprep.mubr.bf16.mxu0 %v811
    %4067 = vmatmul.mubr.bf16.gmra.mrb[0].mxu0 %v810
    %v4068 = vpop.f32.mrb[0].mxu0
    %v4069 = vadd.f32 %v3876, %v4068
    %v4070 = vpop.f32.mrb[0].mxu0
    %v4071 = vadd.f32 %v3878, %v4070
    %v4072 = vpop.f32.mrb[0].mxu0
    %v4073 = vadd.f32 %v3880, %v4072
    %v4074 = vpop.f32.mrb[0].mxu0
    %v4075 = vadd.f32 %v3882, %v4074
    %4076 = vmatprep.mubr.bf16.mxu0 %v817
    %4077 = vmatmul.mubr.bf16.gmra.mrb[0].mxu0 %v816
    %v4078 = vpop.f32.mrb[0].mxu0
    %v4079 = vadd.f32 %v3886, %v4078
    %v4080 = vpop.f32.mrb[0].mxu0
    %v4081 = vadd.f32 %v3888, %v4080
    %v4082 = vpop.f32.mrb[0].mxu0
    %v4083 = vadd.f32 %v3890, %v4082
    %v4084 = vpop.f32.mrb[0].mxu0
    %v4085 = vadd.f32 %v3892, %v4084
    %4086 = vmatprep.mubr.bf16.mxu0 %v823
    %4087 = vmatmul.mubr.bf16.gmra.mrb[0].mxu0 %v822
    %v4088 = vpop.f32.mrb[0].mxu0
    %v4089 = vadd.f32 %v3896, %v4088
    %v4090 = vpop.f32.mrb[0].mxu0
    %v4091 = vadd.f32 %v3898, %v4090
    %v4092 = vpop.f32.mrb[0].mxu0
    %v4093 = vadd.f32 %v3900, %v4092
    %v4094 = vpop.f32.mrb[0].mxu0
    %v4095 = vadd.f32 %v3902, %v4094
    %4096 = vdwg.mxu0
    %v4097 = vld [vmem:[#allocation7] sm:$0xff]
    %v4098 = vld [vmem:[#allocation7 + $0x8] sm:$0xff]
    %v4099 = vld [vmem:[#allocation7 + $0x10] sm:$0xff]
    %v4100 = vld [vmem:[#allocation7 + $0x18] sm:$0xff]
    %v4101 = vld [vmem:[#allocation7 + $0x20] sm:$0xff]
    %v4102 = vld [vmem:[#allocation7 + $0x28] sm:$0xff]
    %v4103 = vld [vmem:[#allocation7 + $0x30] sm:$0xff]
    %v4104 = vld [vmem:[#allocation7 + $0x38] sm:$0xff]
    %v4105 = vld [vmem:[#allocation7 + $0x40] sm:$0xff]
    %v4106 = vld [vmem:[#allocation7 + $0x48] sm:$0xff]
    %v4107 = vld [vmem:[#allocation7 + $0x50] sm:$0xff]
    %v4108 = vld [vmem:[#allocation7 + $0x58] sm:$0xff]
    %v4109 = vld [vmem:[#allocation7 + $0x60] sm:$0xff]
    %v4110 = vld [vmem:[#allocation7 + $0x68] sm:$0xff]
    %v4111 = vld [vmem:[#allocation7 + $0x70] sm:$0xff]
    %v4112 = vld [vmem:[#allocation7 + $0x78] sm:$0xff]
    %v4113 = vld [vmem:[#allocation7 + $0x80] sm:$0xff]
    %v4114 = vld [vmem:[#allocation7 + $0x88] sm:$0xff]
    %v4115 = vld [vmem:[#allocation7 + $0x90] sm:$0xff]
    %v4116 = vld [vmem:[#allocation7 + $0x98] sm:$0xff]
    %v4117 = vld [vmem:[#allocation7 + $0xa0] sm:$0xff]
    %v4118 = vld [vmem:[#allocation7 + $0xa8] sm:$0xff]
    %v4119 = vld [vmem:[#allocation7 + $0xb0] sm:$0xff]
    %v4120 = vld [vmem:[#allocation7 + $0xb8] sm:$0xff]
    %v4121 = vld [vmem:[#allocation7 + $0xc0] sm:$0xff]
    %v4122 = vld [vmem:[#allocation7 + $0xc8] sm:$0xff]
    %v4123 = vld [vmem:[#allocation7 + $0xd0] sm:$0xff]
    %v4124 = vld [vmem:[#allocation7 + $0xd8] sm:$0xff]
    %v4125 = vld [vmem:[#allocation7 + $0xe0] sm:$0xff]
    %v4126 = vld [vmem:[#allocation7 + $0xe8] sm:$0xff]
    %v4127 = vld [vmem:[#allocation7 + $0xf0] sm:$0xff]
    %v4128 = vld [vmem:[#allocation7 + $0xf8] sm:$0xff]
    %v4129 = vld [vmem:[#allocation7 + $0x100] sm:$0xff]
    %v4130 = vld [vmem:[#allocation7 + $0x108] sm:$0xff]
    %v4131 = vld [vmem:[#allocation7 + $0x110] sm:$0xff]
    %v4132 = vld [vmem:[#allocation7 + $0x118] sm:$0xff]
    %v4133 = vld [vmem:[#allocation7 + $0x120] sm:$0xff]
    %v4134 = vld [vmem:[#allocation7 + $0x128] sm:$0xff]
    %v4135 = vld [vmem:[#allocation7 + $0x130] sm:$0xff]
    %v4136 = vld [vmem:[#allocation7 + $0x138] sm:$0xff]
    %v4137 = vld [vmem:[#allocation7 + $0x140] sm:$0xff]
    %v4138 = vld [vmem:[#allocation7 + $0x148] sm:$0xff]
    %v4139 = vld [vmem:[#allocation7 + $0x150] sm:$0xff]
    %v4140 = vld [vmem:[#allocation7 + $0x158] sm:$0xff]
    %v4141 = vld [vmem:[#allocation7 + $0x160] sm:$0xff]
    %v4142 = vld [vmem:[#allocation7 + $0x168] sm:$0xff]
    %v4143 = vld [vmem:[#allocation7 + $0x170] sm:$0xff]
    %v4144 = vld [vmem:[#allocation7 + $0x178] sm:$0xff]
    %v4145 = vld [vmem:[#allocation7 + $0x180] sm:$0xff]
    %v4146 = vld [vmem:[#allocation7 + $0x188] sm:$0xff]
    %v4147 = vld [vmem:[#allocation7 + $0x190] sm:$0xff]
    %v4148 = vld [vmem:[#allocation7 + $0x198] sm:$0xff]
    %v4149 = vld [vmem:[#allocation7 + $0x1a0] sm:$0xff]
    %v4150 = vld [vmem:[#allocation7 + $0x1a8] sm:$0xff]
    %v4151 = vld [vmem:[#allocation7 + $0x1b0] sm:$0xff]
    %v4152 = vld [vmem:[#allocation7 + $0x1b8] sm:$0xff]
    %v4153 = vld [vmem:[#allocation7 + $0x1c0] sm:$0xff]
    %v4154 = vld [vmem:[#allocation7 + $0x1c8] sm:$0xff]
    %v4155 = vld [vmem:[#allocation7 + $0x1d0] sm:$0xff]
    %v4156 = vld [vmem:[#allocation7 + $0x1d8] sm:$0xff]
    %v4157 = vld [vmem:[#allocation7 + $0x1e0] sm:$0xff]
    %v4158 = vld [vmem:[#allocation7 + $0x1e8] sm:$0xff]
    %v4159 = vld [vmem:[#allocation7 + $0x1f0] sm:$0xff]
    %v4160 = vld [vmem:[#allocation7 + $0x1f8] sm:$0xff]
    %v4161 = vld [vmem:[#allocation7 + $0x200] sm:$0xff]
    %v4162 = vld [vmem:[#allocation7 + $0x208] sm:$0xff]
    %v4163 = vld [vmem:[#allocation7 + $0x210] sm:$0xff]
    %v4164 = vld [vmem:[#allocation7 + $0x218] sm:$0xff]
    %v4165 = vld [vmem:[#allocation7 + $0x220] sm:$0xff]
    %v4166 = vld [vmem:[#allocation7 + $0x228] sm:$0xff]
    %v4167 = vld [vmem:[#allocation7 + $0x230] sm:$0xff]
    %v4168 = vld [vmem:[#allocation7 + $0x238] sm:$0xff]
    %v4169 = vld [vmem:[#allocation7 + $0x240] sm:$0xff]
    %v4170 = vld [vmem:[#allocation7 + $0x248] sm:$0xff]
    %v4171 = vld [vmem:[#allocation7 + $0x250] sm:$0xff]
    %v4172 = vld [vmem:[#allocation7 + $0x258] sm:$0xff]
    %v4173 = vld [vmem:[#allocation7 + $0x260] sm:$0xff]
    %v4174 = vld [vmem:[#allocation7 + $0x268] sm:$0xff]
    %v4175 = vld [vmem:[#allocation7 + $0x270] sm:$0xff]
    %v4176 = vld [vmem:[#allocation7 + $0x278] sm:$0xff]
    %v4177 = vld [vmem:[#allocation7 + $0x280] sm:$0xff]
    %v4178 = vld [vmem:[#allocation7 + $0x288] sm:$0xff]
    %v4179 = vld [vmem:[#allocation7 + $0x290] sm:$0xff]
    %v4180 = vld [vmem:[#allocation7 + $0x298] sm:$0xff]
    %v4181 = vld [vmem:[#allocation7 + $0x2a0] sm:$0xff]
    %v4182 = vld [vmem:[#allocation7 + $0x2a8] sm:$0xff]
    %v4183 = vld [vmem:[#allocation7 + $0x2b0] sm:$0xff]
    %v4184 = vld [vmem:[#allocation7 + $0x2b8] sm:$0xff]
    %v4185 = vld [vmem:[#allocation7 + $0x2c0] sm:$0xff]
    %v4186 = vld [vmem:[#allocation7 + $0x2c8] sm:$0xff]
    %v4187 = vld [vmem:[#allocation7 + $0x2d0] sm:$0xff]
    %v4188 = vld [vmem:[#allocation7 + $0x2d8] sm:$0xff]
    %v4189 = vld [vmem:[#allocation7 + $0x2e0] sm:$0xff]
    %v4190 = vld [vmem:[#allocation7 + $0x2e8] sm:$0xff]
    %v4191 = vld [vmem:[#allocation7 + $0x2f0] sm:$0xff]
    %v4192 = vld [vmem:[#allocation7 + $0x2f8] sm:$0xff]
    %v4193 = vld [vmem:[#allocation7 + $0x300] sm:$0xff]
    %v4194 = vld [vmem:[#allocation7 + $0x308] sm:$0xff]
    %v4195 = vld [vmem:[#allocation7 + $0x310] sm:$0xff]
    %v4196 = vld [vmem:[#allocation7 + $0x318] sm:$0xff]
    %v4197 = vld [vmem:[#allocation7 + $0x320] sm:$0xff]
    %v4198 = vld [vmem:[#allocation7 + $0x328] sm:$0xff]
    %v4199 = vld [vmem:[#allocation7 + $0x330] sm:$0xff]
    %v4200 = vld [vmem:[#allocation7 + $0x338] sm:$0xff]
    %v4201 = vld [vmem:[#allocation7 + $0x340] sm:$0xff]
    %v4202 = vld [vmem:[#allocation7 + $0x348] sm:$0xff]
    %v4203 = vld [vmem:[#allocation7 + $0x350] sm:$0xff]
    %v4204 = vld [vmem:[#allocation7 + $0x358] sm:$0xff]
    %v4205 = vld [vmem:[#allocation7 + $0x360] sm:$0xff]
    %v4206 = vld [vmem:[#allocation7 + $0x368] sm:$0xff]
    %v4207 = vld [vmem:[#allocation7 + $0x370] sm:$0xff]
    %v4208 = vld [vmem:[#allocation7 + $0x378] sm:$0xff]
    %v4209 = vld [vmem:[#allocation7 + $0x380] sm:$0xff]
    %v4210 = vld [vmem:[#allocation7 + $0x388] sm:$0xff]
    %v4211 = vld [vmem:[#allocation7 + $0x390] sm:$0xff]
    %v4212 = vld [vmem:[#allocation7 + $0x398] sm:$0xff]
    %v4213 = vld [vmem:[#allocation7 + $0x3a0] sm:$0xff]
    %v4214 = vld [vmem:[#allocation7 + $0x3a8] sm:$0xff]
    %v4215 = vld [vmem:[#allocation7 + $0x3b0] sm:$0xff]
    %v4216 = vld [vmem:[#allocation7 + $0x3b8] sm:$0xff]
    %v4217 = vld [vmem:[#allocation7 + $0x3c0] sm:$0xff]
    %v4218 = vld [vmem:[#allocation7 + $0x3c8] sm:$0xff]
    %v4219 = vld [vmem:[#allocation7 + $0x3d0] sm:$0xff]
    %v4220 = vld [vmem:[#allocation7 + $0x3d8] sm:$0xff]
    %v4221 = vld [vmem:[#allocation7 + $0x3e0] sm:$0xff]
    %v4222 = vld [vmem:[#allocation7 + $0x3e8] sm:$0xff]
    %v4223 = vld [vmem:[#allocation7 + $0x3f0] sm:$0xff]
    %v4224 = vld [vmem:[#allocation7 + $0x3f8] sm:$0xff]
    %v4225 = vld [vmem:[#allocation7 + $0x400] sm:$0xff]
    %v4226 = vld [vmem:[#allocation7 + $0x408] sm:$0xff]
    %v4227 = vld [vmem:[#allocation7 + $0x410] sm:$0xff]
    %v4228 = vld [vmem:[#allocation7 + $0x418] sm:$0xff]
    %v4229 = vld [vmem:[#allocation7 + $0x420] sm:$0xff]
    %v4230 = vld [vmem:[#allocation7 + $0x428] sm:$0xff]
    %v4231 = vld [vmem:[#allocation7 + $0x430] sm:$0xff]
    %v4232 = vld [vmem:[#allocation7 + $0x438] sm:$0xff]
    %v4233 = vld [vmem:[#allocation7 + $0x440] sm:$0xff]
    %v4234 = vld [vmem:[#allocation7 + $0x448] sm:$0xff]
    %v4235 = vld [vmem:[#allocation7 + $0x450] sm:$0xff]
    %v4236 = vld [vmem:[#allocation7 + $0x458] sm:$0xff]
    %v4237 = vld [vmem:[#allocation7 + $0x460] sm:$0xff]
    %v4238 = vld [vmem:[#allocation7 + $0x468] sm:$0xff]
    %v4239 = vld [vmem:[#allocation7 + $0x470] sm:$0xff]
    %v4240 = vld [vmem:[#allocation7 + $0x478] sm:$0xff]
    %v4241 = vld [vmem:[#allocation7 + $0x480] sm:$0xff]
    %v4242 = vld [vmem:[#allocation7 + $0x488] sm:$0xff]
    %v4243 = vld [vmem:[#allocation7 + $0x490] sm:$0xff]
    %v4244 = vld [vmem:[#allocation7 + $0x498] sm:$0xff]
    %v4245 = vld [vmem:[#allocation7 + $0x4a0] sm:$0xff]
    %v4246 = vld [vmem:[#allocation7 + $0x4a8] sm:$0xff]
    %v4247 = vld [vmem:[#allocation7 + $0x4b0] sm:$0xff]
    %v4248 = vld [vmem:[#allocation7 + $0x4b8] sm:$0xff]
    %v4249 = vld [vmem:[#allocation7 + $0x4c0] sm:$0xff]
    %v4250 = vld [vmem:[#allocation7 + $0x4c8] sm:$0xff]
    %v4251 = vld [vmem:[#allocation7 + $0x4d0] sm:$0xff]
    %v4252 = vld [vmem:[#allocation7 + $0x4d8] sm:$0xff]
    %v4253 = vld [vmem:[#allocation7 + $0x4e0] sm:$0xff]
    %v4254 = vld [vmem:[#allocation7 + $0x4e8] sm:$0xff]
    %v4255 = vld [vmem:[#allocation7 + $0x4f0] sm:$0xff]
    %v4256 = vld [vmem:[#allocation7 + $0x4f8] sm:$0xff]
    %v4257 = vld [vmem:[#allocation7 + $0x500] sm:$0xff]
    %v4258 = vld [vmem:[#allocation7 + $0x508] sm:$0xff]
    %v4259 = vld [vmem:[#allocation7 + $0x510] sm:$0xff]
    %v4260 = vld [vmem:[#allocation7 + $0x518] sm:$0xff]
    %v4261 = vld [vmem:[#allocation7 + $0x520] sm:$0xff]
    %v4262 = vld [vmem:[#allocation7 + $0x528] sm:$0xff]
    %v4263 = vld [vmem:[#allocation7 + $0x530] sm:$0xff]
    %v4264 = vld [vmem:[#allocation7 + $0x538] sm:$0xff]
    %v4265 = vld [vmem:[#allocation7 + $0x540] sm:$0xff]
    %v4266 = vld [vmem:[#allocation7 + $0x548] sm:$0xff]
    %v4267 = vld [vmem:[#allocation7 + $0x550] sm:$0xff]
    %v4268 = vld [vmem:[#allocation7 + $0x558] sm:$0xff]
    %v4269 = vld [vmem:[#allocation7 + $0x560] sm:$0xff]
    %v4270 = vld [vmem:[#allocation7 + $0x568] sm:$0xff]
    %v4271 = vld [vmem:[#allocation7 + $0x570] sm:$0xff]
    %v4272 = vld [vmem:[#allocation7 + $0x578] sm:$0xff]
    %v4273 = vld [vmem:[#allocation7 + $0x580] sm:$0xff]
    %v4274 = vld [vmem:[#allocation7 + $0x588] sm:$0xff]
    %v4275 = vld [vmem:[#allocation7 + $0x590] sm:$0xff]
    %v4276 = vld [vmem:[#allocation7 + $0x598] sm:$0xff]
    %v4277 = vld [vmem:[#allocation7 + $0x5a0] sm:$0xff]
    %v4278 = vld [vmem:[#allocation7 + $0x5a8] sm:$0xff]
    %v4279 = vld [vmem:[#allocation7 + $0x5b0] sm:$0xff]
    %v4280 = vld [vmem:[#allocation7 + $0x5b8] sm:$0xff]
    %v4281 = vld [vmem:[#allocation7 + $0x5c0] sm:$0xff]
    %v4282 = vld [vmem:[#allocation7 + $0x5c8] sm:$0xff]
    %v4283 = vld [vmem:[#allocation7 + $0x5d0] sm:$0xff]
    %v4284 = vld [vmem:[#allocation7 + $0x5d8] sm:$0xff]
    %v4285 = vld [vmem:[#allocation7 + $0x5e0] sm:$0xff]
    %v4286 = vld [vmem:[#allocation7 + $0x5e8] sm:$0xff]
    %v4287 = vld [vmem:[#allocation7 + $0x5f0] sm:$0xff]
    %v4288 = vld [vmem:[#allocation7 + $0x5f8] sm:$0xff]
    %v4289 = vsub.f32 %v2781, %v4097
    %v4290 = vsub.f32 %v2783, %v4098
    %v4291 = vsub.f32 %v3360, %v4099
    %v4292 = vsub.f32 %v3362, %v4100
    %v4293 = vsub.f32 %v3939, %v4101
    %v4294 = vsub.f32 %v3941, %v4102
    %v4295 = vsub.f32 %v2785, %v4103
    %v4296 = vsub.f32 %v2787, %v4104
    %v4297 = vsub.f32 %v3364, %v4105
    %v4298 = vsub.f32 %v3366, %v4106
    %v4299 = vsub.f32 %v3943, %v4107
    %v4300 = vsub.f32 %v3945, %v4108
    %v4301 = vsub.f32 %v2791, %v4109
    %v4302 = vsub.f32 %v2793, %v4110
    %v4303 = vsub.f32 %v3370, %v4111
    %v4304 = vsub.f32 %v3372, %v4112
    %v4305 = vsub.f32 %v3949, %v4113
    %v4306 = vsub.f32 %v3951, %v4114
    %v4307 = vsub.f32 %v2795, %v4115
    %v4308 = vsub.f32 %v2797, %v4116
    %v4309 = vsub.f32 %v3374, %v4117
    %v4310 = vsub.f32 %v3376, %v4118
    %v4311 = vsub.f32 %v3953, %v4119
    %v4312 = vsub.f32 %v3955, %v4120
    %v4313 = vsub.f32 %v2801, %v4121
    %v4314 = vsub.f32 %v2803, %v4122
    %v4315 = vsub.f32 %v3380, %v4123
    %v4316 = vsub.f32 %v3382, %v4124
    %v4317 = vsub.f32 %v3959, %v4125
    %v4318 = vsub.f32 %v3961, %v4126
    %v4319 = vsub.f32 %v2805, %v4127
    %v4320 = vsub.f32 %v2807, %v4128
    %v4321 = vsub.f32 %v3384, %v4129
    %v4322 = vsub.f32 %v3386, %v4130
    %v4323 = vsub.f32 %v3963, %v4131
    %v4324 = vsub.f32 %v3965, %v4132
    %v4325 = vsub.f32 %v2811, %v4133
    %v4326 = vsub.f32 %v2813, %v4134
    %v4327 = vsub.f32 %v3390, %v4135
    %v4328 = vsub.f32 %v3392, %v4136
    %v4329 = vsub.f32 %v3969, %v4137
    %v4330 = vsub.f32 %v3971, %v4138
    %v4331 = vsub.f32 %v2815, %v4139
    %v4332 = vsub.f32 %v2817, %v4140
    %v4333 = vsub.f32 %v3394, %v4141
    %v4334 = vsub.f32 %v3396, %v4142
    %v4335 = vsub.f32 %v3973, %v4143
    %v4336 = vsub.f32 %v3975, %v4144
    %v4337 = vsub.f32 %v2821, %v4145
    %v4338 = vsub.f32 %v2823, %v4146
    %v4339 = vsub.f32 %v3400, %v4147
    %v4340 = vsub.f32 %v3402, %v4148
    %v4341 = vsub.f32 %v3979, %v4149
    %v4342 = vsub.f32 %v3981, %v4150
    %v4343 = vsub.f32 %v2825, %v4151
    %v4344 = vsub.f32 %v2827, %v4152
    %v4345 = vsub.f32 %v3404, %v4153
    %v4346 = vsub.f32 %v3406, %v4154
    %v4347 = vsub.f32 %v3983, %v4155
    %v4348 = vsub.f32 %v3985, %v4156
    %v4349 = vsub.f32 %v2831, %v4157
    %v4350 = vsub.f32 %v2833, %v4158
    %v4351 = vsub.f32 %v3410, %v4159
    %v4352 = vsub.f32 %v3412, %v4160
    %v4353 = vsub.f32 %v3989, %v4161
    %v4354 = vsub.f32 %v3991, %v4162
    %v4355 = vsub.f32 %v2835, %v4163
    %v4356 = vsub.f32 %v2837, %v4164
    %v4357 = vsub.f32 %v3414, %v4165
    %v4358 = vsub.f32 %v3416, %v4166
    %v4359 = vsub.f32 %v3993, %v4167
    %v4360 = vsub.f32 %v3995, %v4168
    %v4361 = vsub.f32 %v2841, %v4169
    %v4362 = vsub.f32 %v2843, %v4170
    %v4363 = vsub.f32 %v3420, %v4171
    %v4364 = vsub.f32 %v3422, %v4172
    %v4365 = vsub.f32 %v3999, %v4173
    %v4366 = vsub.f32 %v4001, %v4174
    %v4367 = vsub.f32 %v2845, %v4175
    %v4368 = vsub.f32 %v2847, %v4176
    %v4369 = vsub.f32 %v3424, %v4177
    %v4370 = vsub.f32 %v3426, %v4178
    %v4371 = vsub.f32 %v4003, %v4179
    %v4372 = vsub.f32 %v4005, %v4180
    %v4373 = vsub.f32 %v2851, %v4181
    %v4374 = vsub.f32 %v2853, %v4182
    %v4375 = vsub.f32 %v3430, %v4183
    %v4376 = vsub.f32 %v3432, %v4184
    %v4377 = vsub.f32 %v4009, %v4185
    %v4378 = vsub.f32 %v4011, %v4186
    %v4379 = vsub.f32 %v2855, %v4187
    %v4380 = vsub.f32 %v2857, %v4188
    %v4381 = vsub.f32 %v3434, %v4189
    %v4382 = vsub.f32 %v3436, %v4190
    %v4383 = vsub.f32 %v4013, %v4191
    %v4384 = vsub.f32 %v4015, %v4192
    %v4385 = vsub.f32 %v2861, %v4193
    %v4386 = vsub.f32 %v2863, %v4194
    %v4387 = vsub.f32 %v3440, %v4195
    %v4388 = vsub.f32 %v3442, %v4196
    %v4389 = vsub.f32 %v4019, %v4197
    %v4390 = vsub.f32 %v4021, %v4198
    %v4391 = vsub.f32 %v2865, %v4199
    %v4392 = vsub.f32 %v2867, %v4200
    %v4393 = vsub.f32 %v3444, %v4201
    %v4394 = vsub.f32 %v3446, %v4202
    %v4395 = vsub.f32 %v4023, %v4203
    %v4396 = vsub.f32 %v4025, %v4204
    %v4397 = vsub.f32 %v2871, %v4205
    %v4398 = vsub.f32 %v2873, %v4206
    %v4399 = vsub.f32 %v3450, %v4207
    %v4400 = vsub.f32 %v3452, %v4208
    %v4401 = vsub.f32 %v4029, %v4209
    %v4402 = vsub.f32 %v4031, %v4210
    %v4403 = vsub.f32 %v2875, %v4211
    %v4404 = vsub.f32 %v2877, %v4212
    %v4405 = vsub.f32 %v3454, %v4213
    %v4406 = vsub.f32 %v3456, %v4214
    %v4407 = vsub.f32 %v4033, %v4215
    %v4408 = vsub.f32 %v4035, %v4216
    %v4409 = vsub.f32 %v2881, %v4217
    %v4410 = vsub.f32 %v2883, %v4218
    %v4411 = vsub.f32 %v3460, %v4219
    %v4412 = vsub.f32 %v3462, %v4220
    %v4413 = vsub.f32 %v4039, %v4221
    %v4414 = vsub.f32 %v4041, %v4222
    %v4415 = vsub.f32 %v2885, %v4223
    %v4416 = vsub.f32 %v2887, %v4224
    %v4417 = vsub.f32 %v3464, %v4225
    %v4418 = vsub.f32 %v3466, %v4226
    %v4419 = vsub.f32 %v4043, %v4227
    %v4420 = vsub.f32 %v4045, %v4228
    %v4421 = vsub.f32 %v2891, %v4229
    %v4422 = vsub.f32 %v2893, %v4230
    %v4423 = vsub.f32 %v3470, %v4231
    %v4424 = vsub.f32 %v3472, %v4232
    %v4425 = vsub.f32 %v4049, %v4233
    %v4426 = vsub.f32 %v4051, %v4234
    %v4427 = vsub.f32 %v2895, %v4235
    %v4428 = vsub.f32 %v2897, %v4236
    %v4429 = vsub.f32 %v3474, %v4237
    %v4430 = vsub.f32 %v3476, %v4238
    %v4431 = vsub.f32 %v4053, %v4239
    %v4432 = vsub.f32 %v4055, %v4240
    %v4433 = vsub.f32 %v2901, %v4241
    %v4434 = vsub.f32 %v2903, %v4242
    %v4435 = vsub.f32 %v3480, %v4243
    %v4436 = vsub.f32 %v3482, %v4244
    %v4437 = vsub.f32 %v4059, %v4245
    %v4438 = vsub.f32 %v4061, %v4246
    %v4439 = vsub.f32 %v2905, %v4247
    %v4440 = vsub.f32 %v2907, %v4248
    %v4441 = vsub.f32 %v3484, %v4249
    %v4442 = vsub.f32 %v3486, %v4250
    %v4443 = vsub.f32 %v4063, %v4251
    %v4444 = vsub.f32 %v4065, %v4252
    %v4445 = vsub.f32 %v2911, %v4253
    %v4446 = vsub.f32 %v2913, %v4254
    %v4447 = vsub.f32 %v3490, %v4255
    %v4448 = vsub.f32 %v3492, %v4256
    %v4449 = vsub.f32 %v4069, %v4257
    %v4450 = vsub.f32 %v4071, %v4258
    %v4451 = vsub.f32 %v2915, %v4259
    %v4452 = vsub.f32 %v2917, %v4260
    %v4453 = vsub.f32 %v3494, %v4261
    %v4454 = vsub.f32 %v3496, %v4262
    %v4455 = vsub.f32 %v4073, %v4263
    %v4456 = vsub.f32 %v4075, %v4264
    %v4457 = vsub.f32 %v2921, %v4265
    %v4458 = vsub.f32 %v2923, %v4266
    %v4459 = vsub.f32 %v3500, %v4267
    %v4460 = vsub.f32 %v3502, %v4268
    %v4461 = vsub.f32 %v4079, %v4269
    %v4462 = vsub.f32 %v4081, %v4270
    %v4463 = vsub.f32 %v2925, %v4271
    %v4464 = vsub.f32 %v2927, %v4272
    %v4465 = vsub.f32 %v3504, %v4273
    %v4466 = vsub.f32 %v3506, %v4274
    %v4467 = vsub.f32 %v4083, %v4275
    %v4468 = vsub.f32 %v4085, %v4276
    %v4469 = vsub.f32 %v2931, %v4277
    %v4470 = vsub.f32 %v2933, %v4278
    %v4471 = vsub.f32 %v3510, %v4279
    %v4472 = vsub.f32 %v3512, %v4280
    %v4473 = vsub.f32 %v4089, %v4281
    %v4474 = vsub.f32 %v4091, %v4282
    %v4475 = vsub.f32 %v2935, %v4283
    %v4476 = vsub.f32 %v2937, %v4284
    %v4477 = vsub.f32 %v3514, %v4285
    %v4478 = vsub.f32 %v3516, %v4286
    %v4479 = vsub.f32 %v4093, %v4287
    %v4480 = vsub.f32 %v4095, %v4288
    %v4481 = vmul.f32 %v4289, %v4289
    %v4482 = vmul.f32 %v4290, %v4290
    %v4483 = vmul.f32 %v4291, %v4291
    %v4484 = vmul.f32 %v4292, %v4292
    %v4485 = vmul.f32 %v4293, %v4293
    %v4486 = vmul.f32 %v4294, %v4294
    %v4487 = vmul.f32 %v4295, %v4295
    %v4488 = vmul.f32 %v4296, %v4296
    %v4489 = vmul.f32 %v4297, %v4297
    %v4490 = vmul.f32 %v4298, %v4298
    %v4491 = vmul.f32 %v4299, %v4299
    %v4492 = vmul.f32 %v4300, %v4300
    %v4493 = vmul.f32 %v4301, %v4301
    %v4494 = vmul.f32 %v4302, %v4302
    %v4495 = vmul.f32 %v4303, %v4303
    %v4496 = vmul.f32 %v4304, %v4304
    %v4497 = vmul.f32 %v4305, %v4305
    %v4498 = vmul.f32 %v4306, %v4306
    %v4499 = vmul.f32 %v4307, %v4307
    %v4500 = vmul.f32 %v4308, %v4308
    %v4501 = vmul.f32 %v4309, %v4309
    %v4502 = vmul.f32 %v4310, %v4310
    %v4503 = vmul.f32 %v4311, %v4311
    %v4504 = vmul.f32 %v4312, %v4312
    %v4505 = vmul.f32 %v4313, %v4313
    %v4506 = vmul.f32 %v4314, %v4314
    %v4507 = vmul.f32 %v4315, %v4315
    %v4508 = vmul.f32 %v4316, %v4316
    %v4509 = vmul.f32 %v4317, %v4317
    %v4510 = vmul.f32 %v4318, %v4318
    %v4511 = vmul.f32 %v4319, %v4319
    %v4512 = vmul.f32 %v4320, %v4320
    %v4513 = vmul.f32 %v4321, %v4321
    %v4514 = vmul.f32 %v4322, %v4322
    %v4515 = vmul.f32 %v4323, %v4323
    %v4516 = vmul.f32 %v4324, %v4324
    %v4517 = vmul.f32 %v4325, %v4325
    %v4518 = vmul.f32 %v4326, %v4326
    %v4519 = vmul.f32 %v4327, %v4327
    %v4520 = vmul.f32 %v4328, %v4328
    %v4521 = vmul.f32 %v4329, %v4329
    %v4522 = vmul.f32 %v4330, %v4330
    %v4523 = vmul.f32 %v4331, %v4331
    %v4524 = vmul.f32 %v4332, %v4332
    %v4525 = vmul.f32 %v4333, %v4333
    %v4526 = vmul.f32 %v4334, %v4334
    %v4527 = vmul.f32 %v4335, %v4335
    %v4528 = vmul.f32 %v4336, %v4336
    %v4529 = vmul.f32 %v4337, %v4337
    %v4530 = vmul.f32 %v4338, %v4338
    %v4531 = vmul.f32 %v4339, %v4339
    %v4532 = vmul.f32 %v4340, %v4340
    %v4533 = vmul.f32 %v4341, %v4341
    %v4534 = vmul.f32 %v4342, %v4342
    %v4535 = vmul.f32 %v4343, %v4343
    %v4536 = vmul.f32 %v4344, %v4344
    %v4537 = vmul.f32 %v4345, %v4345
    %v4538 = vmul.f32 %v4346, %v4346
    %v4539 = vmul.f32 %v4347, %v4347
    %v4540 = vmul.f32 %v4348, %v4348
    %v4541 = vmul.f32 %v4349, %v4349
    %v4542 = vmul.f32 %v4350, %v4350
    %v4543 = vmul.f32 %v4351, %v4351
    %v4544 = vmul.f32 %v4352, %v4352
    %v4545 = vmul.f32 %v4353, %v4353
    %v4546 = vmul.f32 %v4354, %v4354
    %v4547 = vmul.f32 %v4355, %v4355
    %v4548 = vmul.f32 %v4356, %v4356
    %v4549 = vmul.f32 %v4357, %v4357
    %v4550 = vmul.f32 %v4358, %v4358
    %v4551 = vmul.f32 %v4359, %v4359
    %v4552 = vmul.f32 %v4360, %v4360
    %v4553 = vmul.f32 %v4361, %v4361
    %v4554 = vmul.f32 %v4362, %v4362
    %v4555 = vmul.f32 %v4363, %v4363
    %v4556 = vmul.f32 %v4364, %v4364
    %v4557 = vmul.f32 %v4365, %v4365
    %v4558 = vmul.f32 %v4366, %v4366
    %v4559 = vmul.f32 %v4367, %v4367
    %v4560 = vmul.f32 %v4368, %v4368
    %v4561 = vmul.f32 %v4369, %v4369
    %v4562 = vmul.f32 %v4370, %v4370
    %v4563 = vmul.f32 %v4371, %v4371
    %v4564 = vmul.f32 %v4372, %v4372
    %v4565 = vmul.f32 %v4373, %v4373
    %v4566 = vmul.f32 %v4374, %v4374
    %v4567 = vmul.f32 %v4375, %v4375
    %v4568 = vmul.f32 %v4376, %v4376
    %v4569 = vmul.f32 %v4377, %v4377
    %v4570 = vmul.f32 %v4378, %v4378
    %v4571 = vmul.f32 %v4379, %v4379
    %v4572 = vmul.f32 %v4380, %v4380
    %v4573 = vmul.f32 %v4381, %v4381
    %v4574 = vmul.f32 %v4382, %v4382
    %v4575 = vmul.f32 %v4383, %v4383
    %v4576 = vmul.f32 %v4384, %v4384
    %v4577 = vmul.f32 %v4385, %v4385
    %v4578 = vmul.f32 %v4386, %v4386
    %v4579 = vmul.f32 %v4387, %v4387
    %v4580 = vmul.f32 %v4388, %v4388
    %v4581 = vmul.f32 %v4389, %v4389
    %v4582 = vmul.f32 %v4390, %v4390
    %v4583 = vmul.f32 %v4391, %v4391
    %v4584 = vmul.f32 %v4392, %v4392
    %v4585 = vmul.f32 %v4393, %v4393
    %v4586 = vmul.f32 %v4394, %v4394
    %v4587 = vmul.f32 %v4395, %v4395
    %v4588 = vmul.f32 %v4396, %v4396
    %v4589 = vmul.f32 %v4397, %v4397
    %v4590 = vmul.f32 %v4398, %v4398
    %v4591 = vmul.f32 %v4399, %v4399
    %v4592 = vmul.f32 %v4400, %v4400
    %v4593 = vmul.f32 %v4401, %v4401
    %v4594 = vmul.f32 %v4402, %v4402
    %v4595 = vmul.f32 %v4403, %v4403
    %v4596 = vmul.f32 %v4404, %v4404
    %v4597 = vmul.f32 %v4405, %v4405
    %v4598 = vmul.f32 %v4406, %v4406
    %v4599 = vmul.f32 %v4407, %v4407
    %v4600 = vmul.f32 %v4408, %v4408
    %v4601 = vmul.f32 %v4409, %v4409
    %v4602 = vmul.f32 %v4410, %v4410
    %v4603 = vmul.f32 %v4411, %v4411
    %v4604 = vmul.f32 %v4412, %v4412
    %v4605 = vmul.f32 %v4413, %v4413
    %v4606 = vmul.f32 %v4414, %v4414
    %v4607 = vmul.f32 %v4415, %v4415
    %v4608 = vmul.f32 %v4416, %v4416
    %v4609 = vmul.f32 %v4417, %v4417
    %v4610 = vmul.f32 %v4418, %v4418
    %v4611 = vmul.f32 %v4419, %v4419
    %v4612 = vmul.f32 %v4420, %v4420
    %v4613 = vmul.f32 %v4421, %v4421
    %v4614 = vmul.f32 %v4422, %v4422
    %v4615 = vmul.f32 %v4423, %v4423
    %v4616 = vmul.f32 %v4424, %v4424
    %v4617 = vmul.f32 %v4425, %v4425
    %v4618 = vmul.f32 %v4426, %v4426
    %v4619 = vmul.f32 %v4427, %v4427
    %v4620 = vmul.f32 %v4428, %v4428
    %v4621 = vmul.f32 %v4429, %v4429
    %v4622 = vmul.f32 %v4430, %v4430
    %v4623 = vmul.f32 %v4431, %v4431
    %v4624 = vmul.f32 %v4432, %v4432
    %v4625 = vmul.f32 %v4433, %v4433
    %v4626 = vmul.f32 %v4434, %v4434
    %v4627 = vmul.f32 %v4435, %v4435
    %v4628 = vmul.f32 %v4436, %v4436
    %v4629 = vmul.f32 %v4437, %v4437
    %v4630 = vmul.f32 %v4438, %v4438
    %v4631 = vmul.f32 %v4439, %v4439
    %v4632 = vmul.f32 %v4440, %v4440
    %v4633 = vmul.f32 %v4441, %v4441
    %v4634 = vmul.f32 %v4442, %v4442
    %v4635 = vmul.f32 %v4443, %v4443
    %v4636 = vmul.f32 %v4444, %v4444
    %v4637 = vmul.f32 %v4445, %v4445
    %v4638 = vmul.f32 %v4446, %v4446
    %v4639 = vmul.f32 %v4447, %v4447
    %v4640 = vmul.f32 %v4448, %v4448
    %v4641 = vmul.f32 %v4449, %v4449
    %v4642 = vmul.f32 %v4450, %v4450
    %v4643 = vmul.f32 %v4451, %v4451
    %v4644 = vmul.f32 %v4452, %v4452
    %v4645 = vmul.f32 %v4453, %v4453
    %v4646 = vmul.f32 %v4454, %v4454
    %v4647 = vmul.f32 %v4455, %v4455
    %v4648 = vmul.f32 %v4456, %v4456
    %v4649 = vmul.f32 %v4457, %v4457
    %v4650 = vmul.f32 %v4458, %v4458
    %v4651 = vmul.f32 %v4459, %v4459
    %v4652 = vmul.f32 %v4460, %v4460
    %v4653 = vmul.f32 %v4461, %v4461
    %v4654 = vmul.f32 %v4462, %v4462
    %v4655 = vmul.f32 %v4463, %v4463
    %v4656 = vmul.f32 %v4464, %v4464
    %v4657 = vmul.f32 %v4465, %v4465
    %v4658 = vmul.f32 %v4466, %v4466
    %v4659 = vmul.f32 %v4467, %v4467
    %v4660 = vmul.f32 %v4468, %v4468
    %v4661 = vmul.f32 %v4469, %v4469
    %v4662 = vmul.f32 %v4470, %v4470
    %v4663 = vmul.f32 %v4471, %v4471
    %v4664 = vmul.f32 %v4472, %v4472
    %v4665 = vmul.f32 %v4473, %v4473
    %v4666 = vmul.f32 %v4474, %v4474
    %v4667 = vmul.f32 %v4475, %v4475
    %v4668 = vmul.f32 %v4476, %v4476
    %v4669 = vmul.f32 %v4477, %v4477
    %v4670 = vmul.f32 %v4478, %v4478
    %v4671 = vmul.f32 %v4479, %v4479
    %v4672 = vmul.f32 %v4480, %v4480
    %v4673 = vadd.f32 %v4481, %v4487
    %v4674 = vadd.f32 %v4482, %v4488
    %v4675 = vadd.f32 %v4483, %v4489
    %v4676 = vadd.f32 %v4484, %v4490
    %v4677 = vadd.f32 %v4485, %v4491
    %v4678 = vadd.f32 %v4486, %v4492
    %v4679 = vadd.f32 %v4673, %v4493
    %v4680 = vadd.f32 %v4674, %v4494
    %v4681 = vadd.f32 %v4675, %v4495
    %v4682 = vadd.f32 %v4676, %v4496
    %v4683 = vadd.f32 %v4677, %v4497
    %v4684 = vadd.f32 %v4678, %v4498
    %v4685 = vadd.f32 %v4679, %v4499
    %v4686 = vadd.f32 %v4680, %v4500
    %v4687 = vadd.f32 %v4681, %v4501
    %v4688 = vadd.f32 %v4682, %v4502
    %v4689 = vadd.f32 %v4683, %v4503
    %v4690 = vadd.f32 %v4684, %v4504
    %v4691 = vadd.f32 %v4685, %v4505
    %v4692 = vadd.f32 %v4686, %v4506
    %v4693 = vadd.f32 %v4687, %v4507
    %v4694 = vadd.f32 %v4688, %v4508
    %v4695 = vadd.f32 %v4689, %v4509
    %v4696 = vadd.f32 %v4690, %v4510
    %v4697 = vadd.f32 %v4691, %v4511
    %v4698 = vadd.f32 %v4692, %v4512
    %v4699 = vadd.f32 %v4693, %v4513
    %v4700 = vadd.f32 %v4694, %v4514
    %v4701 = vadd.f32 %v4695, %v4515
    %v4702 = vadd.f32 %v4696, %v4516
    %v4703 = vadd.f32 %v4697, %v4517
    %v4704 = vadd.f32 %v4698, %v4518
    %v4705 = vadd.f32 %v4699, %v4519
    %v4706 = vadd.f32 %v4700, %v4520
    %v4707 = vadd.f32 %v4701, %v4521
    %v4708 = vadd.f32 %v4702, %v4522
    %v4709 = vadd.f32 %v4703, %v4523
    %v4710 = vadd.f32 %v4704, %v4524
    %v4711 = vadd.f32 %v4705, %v4525
    %v4712 = vadd.f32 %v4706, %v4526
    %v4713 = vadd.f32 %v4707, %v4527
    %v4714 = vadd.f32 %v4708, %v4528
    %v4715 = vadd.f32 %v4709, %v4529
    %v4716 = vadd.f32 %v4710, %v4530
    %v4717 = vadd.f32 %v4711, %v4531
    %v4718 = vadd.f32 %v4712, %v4532
    %v4719 = vadd.f32 %v4713, %v4533
    %v4720 = vadd.f32 %v4714, %v4534
    %v4721 = vadd.f32 %v4715, %v4535
    %v4722 = vadd.f32 %v4716, %v4536
    %v4723 = vadd.f32 %v4717, %v4537
    %v4724 = vadd.f32 %v4718, %v4538
    %v4725 = vadd.f32 %v4719, %v4539
    %v4726 = vadd.f32 %v4720, %v4540
    %v4727 = vadd.f32 %v4721, %v4541
    %v4728 = vadd.f32 %v4722, %v4542
    %v4729 = vadd.f32 %v4723, %v4543
    %v4730 = vadd.f32 %v4724, %v4544
    %v4731 = vadd.f32 %v4725, %v4545
    %v4732 = vadd.f32 %v4726, %v4546
    %v4733 = vadd.f32 %v4727, %v4547
    %v4734 = vadd.f32 %v4728, %v4548
    %v4735 = vadd.f32 %v4729, %v4549
    %v4736 = vadd.f32 %v4730, %v4550
    %v4737 = vadd.f32 %v4731, %v4551
    %v4738 = vadd.f32 %v4732, %v4552
    %v4739 = vadd.f32 %v4733, %v4553
    %v4740 = vadd.f32 %v4734, %v4554
    %v4741 = vadd.f32 %v4735, %v4555
    %v4742 = vadd.f32 %v4736, %v4556
    %v4743 = vadd.f32 %v4737, %v4557
    %v4744 = vadd.f32 %v4738, %v4558
    %v4745 = vadd.f32 %v4739, %v4559
    %v4746 = vadd.f32 %v4740, %v4560
    %v4747 = vadd.f32 %v4741, %v4561
    %v4748 = vadd.f32 %v4742, %v4562
    %v4749 = vadd.f32 %v4743, %v4563
    %v4750 = vadd.f32 %v4744, %v4564
    %v4751 = vadd.f32 %v4745, %v4565
    %v4752 = vadd.f32 %v4746, %v4566
    %v4753 = vadd.f32 %v4747, %v4567
    %v4754 = vadd.f32 %v4748, %v4568
    %v4755 = vadd.f32 %v4749, %v4569
    %v4756 = vadd.f32 %v4750, %v4570
    %v4757 = vadd.f32 %v4751, %v4571
    %v4758 = vadd.f32 %v4752, %v4572
    %v4759 = vadd.f32 %v4753, %v4573
    %v4760 = vadd.f32 %v4754, %v4574
    %v4761 = vadd.f32 %v4755, %v4575
    %v4762 = vadd.f32 %v4756, %v4576
    %v4763 = vadd.f32 %v4757, %v4577
    %v4764 = vadd.f32 %v4758, %v4578
    %v4765 = vadd.f32 %v4759, %v4579
    %v4766 = vadd.f32 %v4760, %v4580
    %v4767 = vadd.f32 %v4761, %v4581
    %v4768 = vadd.f32 %v4762, %v4582
    %v4769 = vadd.f32 %v4763, %v4583
    %v4770 = vadd.f32 %v4764, %v4584
    %v4771 = vadd.f32 %v4765, %v4585
    %v4772 = vadd.f32 %v4766, %v4586
    %v4773 = vadd.f32 %v4767, %v4587
    %v4774 = vadd.f32 %v4768, %v4588
    %v4775 = vadd.f32 %v4769, %v4589
    %v4776 = vadd.f32 %v4770, %v4590
    %v4777 = vadd.f32 %v4771, %v4591
    %v4778 = vadd.f32 %v4772, %v4592
    %v4779 = vadd.f32 %v4773, %v4593
    %v4780 = vadd.f32 %v4774, %v4594
    %v4781 = vadd.f32 %v4775, %v4595
    %v4782 = vadd.f32 %v4776, %v4596
    %v4783 = vadd.f32 %v4777, %v4597
    %v4784 = vadd.f32 %v4778, %v4598
    %v4785 = vadd.f32 %v4779, %v4599
    %v4786 = vadd.f32 %v4780, %v4600
    %v4787 = vadd.f32 %v4781, %v4601
    %v4788 = vadd.f32 %v4782, %v4602
    %v4789 = vadd.f32 %v4783, %v4603
    %v4790 = vadd.f32 %v4784, %v4604
    %v4791 = vadd.f32 %v4785, %v4605
    %v4792 = vadd.f32 %v4786, %v4606
    %v4793 = vadd.f32 %v4787, %v4607
    %v4794 = vadd.f32 %v4788, %v4608
    %v4795 = vadd.f32 %v4789, %v4609
    %v4796 = vadd.f32 %v4790, %v4610
    %v4797 = vadd.f32 %v4791, %v4611
    %v4798 = vadd.f32 %v4792, %v4612
    %v4799 = vadd.f32 %v4793, %v4613
    %v4800 = vadd.f32 %v4794, %v4614
    %v4801 = vadd.f32 %v4795, %v4615
    %v4802 = vadd.f32 %v4796, %v4616
    %v4803 = vadd.f32 %v4797, %v4617
    %v4804 = vadd.f32 %v4798, %v4618
    %v4805 = vadd.f32 %v4799, %v4619
    %v4806 = vadd.f32 %v4800, %v4620
    %v4807 = vadd.f32 %v4801, %v4621
    %v4808 = vadd.f32 %v4802, %v4622
    %v4809 = vadd.f32 %v4803, %v4623
    %v4810 = vadd.f32 %v4804, %v4624
    %v4811 = vadd.f32 %v4805, %v4625
    %v4812 = vadd.f32 %v4806, %v4626
    %v4813 = vadd.f32 %v4807, %v4627
    %v4814 = vadd.f32 %v4808, %v4628
    %v4815 = vadd.f32 %v4809, %v4629
    %v4816 = vadd.f32 %v4810, %v4630
    %v4817 = vadd.f32 %v4811, %v4631
    %v4818 = vadd.f32 %v4812, %v4632
    %v4819 = vadd.f32 %v4813, %v4633
    %v4820 = vadd.f32 %v4814, %v4634
    %v4821 = vadd.f32 %v4815, %v4635
    %v4822 = vadd.f32 %v4816, %v4636
    %v4823 = vadd.f32 %v4817, %v4637
    %v4824 = vadd.f32 %v4818, %v4638
    %v4825 = vadd.f32 %v4819, %v4639
    %v4826 = vadd.f32 %v4820, %v4640
    %v4827 = vadd.f32 %v4821, %v4641
    %v4828 = vadd.f32 %v4822, %v4642
    %v4829 = vadd.f32 %v4823, %v4643
    %v4830 = vadd.f32 %v4824, %v4644
    %v4831 = vadd.f32 %v4825, %v4645
    %v4832 = vadd.f32 %v4826, %v4646
    %v4833 = vadd.f32 %v4827, %v4647
    %v4834 = vadd.f32 %v4828, %v4648
    %v4835 = vadd.f32 %v4829, %v4649
    %v4836 = vadd.f32 %v4830, %v4650
    %v4837 = vadd.f32 %v4831, %v4651
    %v4838 = vadd.f32 %v4832, %v4652
    %v4839 = vadd.f32 %v4833, %v4653
    %v4840 = vadd.f32 %v4834, %v4654
    %v4841 = vadd.f32 %v4835, %v4655
    %v4842 = vadd.f32 %v4836, %v4656
    %v4843 = vadd.f32 %v4837, %v4657
    %v4844 = vadd.f32 %v4838, %v4658
    %v4845 = vadd.f32 %v4839, %v4659
    %v4846 = vadd.f32 %v4840, %v4660
    %v4847 = vadd.f32 %v4841, %v4661
    %v4848 = vadd.f32 %v4842, %v4662
    %v4849 = vadd.f32 %v4843, %v4663
    %v4850 = vadd.f32 %v4844, %v4664
    %v4851 = vadd.f32 %v4845, %v4665
    %v4852 = vadd.f32 %v4846, %v4666
    %v4853 = vadd.f32 %v4847, %v4667
    %v4854 = vadd.f32 %v4848, %v4668
    %v4855 = vadd.f32 %v4849, %v4669
    %v4856 = vadd.f32 %v4850, %v4670
    %v4857 = vadd.f32 %v4851, %v4671
    %v4858 = vadd.f32 %v4852, %v4672
    %4859 = vst [vmem:[#allocation8] sm:$0xff] %v4853
    %4860 = vst [vmem:[#allocation8 + $0x8] sm:$0xff] %v4854
    %4861 = vst [vmem:[#allocation8 + $0x10] sm:$0xff] %v4855
    %4862 = vst [vmem:[#allocation8 + $0x18] sm:$0xff] %v4856
    %4863 = vst [vmem:[#allocation8 + $0x20] sm:$0xff] %v4857
    %4864 = vst [vmem:[#allocation8 + $0x28] sm:$0xff] %v4858
    // Predicated region
    $region26: #{tpu_custom_call.1} parent=1 // pred_check
      _
    $region27: #{tpu_custom_call.1} parent=1 // pred_check_branch
      %4866 = sbr.rel (0) target = $region29
    $region28: #{tpu_custom_call.1} parent=1 // pred_region
      %s4868 = ssub.s32 768, 768
      %4869 = vsyncadd [#allocation4], %s4868
      %s4871 = sshll.u32 [#allocation8], 4
      %s4872 = int_to_ptr.vmem [resolvable:$true] %s4871
      %4874 = dma.vmem_to_hbm [thread:$0]  %s4872, 768, %s3, [#allocation4]
    $region29: #{tpu_custom_call.1} parent=1 // pred_fallthru
      _
    // Predicated region
    $region30: #{tpu_custom_call.1} parent=1 // pred_check
      _
    $region31: #{tpu_custom_call.1} parent=1 // pred_check_branch
      %4876 = sbr.rel (0) target = $region33
    $region32: #{tpu_custom_call.1} parent=1 // pred_region
      %4877 = dma.done [#allocation4], 768
    $region33: #{tpu_custom_call.1} parent=1 // pred_fallthru
      _
    %4878 = vsyncpa [#allocation3], 1
    %4879 = vsyncpa [#allocation6], 1
    %4880 = vsyncpa [#allocation4], 1

</llo_original>
